<compile_context>
chip_gen: v7x
topology: tpu7x:2x2x1
jax: 0.10.0
libtpu: 0.0.40
codegen_flags: <defaults>
</compile_context>

<pallas_src>
import functools

import jax
import jax.numpy as jnp
from jax import lax
from jax.experimental import pallas as pl
from jax.experimental.pallas import tpu as pltpu


INPUT_SIZE = 144
HIDDEN = 256          # n_gru_hidden
FC1 = 512
OUT = 3
OUT_PAD = 128         # lane-dense padded fc2 output width


def gru_nn_kernel(x_ref, wih_ref, whh_ref, bgi_ref, bhn_ref,
                  w1_ref, b1_ref, w2_ref, b2_ref,
                  out_ref, gi_ref, *, seq, hidden):
    """Whole forward pass for one (padded) batch of sequences.

    x_ref   : (seq*B, 144)  time-major, batch-flattened input      VMEM
    wih_ref : (144, 3H)     W_ih^T (gate order r, z, n along cols)
    whh_ref : (H,   3H)     W_hh^T
    bgi_ref : (1,   3H)     [b_ir+b_hr, b_iz+b_hz, b_in]  (folded bias)
    bhn_ref : (1,   H)      b_hn  (kept separate: multiplied by r)
    w1_ref  : (H, 512), b1_ref: (1, 512)
    w2_ref  : (512, 128) zero-padded, b2_ref: (1, 128) zero-padded
    out_ref : (B, 128)
    gi_ref  : (seq*B, 3H)   VMEM scratch holding all input projections
    """
    H = hidden
    B = out_ref.shape[0]

    # --- One big matmul for ALL timesteps' input projections (bias folded) ---
    gi_ref[...] = (
        jnp.dot(x_ref[...], wih_ref[...], preferred_element_type=jnp.float32)
        + bgi_ref[...])

    # Hoisted broadcast of b_hn (JAX does not CSE broadcast_in_dim in loops).
    bhn = jnp.broadcast_to(bhn_ref[...], (B, H))

    def step(t, h):
        base = pl.multiple_of(t * B, B)
        gi = gi_ref[pl.ds(base, B), :]                          # (B, 3H)
        gh = jnp.dot(h, whh_ref[...],
                     preferred_element_type=jnp.float32)        # (B, 3H)
        r = jax.nn.sigmoid(gi[:, 0:H] + gh[:, 0:H])
        z = jax.nn.sigmoid(gi[:, H:2 * H] + gh[:, H:2 * H])
        n = jnp.tanh(gi[:, 2 * H:3 * H] + r * (gh[:, 2 * H:3 * H] + bhn))
        return (1.0 - z) * n + z * h

    # Hidden state lives in vregs across the (unrolled) serial time loop.
    h = lax.fori_loop(0, seq, step, jnp.zeros((B, H), jnp.float32),
                      unroll=True)

    # --- fc1 -> ReLU -> (dropout: identity in eval) -> fc2 (lane-padded) ---
    y1 = jnp.dot(h, w1_ref[...], preferred_element_type=jnp.float32) + b1_ref[...]
    y1 = jnp.maximum(y1, 0.0)
    out_ref[...] = (
        jnp.dot(y1, w2_ref[...], preferred_element_type=jnp.float32) + b2_ref[...])


def gru_nn_forward(x, params):
    """x: (batch, seq, 144) float32 -> (batch, 3) float32."""
    wih_t, whh_t, bih, bhh, w1_t, b1, w2_t, b2 = params
    batch, seq, feat = x.shape
    H = HIDDEN

    # Pad batch to a multiple of 8 (f32 sublane) for dense vreg / MXU rows.
    b_pad = max(8, ((batch + 7) // 8) * 8)

    xs = jnp.transpose(x, (1, 0, 2)).astype(jnp.float32)        # (seq, batch, F)
    if b_pad != batch:
        xs = jnp.pad(xs, ((0, 0), (0, b_pad - batch), (0, 0)))
    xs2d = xs.reshape(seq * b_pad, feat)                        # (seq*B, F)

    # Fold biases: r/z gate biases combine; b_hn stays separate (scaled by r).
    bgi = jnp.concatenate(
        [bih[:, :2 * H] + bhh[:, :2 * H], bih[:, 2 * H:]], axis=1)  # (1, 3H)
    bhn = bhh[:, 2 * H:]                                            # (1, H)

    # Lane-dense fc2: zero-pad to 128 output columns.
    w2_pad = jnp.zeros((w2_t.shape[0], OUT_PAD), jnp.float32).at[:, :OUT].set(w2_t)
    b2_pad = jnp.zeros((1, OUT_PAD), jnp.float32).at[:, :OUT].set(b2)

    vmem = pl.BlockSpec(memory_space=pltpu.MemorySpace.VMEM)
    kernel = pl.pallas_call(
        functools.partial(gru_nn_kernel, seq=seq, hidden=H),
        out_shape=jax.ShapeDtypeStruct((b_pad, OUT_PAD), jnp.float32),
        in_specs=[vmem] * 9,
        out_specs=vmem,
        scratch_shapes=[pltpu.VMEM((seq * b_pad, 3 * H), jnp.float32)],
        compiler_params=pltpu.CompilerParams(vmem_limit_bytes=16 << 20),
    )
    y = kernel(xs2d, wih_t, whh_t, bgi, bhn, w1_t, b1, w2_pad, b2_pad)
    return y[:batch, :OUT]


def init_params(key):
    """Deterministic parameter init (PyTorch-style uniform ranges)."""
    ks = jax.random.split(key, 8)

    def unif(k, shape, fan):
        bound = 1.0 / jnp.sqrt(fan)
        return jax.random.uniform(k, shape, jnp.float32, -bound, bound)

    # GRU (weights stored already transposed: (in, 3H))
    wih_t = unif(ks[0], (INPUT_SIZE, 3 * HIDDEN), HIDDEN)
    whh_t = unif(ks[1], (HIDDEN, 3 * HIDDEN), HIDDEN)
    bih = unif(ks[2], (1, 3 * HIDDEN), HIDDEN)
    bhh = unif(ks[3], (1, 3 * HIDDEN), HIDDEN)
    # fc1: 256 -> 512
    w1_t = unif(ks[4], (HIDDEN, FC1), HIDDEN)
    b1 = unif(ks[5], (1, FC1), HIDDEN)
    # fc2: 512 -> 3
    w2_t = unif(ks[6], (FC1, OUT), FC1)
    b2 = unif(ks[7], (1, OUT), FC1)
    return (wih_t, whh_t, bih, bhh, w1_t, b1, w2_t, b2)


def reference_forward(x, params):
    """Pure-JAX reference replicating torch.nn.GRU + fc layers (eval mode)."""
    wih_t, whh_t, bih, bhh, w1_t, b1, w2_t, b2 = params
    xs = jnp.transpose(x, (1, 0, 2))                              # (seq, B, 144)
    B = x.shape[0]
    H = HIDDEN
    h = jnp.zeros((B, H), jnp.float32)

    def step(h, xt):
        gi = xt @ wih_t + bih
        gh = h @ whh_t + bhh
        r = jax.nn.sigmoid(gi[:, :H] + gh[:, :H])
        z = jax.nn.sigmoid(gi[:, H:2 * H] + gh[:, H:2 * H])
        n = jnp.tanh(gi[:, 2 * H:] + r * gh[:, 2 * H:])
        h = (1.0 - z) * n + z * h
        return h, None

    h, _ = lax.scan(step, h, xs)
    y1 = jnp.maximum(h @ w1_t + b1, 0.0)
    return y1 @ w2_t + b2


if __name__ == "__main__":
    key = jax.random.PRNGKey(0)
    k_param, k_x = jax.random.split(key)

    batch, seq = 2, 8
    x = jax.random.normal(k_x, (batch, seq, INPUT_SIZE), jnp.float32)
    params = init_params(k_param)

    out = gru_nn_forward(x, params)
    out = jax.block_until_ready(out)

    ref = reference_forward(x, params)
    assert out.shape == (batch, OUT)
    assert jnp.allclose(out, ref, atol=1e-4, rtol=1e-4), (
        f"mismatch: max abs diff {jnp.max(jnp.abs(out - ref))}")

    print("KERNEL_OK")
</pallas_src>

<mosaic_0001>
module attributes {stable_mosaic.version = 11 : i64} {
  func.func @gru_nn_kernel(%arg0: memref<64x144xf32, #tpu.memory_space<vmem>>, %arg1: memref<144x768xf32, #tpu.memory_space<vmem>>, %arg2: memref<256x768xf32, #tpu.memory_space<vmem>>, %arg3: memref<1x768xf32, #tpu.memory_space<vmem>>, %arg4: memref<1x256xf32, #tpu.memory_space<vmem>>, %arg5: memref<256x512xf32, #tpu.memory_space<vmem>>, %arg6: memref<1x512xf32, #tpu.memory_space<vmem>>, %arg7: memref<512x128xf32, #tpu.memory_space<vmem>>, %arg8: memref<1x128xf32, #tpu.memory_space<vmem>>, %arg9: memref<8x128xf32, #tpu.memory_space<vmem>>, %arg10: memref<64x768xf32, #tpu.memory_space<vmem>>) attributes {dimension_semantics = [], scalar_prefetch = 0 : i64, scratch_operands = 1 : i64, tpu.core_type = #tpu.core_type<tc>} {
    %c0 = arith.constant 0 : index
    %c0_0 = arith.constant 0 : index
    %0 = vector.load %arg0[%c0, %c0_0] : memref<64x144xf32, #tpu.memory_space<vmem>>, vector<64x144xf32>
    %c0_1 = arith.constant 0 : index
    %c0_2 = arith.constant 0 : index
    %1 = vector.load %arg1[%c0_1, %c0_2] : memref<144x768xf32, #tpu.memory_space<vmem>>, vector<144x768xf32>
    %cst = arith.constant dense<0.000000e+00> : vector<64x768xf32>
    %2 = tpu.matmul %0, %1, %cst {dimension_numbers = #tpu.dot_dimension_numbers<[1], [0], [0], [1], [0, 0, 1, 1], [], []>} : vector<64x144xf32>, vector<144x768xf32>, vector<64x768xf32> -> vector<64x768xf32>
    %c0_3 = arith.constant 0 : index
    %c0_4 = arith.constant 0 : index
    %3 = vector.load %arg3[%c0_3, %c0_4] : memref<1x768xf32, #tpu.memory_space<vmem>>, vector<1x768xf32>
    %4 = vector.broadcast %3 : vector<1x768xf32> to vector<64x768xf32>
    %5 = arith.addf %2, %4 : vector<64x768xf32>
    %c0_5 = arith.constant 0 : index
    %c0_6 = arith.constant 0 : index
    %6 = vector.load %arg10[%c0_5, %c0_6] : memref<64x768xf32, #tpu.memory_space<vmem>>, vector<64x768xf32>
    tpu.vector_store %arg10[%c0_5, %c0_6], %5 {strides = array<i32>} : memref<64x768xf32, #tpu.memory_space<vmem>>, vector<64x768xf32>,
    %c0_7 = arith.constant 0 : index
    %c0_8 = arith.constant 0 : index
    %7 = vector.load %arg4[%c0_7, %c0_8] : memref<1x256xf32, #tpu.memory_space<vmem>>, vector<1x256xf32>
    %8 = vector.shape_cast %7 : vector<1x256xf32> to vector<1x256xf32>
    %9 = vector.broadcast %8 : vector<1x256xf32> to vector<8x256xf32>
    %cst_9 = arith.constant 0.000000e+00 : f32
    %10 = vector.broadcast %cst_9 : f32 to vector<8x256xf32>
    %c0_i32 = arith.constant 0 : i32
    %c8_i32 = arith.constant 8 : i32
    %11 = arith.muli %c0_i32, %c8_i32 : i32
    %12 = tpu.assume_multiple %11, 8 : i32
    %13 = arith.index_cast %12 : i32 to index
    %c0_10 = arith.constant 0 : index
    %14 = vector.load %arg10[%13, %c0_10] : memref<64x768xf32, #tpu.memory_space<vmem>>, vector<8x768xf32>
    %c0_11 = arith.constant 0 : index
    %c0_12 = arith.constant 0 : index
    %15 = vector.load %arg2[%c0_11, %c0_12] : memref<256x768xf32, #tpu.memory_space<vmem>>, vector<256x768xf32>
    %cst_13 = arith.constant dense<0.000000e+00> : vector<8x768xf32>
    %16 = tpu.matmul %10, %15, %cst_13 {dimension_numbers = #tpu.dot_dimension_numbers<[1], [0], [0], [1], [0, 0, 1, 1], [], []>} : vector<8x256xf32>, vector<256x768xf32>, vector<8x768xf32> -> vector<8x768xf32>
    %17 = vector.extract_strided_slice %14 {offsets = [0, 0], sizes = [8, 256], strides = [1, 1]} : vector<8x768xf32> to vector<8x256xf32>
    %18 = vector.extract_strided_slice %16 {offsets = [0, 0], sizes = [8, 256], strides = [1, 1]} : vector<8x768xf32> to vector<8x256xf32>
    %19 = arith.addf %17, %18 : vector<8x256xf32>
    %20 = arith.negf %19 : vector<8x256xf32>
    %21 = math.exp %20 : vector<8x256xf32>
    %cst_14 = arith.constant 1.000000e+00 : f32
    %22 = vector.broadcast %cst_14 : f32 to vector<8x256xf32>
    %23 = arith.addf %22, %21 : vector<8x256xf32>
    %24 = arith.divf %22, %23 : vector<8x256xf32>
    %25 = vector.extract_strided_slice %14 {offsets = [0, 256], sizes = [8, 256], strides = [1, 1]} : vector<8x768xf32> to vector<8x256xf32>
    %26 = vector.extract_strided_slice %16 {offsets = [0, 256], sizes = [8, 256], strides = [1, 1]} : vector<8x768xf32> to vector<8x256xf32>
    %27 = arith.addf %25, %26 : vector<8x256xf32>
    %28 = arith.negf %27 : vector<8x256xf32>
    %29 = math.exp %28 : vector<8x256xf32>
    %cst_15 = arith.constant 1.000000e+00 : f32
    %30 = vector.broadcast %cst_15 : f32 to vector<8x256xf32>
    %31 = arith.addf %30, %29 : vector<8x256xf32>
    %32 = arith.divf %30, %31 : vector<8x256xf32>
    %33 = vector.extract_strided_slice %14 {offsets = [0, 512], sizes = [8, 256], strides = [1, 1]} : vector<8x768xf32> to vector<8x256xf32>
    %34 = vector.extract_strided_slice %16 {offsets = [0, 512], sizes = [8, 256], strides = [1, 1]} : vector<8x768xf32> to vector<8x256xf32>
    %35 = arith.addf %34, %9 : vector<8x256xf32>
    %36 = arith.mulf %24, %35 : vector<8x256xf32>
    %37 = arith.addf %33, %36 : vector<8x256xf32>
    %38 = math.tanh %37 : vector<8x256xf32>
    %cst_16 = arith.constant 1.000000e+00 : f32
    %39 = vector.broadcast %cst_16 : f32 to vector<8x256xf32>
    %40 = arith.subf %39, %32 : vector<8x256xf32>
    %41 = arith.mulf %40, %38 : vector<8x256xf32>
    %42 = arith.mulf %32, %10 : vector<8x256xf32>
    %43 = arith.addf %41, %42 : vector<8x256xf32>
    %c1_i32 = arith.constant 1 : i32
    %c8_i32_17 = arith.constant 8 : i32
    %44 = arith.muli %c1_i32, %c8_i32_17 : i32
    %45 = tpu.assume_multiple %44, 8 : i32
    %46 = arith.index_cast %45 : i32 to index
    %c0_18 = arith.constant 0 : index
    %47 = vector.load %arg10[%46, %c0_18] : memref<64x768xf32, #tpu.memory_space<vmem>>, vector<8x768xf32>
    %c0_19 = arith.constant 0 : index
    %c0_20 = arith.constant 0 : index
    %48 = vector.load %arg2[%c0_19, %c0_20] : memref<256x768xf32, #tpu.memory_space<vmem>>, vector<256x768xf32>
    %cst_21 = arith.constant dense<0.000000e+00> : vector<8x768xf32>
    %49 = tpu.matmul %43, %48, %cst_21 {dimension_numbers = #tpu.dot_dimension_numbers<[1], [0], [0], [1], [0, 0, 1, 1], [], []>} : vector<8x256xf32>, vector<256x768xf32>, vector<8x768xf32> -> vector<8x768xf32>
    %50 = vector.extract_strided_slice %47 {offsets = [0, 0], sizes = [8, 256], strides = [1, 1]} : vector<8x768xf32> to vector<8x256xf32>
    %51 = vector.extract_strided_slice %49 {offsets = [0, 0], sizes = [8, 256], strides = [1, 1]} : vector<8x768xf32> to vector<8x256xf32>
    %52 = arith.addf %50, %51 : vector<8x256xf32>
    %53 = arith.negf %52 : vector<8x256xf32>
    %54 = math.exp %53 : vector<8x256xf32>
    %cst_22 = arith.constant 1.000000e+00 : f32
    %55 = vector.broadcast %cst_22 : f32 to vector<8x256xf32>
    %56 = arith.addf %55, %54 : vector<8x256xf32>
    %57 = arith.divf %55, %56 : vector<8x256xf32>
    %58 = vector.extract_strided_slice %47 {offsets = [0, 256], sizes = [8, 256], strides = [1, 1]} : vector<8x768xf32> to vector<8x256xf32>
    %59 = vector.extract_strided_slice %49 {offsets = [0, 256], sizes = [8, 256], strides = [1, 1]} : vector<8x768xf32> to vector<8x256xf32>
    %60 = arith.addf %58, %59 : vector<8x256xf32>
    %61 = arith.negf %60 : vector<8x256xf32>
    %62 = math.exp %61 : vector<8x256xf32>
    %cst_23 = arith.constant 1.000000e+00 : f32
    %63 = vector.broadcast %cst_23 : f32 to vector<8x256xf32>
    %64 = arith.addf %63, %62 : vector<8x256xf32>
    %65 = arith.divf %63, %64 : vector<8x256xf32>
    %66 = vector.extract_strided_slice %47 {offsets = [0, 512], sizes = [8, 256], strides = [1, 1]} : vector<8x768xf32> to vector<8x256xf32>
    %67 = vector.extract_strided_slice %49 {offsets = [0, 512], sizes = [8, 256], strides = [1, 1]} : vector<8x768xf32> to vector<8x256xf32>
    %68 = arith.addf %67, %9 : vector<8x256xf32>
    %69 = arith.mulf %57, %68 : vector<8x256xf32>
    %70 = arith.addf %66, %69 : vector<8x256xf32>
    %71 = math.tanh %70 : vector<8x256xf32>
    %cst_24 = arith.constant 1.000000e+00 : f32
    %72 = vector.broadcast %cst_24 : f32 to vector<8x256xf32>
    %73 = arith.subf %72, %65 : vector<8x256xf32>
    %74 = arith.mulf %73, %71 : vector<8x256xf32>
    %75 = arith.mulf %65, %43 : vector<8x256xf32>
    %76 = arith.addf %74, %75 : vector<8x256xf32>
    %c2_i32 = arith.constant 2 : i32
    %c8_i32_25 = arith.constant 8 : i32
    %77 = arith.muli %c2_i32, %c8_i32_25 : i32
    %78 = tpu.assume_multiple %77, 8 : i32
    %79 = arith.index_cast %78 : i32 to index
    %c0_26 = arith.constant 0 : index
    %80 = vector.load %arg10[%79, %c0_26] : memref<64x768xf32, #tpu.memory_space<vmem>>, vector<8x768xf32>
    %c0_27 = arith.constant 0 : index
    %c0_28 = arith.constant 0 : index
    %81 = vector.load %arg2[%c0_27, %c0_28] : memref<256x768xf32, #tpu.memory_space<vmem>>, vector<256x768xf32>
    %cst_29 = arith.constant dense<0.000000e+00> : vector<8x768xf32>
    %82 = tpu.matmul %76, %81, %cst_29 {dimension_numbers = #tpu.dot_dimension_numbers<[1], [0], [0], [1], [0, 0, 1, 1], [], []>} : vector<8x256xf32>, vector<256x768xf32>, vector<8x768xf32> -> vector<8x768xf32>
    %83 = vector.extract_strided_slice %80 {offsets = [0, 0], sizes = [8, 256], strides = [1, 1]} : vector<8x768xf32> to vector<8x256xf32>
    %84 = vector.extract_strided_slice %82 {offsets = [0, 0], sizes = [8, 256], strides = [1, 1]} : vector<8x768xf32> to vector<8x256xf32>
    %85 = arith.addf %83, %84 : vector<8x256xf32>
    %86 = arith.negf %85 : vector<8x256xf32>
    %87 = math.exp %86 : vector<8x256xf32>
    %cst_30 = arith.constant 1.000000e+00 : f32
    %88 = vector.broadcast %cst_30 : f32 to vector<8x256xf32>
    %89 = arith.addf %88, %87 : vector<8x256xf32>
    %90 = arith.divf %88, %89 : vector<8x256xf32>
    %91 = vector.extract_strided_slice %80 {offsets = [0, 256], sizes = [8, 256], strides = [1, 1]} : vector<8x768xf32> to vector<8x256xf32>
    %92 = vector.extract_strided_slice %82 {offsets = [0, 256], sizes = [8, 256], strides = [1, 1]} : vector<8x768xf32> to vector<8x256xf32>
    %93 = arith.addf %91, %92 : vector<8x256xf32>
    %94 = arith.negf %93 : vector<8x256xf32>
    %95 = math.exp %94 : vector<8x256xf32>
    %cst_31 = arith.constant 1.000000e+00 : f32
    %96 = vector.broadcast %cst_31 : f32 to vector<8x256xf32>
    %97 = arith.addf %96, %95 : vector<8x256xf32>
    %98 = arith.divf %96, %97 : vector<8x256xf32>
    %99 = vector.extract_strided_slice %80 {offsets = [0, 512], sizes = [8, 256], strides = [1, 1]} : vector<8x768xf32> to vector<8x256xf32>
    %100 = vector.extract_strided_slice %82 {offsets = [0, 512], sizes = [8, 256], strides = [1, 1]} : vector<8x768xf32> to vector<8x256xf32>
    %101 = arith.addf %100, %9 : vector<8x256xf32>
    %102 = arith.mulf %90, %101 : vector<8x256xf32>
    %103 = arith.addf %99, %102 : vector<8x256xf32>
    %104 = math.tanh %103 : vector<8x256xf32>
    %cst_32 = arith.constant 1.000000e+00 : f32
    %105 = vector.broadcast %cst_32 : f32 to vector<8x256xf32>
    %106 = arith.subf %105, %98 : vector<8x256xf32>
    %107 = arith.mulf %106, %104 : vector<8x256xf32>
    %108 = arith.mulf %98, %76 : vector<8x256xf32>
    %109 = arith.addf %107, %108 : vector<8x256xf32>
    %c3_i32 = arith.constant 3 : i32
    %c8_i32_33 = arith.constant 8 : i32
    %110 = arith.muli %c3_i32, %c8_i32_33 : i32
    %111 = tpu.assume_multiple %110, 8 : i32
    %112 = arith.index_cast %111 : i32 to index
    %c0_34 = arith.constant 0 : index
    %113 = vector.load %arg10[%112, %c0_34] : memref<64x768xf32, #tpu.memory_space<vmem>>, vector<8x768xf32>
    %c0_35 = arith.constant 0 : index
    %c0_36 = arith.constant 0 : index
    %114 = vector.load %arg2[%c0_35, %c0_36] : memref<256x768xf32, #tpu.memory_space<vmem>>, vector<256x768xf32>
    %cst_37 = arith.constant dense<0.000000e+00> : vector<8x768xf32>
    %115 = tpu.matmul %109, %114, %cst_37 {dimension_numbers = #tpu.dot_dimension_numbers<[1], [0], [0], [1], [0, 0, 1, 1], [], []>} : vector<8x256xf32>, vector<256x768xf32>, vector<8x768xf32> -> vector<8x768xf32>
    %116 = vector.extract_strided_slice %113 {offsets = [0, 0], sizes = [8, 256], strides = [1, 1]} : vector<8x768xf32> to vector<8x256xf32>
    %117 = vector.extract_strided_slice %115 {offsets = [0, 0], sizes = [8, 256], strides = [1, 1]} : vector<8x768xf32> to vector<8x256xf32>
    %118 = arith.addf %116, %117 : vector<8x256xf32>
    %119 = arith.negf %118 : vector<8x256xf32>
    %120 = math.exp %119 : vector<8x256xf32>
    %cst_38 = arith.constant 1.000000e+00 : f32
    %121 = vector.broadcast %cst_38 : f32 to vector<8x256xf32>
    %122 = arith.addf %121, %120 : vector<8x256xf32>
    %123 = arith.divf %121, %122 : vector<8x256xf32>
    %124 = vector.extract_strided_slice %113 {offsets = [0, 256], sizes = [8, 256], strides = [1, 1]} : vector<8x768xf32> to vector<8x256xf32>
    %125 = vector.extract_strided_slice %115 {offsets = [0, 256], sizes = [8, 256], strides = [1, 1]} : vector<8x768xf32> to vector<8x256xf32>
    %126 = arith.addf %124, %125 : vector<8x256xf32>
    %127 = arith.negf %126 : vector<8x256xf32>
    %128 = math.exp %127 : vector<8x256xf32>
    %cst_39 = arith.constant 1.000000e+00 : f32
    %129 = vector.broadcast %cst_39 : f32 to vector<8x256xf32>
    %130 = arith.addf %129, %128 : vector<8x256xf32>
    %131 = arith.divf %129, %130 : vector<8x256xf32>
    %132 = vector.extract_strided_slice %113 {offsets = [0, 512], sizes = [8, 256], strides = [1, 1]} : vector<8x768xf32> to vector<8x256xf32>
    %133 = vector.extract_strided_slice %115 {offsets = [0, 512], sizes = [8, 256], strides = [1, 1]} : vector<8x768xf32> to vector<8x256xf32>
    %134 = arith.addf %133, %9 : vector<8x256xf32>
    %135 = arith.mulf %123, %134 : vector<8x256xf32>
    %136 = arith.addf %132, %135 : vector<8x256xf32>
    %137 = math.tanh %136 : vector<8x256xf32>
    %cst_40 = arith.constant 1.000000e+00 : f32
    %138 = vector.broadcast %cst_40 : f32 to vector<8x256xf32>
    %139 = arith.subf %138, %131 : vector<8x256xf32>
    %140 = arith.mulf %139, %137 : vector<8x256xf32>
    %141 = arith.mulf %131, %109 : vector<8x256xf32>
    %142 = arith.addf %140, %141 : vector<8x256xf32>
    %c4_i32 = arith.constant 4 : i32
    %c8_i32_41 = arith.constant 8 : i32
    %143 = arith.muli %c4_i32, %c8_i32_41 : i32
    %144 = tpu.assume_multiple %143, 8 : i32
    %145 = arith.index_cast %144 : i32 to index
    %c0_42 = arith.constant 0 : index
    %146 = vector.load %arg10[%145, %c0_42] : memref<64x768xf32, #tpu.memory_space<vmem>>, vector<8x768xf32>
    %c0_43 = arith.constant 0 : index
    %c0_44 = arith.constant 0 : index
    %147 = vector.load %arg2[%c0_43, %c0_44] : memref<256x768xf32, #tpu.memory_space<vmem>>, vector<256x768xf32>
    %cst_45 = arith.constant dense<0.000000e+00> : vector<8x768xf32>
    %148 = tpu.matmul %142, %147, %cst_45 {dimension_numbers = #tpu.dot_dimension_numbers<[1], [0], [0], [1], [0, 0, 1, 1], [], []>} : vector<8x256xf32>, vector<256x768xf32>, vector<8x768xf32> -> vector<8x768xf32>
    %149 = vector.extract_strided_slice %146 {offsets = [0, 0], sizes = [8, 256], strides = [1, 1]} : vector<8x768xf32> to vector<8x256xf32>
    %150 = vector.extract_strided_slice %148 {offsets = [0, 0], sizes = [8, 256], strides = [1, 1]} : vector<8x768xf32> to vector<8x256xf32>
    %151 = arith.addf %149, %150 : vector<8x256xf32>
    %152 = arith.negf %151 : vector<8x256xf32>
    %153 = math.exp %152 : vector<8x256xf32>
    %cst_46 = arith.constant 1.000000e+00 : f32
    %154 = vector.broadcast %cst_46 : f32 to vector<8x256xf32>
    %155 = arith.addf %154, %153 : vector<8x256xf32>
    %156 = arith.divf %154, %155 : vector<8x256xf32>
    %157 = vector.extract_strided_slice %146 {offsets = [0, 256], sizes = [8, 256], strides = [1, 1]} : vector<8x768xf32> to vector<8x256xf32>
    %158 = vector.extract_strided_slice %148 {offsets = [0, 256], sizes = [8, 256], strides = [1, 1]} : vector<8x768xf32> to vector<8x256xf32>
    %159 = arith.addf %157, %158 : vector<8x256xf32>
    %160 = arith.negf %159 : vector<8x256xf32>
    %161 = math.exp %160 : vector<8x256xf32>
    %cst_47 = arith.constant 1.000000e+00 : f32
    %162 = vector.broadcast %cst_47 : f32 to vector<8x256xf32>
    %163 = arith.addf %162, %161 : vector<8x256xf32>
    %164 = arith.divf %162, %163 : vector<8x256xf32>
    %165 = vector.extract_strided_slice %146 {offsets = [0, 512], sizes = [8, 256], strides = [1, 1]} : vector<8x768xf32> to vector<8x256xf32>
    %166 = vector.extract_strided_slice %148 {offsets = [0, 512], sizes = [8, 256], strides = [1, 1]} : vector<8x768xf32> to vector<8x256xf32>
    %167 = arith.addf %166, %9 : vector<8x256xf32>
    %168 = arith.mulf %156, %167 : vector<8x256xf32>
    %169 = arith.addf %165, %168 : vector<8x256xf32>
    %170 = math.tanh %169 : vector<8x256xf32>
    %cst_48 = arith.constant 1.000000e+00 : f32
    %171 = vector.broadcast %cst_48 : f32 to vector<8x256xf32>
    %172 = arith.subf %171, %164 : vector<8x256xf32>
    %173 = arith.mulf %172, %170 : vector<8x256xf32>
    %174 = arith.mulf %164, %142 : vector<8x256xf32>
    %175 = arith.addf %173, %174 : vector<8x256xf32>
    %c5_i32 = arith.constant 5 : i32
    %c8_i32_49 = arith.constant 8 : i32
    %176 = arith.muli %c5_i32, %c8_i32_49 : i32
    %177 = tpu.assume_multiple %176, 8 : i32
    %178 = arith.index_cast %177 : i32 to index
    %c0_50 = arith.constant 0 : index
    %179 = vector.load %arg10[%178, %c0_50] : memref<64x768xf32, #tpu.memory_space<vmem>>, vector<8x768xf32>
    %c0_51 = arith.constant 0 : index
    %c0_52 = arith.constant 0 : index
    %180 = vector.load %arg2[%c0_51, %c0_52] : memref<256x768xf32, #tpu.memory_space<vmem>>, vector<256x768xf32>
    %cst_53 = arith.constant dense<0.000000e+00> : vector<8x768xf32>
    %181 = tpu.matmul %175, %180, %cst_53 {dimension_numbers = #tpu.dot_dimension_numbers<[1], [0], [0], [1], [0, 0, 1, 1], [], []>} : vector<8x256xf32>, vector<256x768xf32>, vector<8x768xf32> -> vector<8x768xf32>
    %182 = vector.extract_strided_slice %179 {offsets = [0, 0], sizes = [8, 256], strides = [1, 1]} : vector<8x768xf32> to vector<8x256xf32>
    %183 = vector.extract_strided_slice %181 {offsets = [0, 0], sizes = [8, 256], strides = [1, 1]} : vector<8x768xf32> to vector<8x256xf32>
    %184 = arith.addf %182, %183 : vector<8x256xf32>
    %185 = arith.negf %184 : vector<8x256xf32>
    %186 = math.exp %185 : vector<8x256xf32>
    %cst_54 = arith.constant 1.000000e+00 : f32
    %187 = vector.broadcast %cst_54 : f32 to vector<8x256xf32>
    %188 = arith.addf %187, %186 : vector<8x256xf32>
    %189 = arith.divf %187, %188 : vector<8x256xf32>
    %190 = vector.extract_strided_slice %179 {offsets = [0, 256], sizes = [8, 256], strides = [1, 1]} : vector<8x768xf32> to vector<8x256xf32>
    %191 = vector.extract_strided_slice %181 {offsets = [0, 256], sizes = [8, 256], strides = [1, 1]} : vector<8x768xf32> to vector<8x256xf32>
    %192 = arith.addf %190, %191 : vector<8x256xf32>
    %193 = arith.negf %192 : vector<8x256xf32>
    %194 = math.exp %193 : vector<8x256xf32>
    %cst_55 = arith.constant 1.000000e+00 : f32
    %195 = vector.broadcast %cst_55 : f32 to vector<8x256xf32>
    %196 = arith.addf %195, %194 : vector<8x256xf32>
    %197 = arith.divf %195, %196 : vector<8x256xf32>
    %198 = vector.extract_strided_slice %179 {offsets = [0, 512], sizes = [8, 256], strides = [1, 1]} : vector<8x768xf32> to vector<8x256xf32>
    %199 = vector.extract_strided_slice %181 {offsets = [0, 512], sizes = [8, 256], strides = [1, 1]} : vector<8x768xf32> to vector<8x256xf32>
    %200 = arith.addf %199, %9 : vector<8x256xf32>
    %201 = arith.mulf %189, %200 : vector<8x256xf32>
    %202 = arith.addf %198, %201 : vector<8x256xf32>
    %203 = math.tanh %202 : vector<8x256xf32>
    %cst_56 = arith.constant 1.000000e+00 : f32
    %204 = vector.broadcast %cst_56 : f32 to vector<8x256xf32>
    %205 = arith.subf %204, %197 : vector<8x256xf32>
    %206 = arith.mulf %205, %203 : vector<8x256xf32>
    %207 = arith.mulf %197, %175 : vector<8x256xf32>
    %208 = arith.addf %206, %207 : vector<8x256xf32>
    %c6_i32 = arith.constant 6 : i32
    %c8_i32_57 = arith.constant 8 : i32
    %209 = arith.muli %c6_i32, %c8_i32_57 : i32
    %210 = tpu.assume_multiple %209, 8 : i32
    %211 = arith.index_cast %210 : i32 to index
    %c0_58 = arith.constant 0 : index
    %212 = vector.load %arg10[%211, %c0_58] : memref<64x768xf32, #tpu.memory_space<vmem>>, vector<8x768xf32>
    %c0_59 = arith.constant 0 : index
    %c0_60 = arith.constant 0 : index
    %213 = vector.load %arg2[%c0_59, %c0_60] : memref<256x768xf32, #tpu.memory_space<vmem>>, vector<256x768xf32>
    %cst_61 = arith.constant dense<0.000000e+00> : vector<8x768xf32>
    %214 = tpu.matmul %208, %213, %cst_61 {dimension_numbers = #tpu.dot_dimension_numbers<[1], [0], [0], [1], [0, 0, 1, 1], [], []>} : vector<8x256xf32>, vector<256x768xf32>, vector<8x768xf32> -> vector<8x768xf32>
    %215 = vector.extract_strided_slice %212 {offsets = [0, 0], sizes = [8, 256], strides = [1, 1]} : vector<8x768xf32> to vector<8x256xf32>
    %216 = vector.extract_strided_slice %214 {offsets = [0, 0], sizes = [8, 256], strides = [1, 1]} : vector<8x768xf32> to vector<8x256xf32>
    %217 = arith.addf %215, %216 : vector<8x256xf32>
    %218 = arith.negf %217 : vector<8x256xf32>
    %219 = math.exp %218 : vector<8x256xf32>
    %cst_62 = arith.constant 1.000000e+00 : f32
    %220 = vector.broadcast %cst_62 : f32 to vector<8x256xf32>
    %221 = arith.addf %220, %219 : vector<8x256xf32>
    %222 = arith.divf %220, %221 : vector<8x256xf32>
    %223 = vector.extract_strided_slice %212 {offsets = [0, 256], sizes = [8, 256], strides = [1, 1]} : vector<8x768xf32> to vector<8x256xf32>
    %224 = vector.extract_strided_slice %214 {offsets = [0, 256], sizes = [8, 256], strides = [1, 1]} : vector<8x768xf32> to vector<8x256xf32>
    %225 = arith.addf %223, %224 : vector<8x256xf32>
    %226 = arith.negf %225 : vector<8x256xf32>
    %227 = math.exp %226 : vector<8x256xf32>
    %cst_63 = arith.constant 1.000000e+00 : f32
    %228 = vector.broadcast %cst_63 : f32 to vector<8x256xf32>
    %229 = arith.addf %228, %227 : vector<8x256xf32>
    %230 = arith.divf %228, %229 : vector<8x256xf32>
    %231 = vector.extract_strided_slice %212 {offsets = [0, 512], sizes = [8, 256], strides = [1, 1]} : vector<8x768xf32> to vector<8x256xf32>
    %232 = vector.extract_strided_slice %214 {offsets = [0, 512], sizes = [8, 256], strides = [1, 1]} : vector<8x768xf32> to vector<8x256xf32>
    %233 = arith.addf %232, %9 : vector<8x256xf32>
    %234 = arith.mulf %222, %233 : vector<8x256xf32>
    %235 = arith.addf %231, %234 : vector<8x256xf32>
    %236 = math.tanh %235 : vector<8x256xf32>
    %cst_64 = arith.constant 1.000000e+00 : f32
    %237 = vector.broadcast %cst_64 : f32 to vector<8x256xf32>
    %238 = arith.subf %237, %230 : vector<8x256xf32>
    %239 = arith.mulf %238, %236 : vector<8x256xf32>
    %240 = arith.mulf %230, %208 : vector<8x256xf32>
    %241 = arith.addf %239, %240 : vector<8x256xf32>
    %c7_i32 = arith.constant 7 : i32
    %c8_i32_65 = arith.constant 8 : i32
    %242 = arith.muli %c7_i32, %c8_i32_65 : i32
    %243 = tpu.assume_multiple %242, 8 : i32
    %244 = arith.index_cast %243 : i32 to index
    %c0_66 = arith.constant 0 : index
    %245 = vector.load %arg10[%244, %c0_66] : memref<64x768xf32, #tpu.memory_space<vmem>>, vector<8x768xf32>
    %c0_67 = arith.constant 0 : index
    %c0_68 = arith.constant 0 : index
    %246 = vector.load %arg2[%c0_67, %c0_68] : memref<256x768xf32, #tpu.memory_space<vmem>>, vector<256x768xf32>
    %cst_69 = arith.constant dense<0.000000e+00> : vector<8x768xf32>
    %247 = tpu.matmul %241, %246, %cst_69 {dimension_numbers = #tpu.dot_dimension_numbers<[1], [0], [0], [1], [0, 0, 1, 1], [], []>} : vector<8x256xf32>, vector<256x768xf32>, vector<8x768xf32> -> vector<8x768xf32>
    %248 = vector.extract_strided_slice %245 {offsets = [0, 0], sizes = [8, 256], strides = [1, 1]} : vector<8x768xf32> to vector<8x256xf32>
    %249 = vector.extract_strided_slice %247 {offsets = [0, 0], sizes = [8, 256], strides = [1, 1]} : vector<8x768xf32> to vector<8x256xf32>
    %250 = arith.addf %248, %249 : vector<8x256xf32>
    %251 = arith.negf %250 : vector<8x256xf32>
    %252 = math.exp %251 : vector<8x256xf32>
    %cst_70 = arith.constant 1.000000e+00 : f32
    %253 = vector.broadcast %cst_70 : f32 to vector<8x256xf32>
    %254 = arith.addf %253, %252 : vector<8x256xf32>
    %255 = arith.divf %253, %254 : vector<8x256xf32>
    %256 = vector.extract_strided_slice %245 {offsets = [0, 256], sizes = [8, 256], strides = [1, 1]} : vector<8x768xf32> to vector<8x256xf32>
    %257 = vector.extract_strided_slice %247 {offsets = [0, 256], sizes = [8, 256], strides = [1, 1]} : vector<8x768xf32> to vector<8x256xf32>
    %258 = arith.addf %256, %257 : vector<8x256xf32>
    %259 = arith.negf %258 : vector<8x256xf32>
    %260 = math.exp %259 : vector<8x256xf32>
    %cst_71 = arith.constant 1.000000e+00 : f32
    %261 = vector.broadcast %cst_71 : f32 to vector<8x256xf32>
    %262 = arith.addf %261, %260 : vector<8x256xf32>
    %263 = arith.divf %261, %262 : vector<8x256xf32>
    %264 = vector.extract_strided_slice %245 {offsets = [0, 512], sizes = [8, 256], strides = [1, 1]} : vector<8x768xf32> to vector<8x256xf32>
    %265 = vector.extract_strided_slice %247 {offsets = [0, 512], sizes = [8, 256], strides = [1, 1]} : vector<8x768xf32> to vector<8x256xf32>
    %266 = arith.addf %265, %9 : vector<8x256xf32>
    %267 = arith.mulf %255, %266 : vector<8x256xf32>
    %268 = arith.addf %264, %267 : vector<8x256xf32>
    %269 = math.tanh %268 : vector<8x256xf32>
    %cst_72 = arith.constant 1.000000e+00 : f32
    %270 = vector.broadcast %cst_72 : f32 to vector<8x256xf32>
    %271 = arith.subf %270, %263 : vector<8x256xf32>
    %272 = arith.mulf %271, %269 : vector<8x256xf32>
    %273 = arith.mulf %263, %241 : vector<8x256xf32>
    %274 = arith.addf %272, %273 : vector<8x256xf32>
    %c8_i32_73 = arith.constant 8 : i32
    %c0_74 = arith.constant 0 : index
    %c0_75 = arith.constant 0 : index
    %275 = vector.load %arg5[%c0_74, %c0_75] : memref<256x512xf32, #tpu.memory_space<vmem>>, vector<256x512xf32>
    %cst_76 = arith.constant dense<0.000000e+00> : vector<8x512xf32>
    %276 = tpu.matmul %274, %275, %cst_76 {dimension_numbers = #tpu.dot_dimension_numbers<[1], [0], [0], [1], [0, 0, 1, 1], [], []>} : vector<8x256xf32>, vector<256x512xf32>, vector<8x512xf32> -> vector<8x512xf32>
    %c0_77 = arith.constant 0 : index
    %c0_78 = arith.constant 0 : index
    %277 = vector.load %arg6[%c0_77, %c0_78] : memref<1x512xf32, #tpu.memory_space<vmem>>, vector<1x512xf32>
    %278 = vector.broadcast %277 : vector<1x512xf32> to vector<8x512xf32>
    %279 = arith.addf %276, %278 : vector<8x512xf32>
    %cst_79 = arith.constant 0.000000e+00 : f32
    %280 = vector.broadcast %cst_79 : f32 to vector<8x512xf32>
    %281 = arith.maximumf %279, %280 : vector<8x512xf32>
    %c0_80 = arith.constant 0 : index
    %c0_81 = arith.constant 0 : index
    %282 = vector.load %arg7[%c0_80, %c0_81] : memref<512x128xf32, #tpu.memory_space<vmem>>, vector<512x128xf32>
    %cst_82 = arith.constant dense<0.000000e+00> : vector<8x128xf32>
    %283 = tpu.matmul %281, %282, %cst_82 {dimension_numbers = #tpu.dot_dimension_numbers<[1], [0], [0], [1], [0, 0, 1, 1], [], []>} : vector<8x512xf32>, vector<512x128xf32>, vector<8x128xf32> -> vector<8x128xf32>
    %c0_83 = arith.constant 0 : index
    %c0_84 = arith.constant 0 : index
    %284 = vector.load %arg8[%c0_83, %c0_84] : memref<1x128xf32, #tpu.memory_space<vmem>>, vector<1x128xf32>
    %285 = vector.broadcast %284 : vector<1x128xf32> to vector<8x128xf32>
    %286 = arith.addf %283, %285 : vector<8x128xf32>
    %c0_85 = arith.constant 0 : index
    %c0_86 = arith.constant 0 : index
    %287 = vector.load %arg9[%c0_85, %c0_86] : memref<8x128xf32, #tpu.memory_space<vmem>>, vector<8x128xf32>
    tpu.vector_store %arg9[%c0_85, %c0_86], %286 {strides = array<i32>} : memref<8x128xf32, #tpu.memory_space<vmem>>, vector<8x128xf32>,
    return
  }
}

</mosaic_0001>

<llo_original>
// kernel: tpu_custom_call.1
$region0: #{tpu_custom_call.1}
  #allocation0 [shape = 'u32[]', space=smem, size = 0x4, offset = 0x4, fixed_abs, tag = 'smem constant byte address 0x4 - core index']
  #allocation1 [shape = 'u32[144,128]{1,0:T(1,128)}', space=vmem, size = 0x12000, scoped, tag = 'internal scratch']
  #allocation2 [shape = 'f32[64,768]{1,0:T(8,128)}', space=vmem, size = 0x30000, scoped, tag = 'scratch operand']
  %s0 = inlined_call_operand.hbm [shape: f32[64,144], index: 0, kind: input, shape index: {}]
  %s1 = inlined_call_operand.hbm [shape: f32[144,768], index: 1, kind: input, shape index: {}]
  %s2 = inlined_call_operand.hbm [shape: f32[256,768], index: 2, kind: input, shape index: {}]
  %s3 = inlined_call_operand.vmem [shape: f32[1,768], index: 3, kind: input, shape index: {}]
  %s4 = inlined_call_operand.vmem [shape: f32[1,256], index: 4, kind: input, shape index: {}]
  %s5 = inlined_call_operand.hbm [shape: f32[256,512], index: 5, kind: input, shape index: {}]
  %s6 = inlined_call_operand.vmem [shape: f32[1,512], index: 6, kind: input, shape index: {}]
  %s7 = inlined_call_operand.hbm [shape: f32[512,128], index: 7, kind: input, shape index: {}]
  %s8 = inlined_call_operand.vmem [shape: f32[1,128], index: 8, kind: input, shape index: {}]
  %s9 = inlined_call_operand.hbm [shape: f32[8,128], index: 9, kind: output, shape index: {}]
  %s10 = sld [smem:[#allocation0]]
  $region66: #{tpu_custom_call.1} parent=0
    _
  %s12 = ssub.s32 1, %s10
  %s13 = scalar_select 0, %s12, %s10
  $region1: #{tpu_custom_call.1} parent=0
    #allocation3 [shape = 'u8[65536]{0}', space=vmem, size = 0x10000, scoped, tag = 'input window, operand 0, single buffered']
    #allocation4 [shape = 's32[1]{0}', space=sflag, size = 0x4, scoped, tag = 'scoped memory for tpu_custom_call.1']
    #allocation5 [shape = 's32[1]{0}', space=sflag, size = 0x4, scoped, tag = 'scoped memory for tpu_custom_call.1']
    #allocation6 [shape = 'u8[442368]{0}', space=vmem, size = 0x6c000, scoped, tag = 'input window, operand 1, single buffered']
    #allocation7 [shape = 's32[1]{0}', space=sflag, size = 0x4, scoped, tag = 'scoped memory for tpu_custom_call.1']
    #allocation8 [shape = 'u8[786432]{0}', space=vmem, size = 0xc0000, scoped, tag = 'input window, operand 2, single buffered']
    #allocation9 [shape = 'u8[524288]{0}', space=vmem, size = 0x80000, scoped, tag = 'input window, operand 5, single buffered']
    #allocation10 [shape = 's32[1]{0}', space=sflag, size = 0x4, scoped, tag = 'scoped memory for tpu_custom_call.1']
    #allocation11 [shape = 'u8[262144]{0}', space=vmem, size = 0x40000, scoped, tag = 'input window, operand 7, single buffered']
    #allocation12 [shape = 'u8[4096]{0}', space=vmem, size = 0x1000, scoped, tag = 'output window, operand 0, single buffered']
    %14 = vsyncpa [#allocation4], 0
    %15 = vsyncpa [#allocation7], 0
    %16 = vsyncpa [#allocation10], 0
    %17 = vsyncpa [#allocation5], 0
    // Predicated region
    $region2: #{tpu_custom_call.1} parent=1 // pred_check
      _
    $region3: #{tpu_custom_call.1} parent=1 // pred_check_branch
      %19 = sbr.rel (0) target = $region5
    $region4: #{tpu_custom_call.1} parent=1 // pred_region
      %s21 = ssub.s32 2048, 2048
      %22 = vsyncadd [#allocation4], %s21
      %s23 = sshll.u32 [#allocation3], 4
      %s24 = int_to_ptr.vmem [resolvable:$true] %s23
      %29 = dma.hbm_to_vmem [thread:$0]  %s0, 2048, %s24, [#allocation4], 256, 256, 16
    $region5: #{tpu_custom_call.1} parent=1 // pred_fallthru
      _
    // Predicated region
    $region6: #{tpu_custom_call.1} parent=1 // pred_check
      _
    $region7: #{tpu_custom_call.1} parent=1 // pred_check_branch
      %31 = sbr.rel (0) target = $region9
    $region8: #{tpu_custom_call.1} parent=1 // pred_region
      %s33 = ssub.s32 13824, 13824
      %34 = vsyncadd [#allocation7], %s33
      %s35 = sshll.u32 [#allocation6], 4
      %s36 = int_to_ptr.vmem [resolvable:$true] %s35
      %41 = dma.hbm_to_vmem [thread:$0]  %s1, 13824, %s36, [#allocation7], 768, 768, 48
    $region9: #{tpu_custom_call.1} parent=1 // pred_fallthru
      _
    // Predicated region
    $region10: #{tpu_custom_call.1} parent=1 // pred_check
      _
    $region11: #{tpu_custom_call.1} parent=1 // pred_check_branch
      %43 = sbr.rel (0) target = $region13
    $region12: #{tpu_custom_call.1} parent=1 // pred_region
      %s45 = ssub.s32 24576, 24576
      %46 = vsyncadd [#allocation7], %s45
      %s47 = sshll.u32 [#allocation8], 4
      %s48 = int_to_ptr.vmem [resolvable:$true] %s47
      %53 = dma.hbm_to_vmem [thread:$0]  %s2, 24576, %s48, [#allocation7], 768, 768, 48
    $region13: #{tpu_custom_call.1} parent=1 // pred_fallthru
      _
    // Predicated region
    $region14: #{tpu_custom_call.1} parent=1 // pred_check
      _
    $region15: #{tpu_custom_call.1} parent=1 // pred_check_branch
      %55 = sbr.rel (0) target = $region17
    $region16: #{tpu_custom_call.1} parent=1 // pred_region
      _
    $region17: #{tpu_custom_call.1} parent=1 // pred_fallthru
      _
    // Predicated region
    $region18: #{tpu_custom_call.1} parent=1 // pred_check
      _
    $region19: #{tpu_custom_call.1} parent=1 // pred_check_branch
      %57 = sbr.rel (0) target = $region21
    $region20: #{tpu_custom_call.1} parent=1 // pred_region
      _
    $region21: #{tpu_custom_call.1} parent=1 // pred_fallthru
      _
    // Predicated region
    $region22: #{tpu_custom_call.1} parent=1 // pred_check
      _
    $region23: #{tpu_custom_call.1} parent=1 // pred_check_branch
      %59 = sbr.rel (0) target = $region25
    $region24: #{tpu_custom_call.1} parent=1 // pred_region
      %s61 = ssub.s32 16384, 16384
      %62 = vsyncadd [#allocation10], %s61
      %s63 = sshll.u32 [#allocation9], 4
      %s64 = int_to_ptr.vmem [resolvable:$true] %s63
      %69 = dma.hbm_to_vmem [thread:$0]  %s5, 16384, %s64, [#allocation10], 512, 512, 32
    $region25: #{tpu_custom_call.1} parent=1 // pred_fallthru
      _
    // Predicated region
    $region26: #{tpu_custom_call.1} parent=1 // pred_check
      _
    $region27: #{tpu_custom_call.1} parent=1 // pred_check_branch
      %71 = sbr.rel (0) target = $region29
    $region28: #{tpu_custom_call.1} parent=1 // pred_region
      _
    $region29: #{tpu_custom_call.1} parent=1 // pred_fallthru
      _
    // Predicated region
    $region30: #{tpu_custom_call.1} parent=1 // pred_check
      _
    $region31: #{tpu_custom_call.1} parent=1 // pred_check_branch
      %73 = sbr.rel (0) target = $region33
    $region32: #{tpu_custom_call.1} parent=1 // pred_region
      %s75 = ssub.s32 8192, 8192
      %76 = vsyncadd [#allocation10], %s75
      %s77 = sshll.u32 [#allocation11], 4
      %s78 = int_to_ptr.vmem [resolvable:$true] %s77
      %83 = dma.hbm_to_vmem [thread:$0]  %s7, 8192, %s78, [#allocation10], 128, 128, 8
    $region33: #{tpu_custom_call.1} parent=1 // pred_fallthru
      _
    // Predicated region
    $region34: #{tpu_custom_call.1} parent=1 // pred_check
      _
    $region35: #{tpu_custom_call.1} parent=1 // pred_check_branch
      %85 = sbr.rel (0) target = $region37
    $region36: #{tpu_custom_call.1} parent=1 // pred_region
      _
    $region37: #{tpu_custom_call.1} parent=1 // pred_fallthru
      _
    // Predicated region
    $region38: #{tpu_custom_call.1} parent=1 // pred_check
      _
    $region39: #{tpu_custom_call.1} parent=1 // pred_check_branch
      %87 = sbr.rel (0) target = $region41
    $region40: #{tpu_custom_call.1} parent=1 // pred_region
      %88 = dma.done [#allocation4], 2048
    $region41: #{tpu_custom_call.1} parent=1 // pred_fallthru
      _
    // Predicated region
    $region42: #{tpu_custom_call.1} parent=1 // pred_check
      _
    $region43: #{tpu_custom_call.1} parent=1 // pred_check_branch
      %90 = sbr.rel (0) target = $region45
    $region44: #{tpu_custom_call.1} parent=1 // pred_region
      %91 = dma.done [#allocation7], 13824
    $region45: #{tpu_custom_call.1} parent=1 // pred_fallthru
      _
    // Predicated region
    $region46: #{tpu_custom_call.1} parent=1 // pred_check
      _
    $region47: #{tpu_custom_call.1} parent=1 // pred_check_branch
      %93 = sbr.rel (0) target = $region49
    $region48: #{tpu_custom_call.1} parent=1 // pred_region
      %94 = dma.done [#allocation7], 24576
    $region49: #{tpu_custom_call.1} parent=1 // pred_fallthru
      _
    // Predicated region
    $region50: #{tpu_custom_call.1} parent=1 // pred_check
      _
    $region51: #{tpu_custom_call.1} parent=1 // pred_check_branch
      %96 = sbr.rel (0) target = $region53
    $region52: #{tpu_custom_call.1} parent=1 // pred_region
      %97 = dma.done [#allocation10], 16384
    $region53: #{tpu_custom_call.1} parent=1 // pred_fallthru
      _
    // Predicated region
    $region54: #{tpu_custom_call.1} parent=1 // pred_check
      _
    $region55: #{tpu_custom_call.1} parent=1 // pred_check_branch
      %99 = sbr.rel (0) target = $region57
    $region56: #{tpu_custom_call.1} parent=1 // pred_region
      %100 = dma.done [#allocation10], 8192
    $region57: #{tpu_custom_call.1} parent=1 // pred_fallthru
      _
    %v101 = vld [vmem:[#allocation3] sm:$0xff]
    %v102 = vld [vmem:[#allocation3 + $0x8] sm:$0xff]
    %v103 = vld [vmem:[#allocation3 + $0x10] sm:$0xff]
    %v104 = vld [vmem:[#allocation3 + $0x18] sm:$0xff]
    %v105 = vld [vmem:[#allocation3 + $0x20] sm:$0xff]
    %v106 = vld [vmem:[#allocation3 + $0x28] sm:$0xff]
    %v107 = vld [vmem:[#allocation3 + $0x30] sm:$0xff]
    %v108 = vld [vmem:[#allocation3 + $0x38] sm:$0xff]
    %v109 = vld [vmem:[#allocation3 + $0x40] sm:$0xff]
    %v110 = vld [vmem:[#allocation3 + $0x48] sm:$0xff]
    %v111 = vld [vmem:[#allocation3 + $0x50] sm:$0xff]
    %v112 = vld [vmem:[#allocation3 + $0x58] sm:$0xff]
    %v113 = vld [vmem:[#allocation3 + $0x60] sm:$0xff]
    %v114 = vld [vmem:[#allocation3 + $0x68] sm:$0xff]
    %v115 = vld [vmem:[#allocation3 + $0x70] sm:$0xff]
    %v116 = vld [vmem:[#allocation3 + $0x78] sm:$0xff]
    %v117 = vld [vmem:[#allocation6] sm:$0xff]
    %v118 = vld [vmem:[#allocation6 + $0x8] sm:$0xff]
    %v119 = vld [vmem:[#allocation6 + $0x10] sm:$0xff]
    %v120 = vld [vmem:[#allocation6 + $0x18] sm:$0xff]
    %v121 = vld [vmem:[#allocation6 + $0x20] sm:$0xff]
    %v122 = vld [vmem:[#allocation6 + $0x28] sm:$0xff]
    %v123 = vld [vmem:[#allocation6 + $0x30] sm:$0xff]
    %v124 = vld [vmem:[#allocation6 + $0x38] sm:$0xff]
    %v125 = vld [vmem:[#allocation6 + $0x40] sm:$0xff]
    %v126 = vld [vmem:[#allocation6 + $0x48] sm:$0xff]
    %v127 = vld [vmem:[#allocation6 + $0x50] sm:$0xff]
    %v128 = vld [vmem:[#allocation6 + $0x58] sm:$0xff]
    %v129 = vld [vmem:[#allocation6 + $0x60] sm:$0xff]
    %v130 = vld [vmem:[#allocation6 + $0x68] sm:$0xff]
    %v131 = vld [vmem:[#allocation6 + $0x70] sm:$0xff]
    %v132 = vld [vmem:[#allocation6 + $0x78] sm:$0xff]
    %v133 = vld [vmem:[#allocation6 + $0x80] sm:$0xff]
    %v134 = vld [vmem:[#allocation6 + $0x88] sm:$0xff]
    %v135 = vld [vmem:[#allocation6 + $0x90] sm:$0xff]
    %v136 = vld [vmem:[#allocation6 + $0x98] sm:$0xff]
    %v137 = vld [vmem:[#allocation6 + $0xa0] sm:$0xff]
    %v138 = vld [vmem:[#allocation6 + $0xa8] sm:$0xff]
    %v139 = vld [vmem:[#allocation6 + $0xb0] sm:$0xff]
    %v140 = vld [vmem:[#allocation6 + $0xb8] sm:$0xff]
    %v141 = vld [vmem:[#allocation6 + $0xc0] sm:$0xff]
    %v142 = vld [vmem:[#allocation6 + $0xc8] sm:$0xff]
    %v143 = vld [vmem:[#allocation6 + $0xd0] sm:$0xff]
    %v144 = vld [vmem:[#allocation6 + $0xd8] sm:$0xff]
    %v145 = vld [vmem:[#allocation6 + $0xe0] sm:$0xff]
    %v146 = vld [vmem:[#allocation6 + $0xe8] sm:$0xff]
    %v147 = vld [vmem:[#allocation6 + $0xf0] sm:$0xff]
    %v148 = vld [vmem:[#allocation6 + $0xf8] sm:$0xff]
    %v149 = vld [vmem:[#allocation6 + $0x100] sm:$0xff]
    %v150 = vld [vmem:[#allocation6 + $0x108] sm:$0xff]
    %v151 = vld [vmem:[#allocation6 + $0x110] sm:$0xff]
    %v152 = vld [vmem:[#allocation6 + $0x118] sm:$0xff]
    %v153 = vld [vmem:[#allocation6 + $0x120] sm:$0xff]
    %v154 = vld [vmem:[#allocation6 + $0x128] sm:$0xff]
    %v155 = vld [vmem:[#allocation6 + $0x130] sm:$0xff]
    %v156 = vld [vmem:[#allocation6 + $0x138] sm:$0xff]
    %v157 = vld [vmem:[#allocation6 + $0x140] sm:$0xff]
    %v158 = vld [vmem:[#allocation6 + $0x148] sm:$0xff]
    %v159 = vld [vmem:[#allocation6 + $0x150] sm:$0xff]
    %v160 = vld [vmem:[#allocation6 + $0x158] sm:$0xff]
    %v161 = vld [vmem:[#allocation6 + $0x160] sm:$0xff]
    %v162 = vld [vmem:[#allocation6 + $0x168] sm:$0xff]
    %v163 = vld [vmem:[#allocation6 + $0x170] sm:$0xff]
    %v164 = vld [vmem:[#allocation6 + $0x178] sm:$0xff]
    %v165 = vld [vmem:[#allocation6 + $0x180] sm:$0xff]
    %v166 = vld [vmem:[#allocation6 + $0x188] sm:$0xff]
    %v167 = vld [vmem:[#allocation6 + $0x190] sm:$0xff]
    %v168 = vld [vmem:[#allocation6 + $0x198] sm:$0xff]
    %v169 = vld [vmem:[#allocation6 + $0x1a0] sm:$0xff]
    %v170 = vld [vmem:[#allocation6 + $0x1a8] sm:$0xff]
    %v171 = vld [vmem:[#allocation6 + $0x1b0] sm:$0xff]
    %v172 = vld [vmem:[#allocation6 + $0x1b8] sm:$0xff]
    %v173 = vld [vmem:[#allocation6 + $0x1c0] sm:$0xff]
    %v174 = vld [vmem:[#allocation6 + $0x1c8] sm:$0xff]
    %v175 = vld [vmem:[#allocation6 + $0x1d0] sm:$0xff]
    %v176 = vld [vmem:[#allocation6 + $0x1d8] sm:$0xff]
    %v177 = vld [vmem:[#allocation6 + $0x1e0] sm:$0xff]
    %v178 = vld [vmem:[#allocation6 + $0x1e8] sm:$0xff]
    %v179 = vld [vmem:[#allocation6 + $0x1f0] sm:$0xff]
    %v180 = vld [vmem:[#allocation6 + $0x1f8] sm:$0xff]
    %v181 = vld [vmem:[#allocation6 + $0x200] sm:$0xff]
    %v182 = vld [vmem:[#allocation6 + $0x208] sm:$0xff]
    %v183 = vld [vmem:[#allocation6 + $0x210] sm:$0xff]
    %v184 = vld [vmem:[#allocation6 + $0x218] sm:$0xff]
    %v185 = vld [vmem:[#allocation6 + $0x220] sm:$0xff]
    %v186 = vld [vmem:[#allocation6 + $0x228] sm:$0xff]
    %v187 = vld [vmem:[#allocation6 + $0x230] sm:$0xff]
    %v188 = vld [vmem:[#allocation6 + $0x238] sm:$0xff]
    %v189 = vld [vmem:[#allocation6 + $0x240] sm:$0xff]
    %v190 = vld [vmem:[#allocation6 + $0x248] sm:$0xff]
    %v191 = vld [vmem:[#allocation6 + $0x250] sm:$0xff]
    %v192 = vld [vmem:[#allocation6 + $0x258] sm:$0xff]
    %v193 = vld [vmem:[#allocation6 + $0x260] sm:$0xff]
    %v194 = vld [vmem:[#allocation6 + $0x268] sm:$0xff]
    %v195 = vld [vmem:[#allocation6 + $0x270] sm:$0xff]
    %v196 = vld [vmem:[#allocation6 + $0x278] sm:$0xff]
    %v197 = vld [vmem:[#allocation6 + $0x280] sm:$0xff]
    %v198 = vld [vmem:[#allocation6 + $0x288] sm:$0xff]
    %v199 = vld [vmem:[#allocation6 + $0x290] sm:$0xff]
    %v200 = vld [vmem:[#allocation6 + $0x298] sm:$0xff]
    %v201 = vld [vmem:[#allocation6 + $0x2a0] sm:$0xff]
    %v202 = vld [vmem:[#allocation6 + $0x2a8] sm:$0xff]
    %v203 = vld [vmem:[#allocation6 + $0x2b0] sm:$0xff]
    %v204 = vld [vmem:[#allocation6 + $0x2b8] sm:$0xff]
    %v205 = vld [vmem:[#allocation6 + $0x2c0] sm:$0xff]
    %v206 = vld [vmem:[#allocation6 + $0x2c8] sm:$0xff]
    %v207 = vld [vmem:[#allocation6 + $0x2d0] sm:$0xff]
    %v208 = vld [vmem:[#allocation6 + $0x2d8] sm:$0xff]
    %v209 = vld [vmem:[#allocation6 + $0x2e0] sm:$0xff]
    %v210 = vld [vmem:[#allocation6 + $0x2e8] sm:$0xff]
    %v211 = vld [vmem:[#allocation6 + $0x2f0] sm:$0xff]
    %v212 = vld [vmem:[#allocation6 + $0x2f8] sm:$0xff]
    %v213 = vld [vmem:[#allocation6 + $0x300] sm:$0xff]
    %v214 = vld [vmem:[#allocation6 + $0x308] sm:$0xff]
    %v215 = vld [vmem:[#allocation6 + $0x310] sm:$0xff]
    %v216 = vld [vmem:[#allocation6 + $0x318] sm:$0xff]
    %v217 = vld [vmem:[#allocation6 + $0x320] sm:$0xff]
    %v218 = vld [vmem:[#allocation6 + $0x328] sm:$0xff]
    %v219 = vld [vmem:[#allocation6 + $0x330] sm:$0xff]
    %v220 = vld [vmem:[#allocation6 + $0x338] sm:$0xff]
    %v221 = vld [vmem:[#allocation6 + $0x340] sm:$0xff]
    %v222 = vld [vmem:[#allocation6 + $0x348] sm:$0xff]
    %v223 = vld [vmem:[#allocation6 + $0x350] sm:$0xff]
    %v224 = vld [vmem:[#allocation6 + $0x358] sm:$0xff]
    %v225 = vld [vmem:[%s3] sm:$0x3f]
    %v227 = vlaneseq
    %v228 = vshrl.u32 %v227, 7
    %v229 = vsub.s32 0, %v228
    %v230 = vrot.slane %v225, %v229
    %v231 = vlaneseq
    %v232 = vshrl.u32 %v231, 7
    %v233 = vsub.s32 1, %v232
    %v234 = vrot.slane %v225, %v233
    %v235 = vlaneseq
    %v236 = vshrl.u32 %v235, 7
    %v237 = vsub.s32 2, %v236
    %v238 = vrot.slane %v225, %v237
    %v239 = vlaneseq
    %v240 = vshrl.u32 %v239, 7
    %v241 = vsub.s32 3, %v240
    %v242 = vrot.slane %v225, %v241
    %v243 = vlaneseq
    %v244 = vshrl.u32 %v243, 7
    %v245 = vsub.s32 4, %v244
    %v246 = vrot.slane %v225, %v245
    %v247 = vlaneseq
    %v248 = vshrl.u32 %v247, 7
    %v249 = vsub.s32 5, %v248
    %v250 = vrot.slane %v225, %v249
    %vm257 = vcmask 130048
    %v259 = vsel %vm257, %v102, 0
    %v262 = vsel %vm257, %v104, 0
    %v265 = vsel %vm257, %v106, 0
    %v268 = vsel %vm257, %v108, 0
    %v271 = vsel %vm257, %v110, 0
    %v274 = vsel %vm257, %v112, 0
    %v277 = vsel %vm257, %v114, 0
    %v280 = vsel %vm257, %v116, 0
    %282 = vmatprep.subr.mxu0 %v118
    %283 = vmatpush1.msra.mxu0 %v117
    %284 = vmatprep.subr.mxu0 %v124
    %285 = vmatpush1.msra.mxu0 %v123
    %286 = vmatprep.subr.mxu0 %v130
    %287 = vmatpush1.msra.mxu0 %v129
    %288 = vmatprep.subr.mxu0 %v136
    %289 = vmatpush1.msra.mxu0 %v135
    %290 = vmatprep.subr.mxu0 %v142
    %291 = vmatpush1.msra.mxu0 %v141
    %292 = vmatprep.subr.mxu0 %v148
    %293 = vmatpush1.msra.mxu0 %v147
    %294 = vmatprep.subr.mxu0 %v154
    %295 = vmatpush1.msra.mxu0 %v153
    %296 = vmatprep.subr.mxu0 %v160
    %297 = vmatpush1.msra.mxu0 %v159
    %298 = vmatprep.subr.mxu0 %v166
    %299 = vmatpush1.msra.mxu0 %v165
    %300 = vmatprep.subr.mxu0 %v172
    %301 = vmatpush1.msra.mxu0 %v171
    %302 = vmatprep.subr.mxu0 %v178
    %303 = vmatpush1.msra.mxu0 %v177
    %304 = vmatprep.subr.mxu0 %v184
    %305 = vmatpush1.msra.mxu0 %v183
    %306 = vmatprep.subr.mxu0 %v190
    %307 = vmatpush1.msra.mxu0 %v189
    %308 = vmatprep.subr.mxu0 %v196
    %309 = vmatpush1.msra.mxu0 %v195
    %310 = vmatprep.subr.mxu0 %v202
    %311 = vmatpush1.msra.mxu0 %v201
    %312 = vmatprep.subr.mxu0 %v208
    %313 = vmatpush1.msra.mxu0 %v207
    %314 = vmatprep.subr.mxu0 %v214
    %315 = vmatpush1.msra.mxu0 %v213
    %316 = vmatprep.subr.mxu0 %v220
    %317 = vmatpush1.msra.mxu0 %v219
    %318 = vmatprep.subr.mxu0 0.0
    %319 = vmatpush1.msra.mxu0 0.0
    %320 = vmatprep.subr.mxu0 0.0
    %321 = vmatpush1.msra.mxu0 0.0
    %322 = vmatprep.subr.mxu0 0.0
    %323 = vmatpush1.msra.mxu0 0.0
    %324 = vmatprep.subr.mxu0 0.0
    %325 = vmatpush1.msra.mxu0 0.0
    %326 = vmatprep.subr.mxu0 0.0
    %327 = vmatpush1.msra.mxu0 0.0
    %328 = vmatprep.subr.mxu0 0.0
    %329 = vmatpush1.msra.mxu0 0.0
    %330 = vmatprep.subr.mxu0 0.0
    %331 = vmatpush1.msra.mxu0 0.0
    %332 = vmatprep.subr.mxu0 0.0
    %333 = vmatpush1.msra.mxu0 0.0
    %334 = vmatprep.subr.mxu0 0.0
    %335 = vmatpush1.msra.mxu0 0.0
    %336 = vmatprep.subr.mxu0 0.0
    %337 = vmatpush1.msra.mxu0 0.0
    %338 = vmatprep.subr.mxu0 0.0
    %339 = vmatpush1.msra.mxu0 0.0
    %340 = vmatprep.subr.mxu0 0.0
    %341 = vmatpush1.msra.mxu0 0.0
    %342 = vmatprep.subr.mxu0 0.0
    %343 = vmatpush1.msra.mxu0 0.0
    %344 = vmatprep.subr.mxu0 0.0
    %345 = vmatpush1.msra.mxu0 0.0
    %346 = vmatprep.mubr.f32.mxu0 %v259
    %347 = vmatmul.mubr.f32.gmra.mrb[0].mxu0 %v101
    %v348 = vpop.f32.mrb[0].mxu0
    %v349 = vadd.f32 %v230, %v348
    %v350 = vpop.f32.mrb[0].mxu0
    %v351 = vadd.f32 %v234, %v350
    %352 = vmatprep.mubr.f32.mxu0 %v262
    %353 = vmatmul.mubr.f32.gmra.mrb[0].mxu0 %v103
    %v354 = vpop.f32.mrb[0].mxu0
    %v355 = vadd.f32 %v230, %v354
    %v356 = vpop.f32.mrb[0].mxu0
    %v357 = vadd.f32 %v234, %v356
    %358 = vmatprep.mubr.f32.mxu0 %v265
    %359 = vmatmul.mubr.f32.gmra.mrb[0].mxu0 %v105
    %v360 = vpop.f32.mrb[0].mxu0
    %v361 = vadd.f32 %v230, %v360
    %v362 = vpop.f32.mrb[0].mxu0
    %v363 = vadd.f32 %v234, %v362
    %364 = vmatprep.mubr.f32.mxu0 %v268
    %365 = vmatmul.mubr.f32.gmra.mrb[0].mxu0 %v107
    %v366 = vpop.f32.mrb[0].mxu0
    %v367 = vadd.f32 %v230, %v366
    %v368 = vpop.f32.mrb[0].mxu0
    %v369 = vadd.f32 %v234, %v368
    %370 = vmatprep.mubr.f32.mxu0 %v271
    %371 = vmatmul.mubr.f32.gmra.mrb[0].mxu0 %v109
    %v372 = vpop.f32.mrb[0].mxu0
    %v373 = vadd.f32 %v230, %v372
    %v374 = vpop.f32.mrb[0].mxu0
    %v375 = vadd.f32 %v234, %v374
    %376 = vmatprep.mubr.f32.mxu0 %v274
    %377 = vmatmul.mubr.f32.gmra.mrb[0].mxu0 %v111
    %v378 = vpop.f32.mrb[0].mxu0
    %v379 = vadd.f32 %v230, %v378
    %v380 = vpop.f32.mrb[0].mxu0
    %v381 = vadd.f32 %v234, %v380
    %382 = vmatprep.mubr.f32.mxu0 %v277
    %383 = vmatmul.mubr.f32.gmra.mrb[0].mxu0 %v113
    %v384 = vpop.f32.mrb[0].mxu0
    %v385 = vadd.f32 %v230, %v384
    %v386 = vpop.f32.mrb[0].mxu0
    %v387 = vadd.f32 %v234, %v386
    %388 = vmatprep.mubr.f32.mxu0 %v280
    %389 = vmatmul.mubr.f32.gmra.mrb[0].mxu0 %v115
    %v390 = vpop.f32.mrb[0].mxu0
    %v391 = vadd.f32 %v230, %v390
    %v392 = vpop.f32.mrb[0].mxu0
    %v393 = vadd.f32 %v234, %v392
    %394 = vdwg.mxu0
    %395 = vmatprep.subr.mxu0 %v120
    %396 = vmatpush1.msra.mxu0 %v119
    %397 = vmatprep.subr.mxu0 %v126
    %398 = vmatpush1.msra.mxu0 %v125
    %399 = vmatprep.subr.mxu0 %v132
    %400 = vmatpush1.msra.mxu0 %v131
    %401 = vmatprep.subr.mxu0 %v138
    %402 = vmatpush1.msra.mxu0 %v137
    %403 = vmatprep.subr.mxu0 %v144
    %404 = vmatpush1.msra.mxu0 %v143
    %405 = vmatprep.subr.mxu0 %v150
    %406 = vmatpush1.msra.mxu0 %v149
    %407 = vmatprep.subr.mxu0 %v156
    %408 = vmatpush1.msra.mxu0 %v155
    %409 = vmatprep.subr.mxu0 %v162
    %410 = vmatpush1.msra.mxu0 %v161
    %411 = vmatprep.subr.mxu0 %v168
    %412 = vmatpush1.msra.mxu0 %v167
    %413 = vmatprep.subr.mxu0 %v174
    %414 = vmatpush1.msra.mxu0 %v173
    %415 = vmatprep.subr.mxu0 %v180
    %416 = vmatpush1.msra.mxu0 %v179
    %417 = vmatprep.subr.mxu0 %v186
    %418 = vmatpush1.msra.mxu0 %v185
    %419 = vmatprep.subr.mxu0 %v192
    %420 = vmatpush1.msra.mxu0 %v191
    %421 = vmatprep.subr.mxu0 %v198
    %422 = vmatpush1.msra.mxu0 %v197
    %423 = vmatprep.subr.mxu0 %v204
    %424 = vmatpush1.msra.mxu0 %v203
    %425 = vmatprep.subr.mxu0 %v210
    %426 = vmatpush1.msra.mxu0 %v209
    %427 = vmatprep.subr.mxu0 %v216
    %428 = vmatpush1.msra.mxu0 %v215
    %429 = vmatprep.subr.mxu0 %v222
    %430 = vmatpush1.msra.mxu0 %v221
    %431 = vmatprep.subr.mxu0 0.0
    %432 = vmatpush1.msra.mxu0 0.0
    %433 = vmatprep.subr.mxu0 0.0
    %434 = vmatpush1.msra.mxu0 0.0
    %435 = vmatprep.subr.mxu0 0.0
    %436 = vmatpush1.msra.mxu0 0.0
    %437 = vmatprep.subr.mxu0 0.0
    %438 = vmatpush1.msra.mxu0 0.0
    %439 = vmatprep.subr.mxu0 0.0
    %440 = vmatpush1.msra.mxu0 0.0
    %441 = vmatprep.subr.mxu0 0.0
    %442 = vmatpush1.msra.mxu0 0.0
    %443 = vmatprep.subr.mxu0 0.0
    %444 = vmatpush1.msra.mxu0 0.0
    %445 = vmatprep.subr.mxu0 0.0
    %446 = vmatpush1.msra.mxu0 0.0
    %447 = vmatprep.subr.mxu0 0.0
    %448 = vmatpush1.msra.mxu0 0.0
    %449 = vmatprep.subr.mxu0 0.0
    %450 = vmatpush1.msra.mxu0 0.0
    %451 = vmatprep.subr.mxu0 0.0
    %452 = vmatpush1.msra.mxu0 0.0
    %453 = vmatprep.subr.mxu0 0.0
    %454 = vmatpush1.msra.mxu0 0.0
    %455 = vmatprep.subr.mxu0 0.0
    %456 = vmatpush1.msra.mxu0 0.0
    %457 = vmatprep.subr.mxu0 0.0
    %458 = vmatpush1.msra.mxu0 0.0
    %459 = vmatprep.mubr.f32.mxu0 %v259
    %460 = vmatmul.mubr.f32.gmra.mrb[0].mxu0 %v101
    %v461 = vpop.f32.mrb[0].mxu0
    %v462 = vadd.f32 %v238, %v461
    %v463 = vpop.f32.mrb[0].mxu0
    %v464 = vadd.f32 %v242, %v463
    %465 = vmatprep.mubr.f32.mxu0 %v262
    %466 = vmatmul.mubr.f32.gmra.mrb[0].mxu0 %v103
    %v467 = vpop.f32.mrb[0].mxu0
    %v468 = vadd.f32 %v238, %v467
    %v469 = vpop.f32.mrb[0].mxu0
    %v470 = vadd.f32 %v242, %v469
    %471 = vmatprep.mubr.f32.mxu0 %v265
    %472 = vmatmul.mubr.f32.gmra.mrb[0].mxu0 %v105
    %v473 = vpop.f32.mrb[0].mxu0
    %v474 = vadd.f32 %v238, %v473
    %v475 = vpop.f32.mrb[0].mxu0
    %v476 = vadd.f32 %v242, %v475
    %477 = vmatprep.mubr.f32.mxu0 %v268
    %478 = vmatmul.mubr.f32.gmra.mrb[0].mxu0 %v107
    %v479 = vpop.f32.mrb[0].mxu0
    %v480 = vadd.f32 %v238, %v479
    %v481 = vpop.f32.mrb[0].mxu0
    %v482 = vadd.f32 %v242, %v481
    %483 = vmatprep.mubr.f32.mxu0 %v271
    %484 = vmatmul.mubr.f32.gmra.mrb[0].mxu0 %v109
    %v485 = vpop.f32.mrb[0].mxu0
    %v486 = vadd.f32 %v238, %v485
    %v487 = vpop.f32.mrb[0].mxu0
    %v488 = vadd.f32 %v242, %v487
    %489 = vmatprep.mubr.f32.mxu0 %v274
    %490 = vmatmul.mubr.f32.gmra.mrb[0].mxu0 %v111
    %v491 = vpop.f32.mrb[0].mxu0
    %v492 = vadd.f32 %v238, %v491
    %v493 = vpop.f32.mrb[0].mxu0
    %v494 = vadd.f32 %v242, %v493
    %495 = vmatprep.mubr.f32.mxu0 %v277
    %496 = vmatmul.mubr.f32.gmra.mrb[0].mxu0 %v113
    %v497 = vpop.f32.mrb[0].mxu0
    %v498 = vadd.f32 %v238, %v497
    %v499 = vpop.f32.mrb[0].mxu0
    %v500 = vadd.f32 %v242, %v499
    %501 = vmatprep.mubr.f32.mxu0 %v280
    %502 = vmatmul.mubr.f32.gmra.mrb[0].mxu0 %v115
    %v503 = vpop.f32.mrb[0].mxu0
    %v504 = vadd.f32 %v238, %v503
    %v505 = vpop.f32.mrb[0].mxu0
    %v506 = vadd.f32 %v242, %v505
    %507 = vdwg.mxu0
    %508 = vmatprep.subr.mxu0 %v122
    %509 = vmatpush1.msra.mxu0 %v121
    %510 = vmatprep.subr.mxu0 %v128
    %511 = vmatpush1.msra.mxu0 %v127
    %512 = vmatprep.subr.mxu0 %v134
    %513 = vmatpush1.msra.mxu0 %v133
    %514 = vmatprep.subr.mxu0 %v140
    %515 = vmatpush1.msra.mxu0 %v139
    %516 = vmatprep.subr.mxu0 %v146
    %517 = vmatpush1.msra.mxu0 %v145
    %518 = vmatprep.subr.mxu0 %v152
    %519 = vmatpush1.msra.mxu0 %v151
    %520 = vmatprep.subr.mxu0 %v158
    %521 = vmatpush1.msra.mxu0 %v157
    %522 = vmatprep.subr.mxu0 %v164
    %523 = vmatpush1.msra.mxu0 %v163
    %524 = vmatprep.subr.mxu0 %v170
    %525 = vmatpush1.msra.mxu0 %v169
    %526 = vmatprep.subr.mxu0 %v176
    %527 = vmatpush1.msra.mxu0 %v175
    %528 = vmatprep.subr.mxu0 %v182
    %529 = vmatpush1.msra.mxu0 %v181
    %530 = vmatprep.subr.mxu0 %v188
    %531 = vmatpush1.msra.mxu0 %v187
    %532 = vmatprep.subr.mxu0 %v194
    %533 = vmatpush1.msra.mxu0 %v193
    %534 = vmatprep.subr.mxu0 %v200
    %535 = vmatpush1.msra.mxu0 %v199
    %536 = vmatprep.subr.mxu0 %v206
    %537 = vmatpush1.msra.mxu0 %v205
    %538 = vmatprep.subr.mxu0 %v212
    %539 = vmatpush1.msra.mxu0 %v211
    %540 = vmatprep.subr.mxu0 %v218
    %541 = vmatpush1.msra.mxu0 %v217
    %542 = vmatprep.subr.mxu0 %v224
    %543 = vmatpush1.msra.mxu0 %v223
    %544 = vmatprep.subr.mxu0 0.0
    %545 = vmatpush1.msra.mxu0 0.0
    %546 = vmatprep.subr.mxu0 0.0
    %547 = vmatpush1.msra.mxu0 0.0
    %548 = vmatprep.subr.mxu0 0.0
    %549 = vmatpush1.msra.mxu0 0.0
    %550 = vmatprep.subr.mxu0 0.0
    %551 = vmatpush1.msra.mxu0 0.0
    %552 = vmatprep.subr.mxu0 0.0
    %553 = vmatpush1.msra.mxu0 0.0
    %554 = vmatprep.subr.mxu0 0.0
    %555 = vmatpush1.msra.mxu0 0.0
    %556 = vmatprep.subr.mxu0 0.0
    %557 = vmatpush1.msra.mxu0 0.0
    %558 = vmatprep.subr.mxu0 0.0
    %559 = vmatpush1.msra.mxu0 0.0
    %560 = vmatprep.subr.mxu0 0.0
    %561 = vmatpush1.msra.mxu0 0.0
    %562 = vmatprep.subr.mxu0 0.0
    %563 = vmatpush1.msra.mxu0 0.0
    %564 = vmatprep.subr.mxu0 0.0
    %565 = vmatpush1.msra.mxu0 0.0
    %566 = vmatprep.subr.mxu0 0.0
    %567 = vmatpush1.msra.mxu0 0.0
    %568 = vmatprep.subr.mxu0 0.0
    %569 = vmatpush1.msra.mxu0 0.0
    %570 = vmatprep.subr.mxu0 0.0
    %571 = vmatpush1.msra.mxu0 0.0
    %572 = vmatprep.mubr.f32.mxu0 %v259
    %573 = vmatmul.mubr.f32.gmra.mrb[0].mxu0 %v101
    %v574 = vpop.f32.mrb[0].mxu0
    %v575 = vadd.f32 %v246, %v574
    %v576 = vpop.f32.mrb[0].mxu0
    %v577 = vadd.f32 %v250, %v576
    %578 = vmatprep.mubr.f32.mxu0 %v262
    %579 = vmatmul.mubr.f32.gmra.mrb[0].mxu0 %v103
    %v580 = vpop.f32.mrb[0].mxu0
    %v581 = vadd.f32 %v246, %v580
    %v582 = vpop.f32.mrb[0].mxu0
    %v583 = vadd.f32 %v250, %v582
    %584 = vmatprep.mubr.f32.mxu0 %v265
    %585 = vmatmul.mubr.f32.gmra.mrb[0].mxu0 %v105
    %v586 = vpop.f32.mrb[0].mxu0
    %v587 = vadd.f32 %v246, %v586
    %v588 = vpop.f32.mrb[0].mxu0
    %v589 = vadd.f32 %v250, %v588
    %590 = vmatprep.mubr.f32.mxu0 %v268
    %591 = vmatmul.mubr.f32.gmra.mrb[0].mxu0 %v107
    %v592 = vpop.f32.mrb[0].mxu0
    %v593 = vadd.f32 %v246, %v592
    %v594 = vpop.f32.mrb[0].mxu0
    %v595 = vadd.f32 %v250, %v594
    %596 = vmatprep.mubr.f32.mxu0 %v271
    %597 = vmatmul.mubr.f32.gmra.mrb[0].mxu0 %v109
    %v598 = vpop.f32.mrb[0].mxu0
    %v599 = vadd.f32 %v246, %v598
    %v600 = vpop.f32.mrb[0].mxu0
    %v601 = vadd.f32 %v250, %v600
    %602 = vmatprep.mubr.f32.mxu0 %v274
    %603 = vmatmul.mubr.f32.gmra.mrb[0].mxu0 %v111
    %v604 = vpop.f32.mrb[0].mxu0
    %v605 = vadd.f32 %v246, %v604
    %v606 = vpop.f32.mrb[0].mxu0
    %v607 = vadd.f32 %v250, %v606
    %608 = vmatprep.mubr.f32.mxu0 %v277
    %609 = vmatmul.mubr.f32.gmra.mrb[0].mxu0 %v113
    %v610 = vpop.f32.mrb[0].mxu0
    %v611 = vadd.f32 %v246, %v610
    %v612 = vpop.f32.mrb[0].mxu0
    %v613 = vadd.f32 %v250, %v612
    %614 = vmatprep.mubr.f32.mxu0 %v280
    %615 = vmatmul.mubr.f32.gmra.mrb[0].mxu0 %v115
    %v616 = vpop.f32.mrb[0].mxu0
    %v617 = vadd.f32 %v246, %v616
    %v618 = vpop.f32.mrb[0].mxu0
    %v619 = vadd.f32 %v250, %v618
    %620 = vdwg.mxu0
    %621 = vst [vmem:[#allocation2] sm:$0xff] %v349
    %622 = vst [vmem:[#allocation2 + $0x8] sm:$0xff] %v351
    %623 = vst [vmem:[#allocation2 + $0x10] sm:$0xff] %v462
    %624 = vst [vmem:[#allocation2 + $0x18] sm:$0xff] %v464
    %625 = vst [vmem:[#allocation2 + $0x20] sm:$0xff] %v575
    %626 = vst [vmem:[#allocation2 + $0x28] sm:$0xff] %v577
    %627 = vst [vmem:[#allocation2 + $0x30] sm:$0xff] %v355
    %628 = vst [vmem:[#allocation2 + $0x38] sm:$0xff] %v357
    %629 = vst [vmem:[#allocation2 + $0x40] sm:$0xff] %v468
    %630 = vst [vmem:[#allocation2 + $0x48] sm:$0xff] %v470
    %631 = vst [vmem:[#allocation2 + $0x50] sm:$0xff] %v581
    %632 = vst [vmem:[#allocation2 + $0x58] sm:$0xff] %v583
    %633 = vst [vmem:[#allocation2 + $0x60] sm:$0xff] %v361
    %634 = vst [vmem:[#allocation2 + $0x68] sm:$0xff] %v363
    %635 = vst [vmem:[#allocation2 + $0x70] sm:$0xff] %v474
    %636 = vst [vmem:[#allocation2 + $0x78] sm:$0xff] %v476
    %637 = vst [vmem:[#allocation2 + $0x80] sm:$0xff] %v587
    %638 = vst [vmem:[#allocation2 + $0x88] sm:$0xff] %v589
    %639 = vst [vmem:[#allocation2 + $0x90] sm:$0xff] %v367
    %640 = vst [vmem:[#allocation2 + $0x98] sm:$0xff] %v369
    %641 = vst [vmem:[#allocation2 + $0xa0] sm:$0xff] %v480
    %642 = vst [vmem:[#allocation2 + $0xa8] sm:$0xff] %v482
    %643 = vst [vmem:[#allocation2 + $0xb0] sm:$0xff] %v593
    %644 = vst [vmem:[#allocation2 + $0xb8] sm:$0xff] %v595
    %645 = vst [vmem:[#allocation2 + $0xc0] sm:$0xff] %v373
    %646 = vst [vmem:[#allocation2 + $0xc8] sm:$0xff] %v375
    %647 = vst [vmem:[#allocation2 + $0xd0] sm:$0xff] %v486
    %648 = vst [vmem:[#allocation2 + $0xd8] sm:$0xff] %v488
    %649 = vst [vmem:[#allocation2 + $0xe0] sm:$0xff] %v599
    %650 = vst [vmem:[#allocation2 + $0xe8] sm:$0xff] %v601
    %651 = vst [vmem:[#allocation2 + $0xf0] sm:$0xff] %v379
    %652 = vst [vmem:[#allocation2 + $0xf8] sm:$0xff] %v381
    %653 = vst [vmem:[#allocation2 + $0x100] sm:$0xff] %v492
    %654 = vst [vmem:[#allocation2 + $0x108] sm:$0xff] %v494
    %655 = vst [vmem:[#allocation2 + $0x110] sm:$0xff] %v605
    %656 = vst [vmem:[#allocation2 + $0x118] sm:$0xff] %v607
    %657 = vst [vmem:[#allocation2 + $0x120] sm:$0xff] %v385
    %658 = vst [vmem:[#allocation2 + $0x128] sm:$0xff] %v387
    %659 = vst [vmem:[#allocation2 + $0x130] sm:$0xff] %v498
    %660 = vst [vmem:[#allocation2 + $0x138] sm:$0xff] %v500
    %661 = vst [vmem:[#allocation2 + $0x140] sm:$0xff] %v611
    %662 = vst [vmem:[#allocation2 + $0x148] sm:$0xff] %v613
    %663 = vst [vmem:[#allocation2 + $0x150] sm:$0xff] %v391
    %664 = vst [vmem:[#allocation2 + $0x158] sm:$0xff] %v393
    %665 = vst [vmem:[#allocation2 + $0x160] sm:$0xff] %v504
    %666 = vst [vmem:[#allocation2 + $0x168] sm:$0xff] %v506
    %667 = vst [vmem:[#allocation2 + $0x170] sm:$0xff] %v617
    %668 = vst [vmem:[#allocation2 + $0x178] sm:$0xff] %v619
    %v669 = vld [vmem:[%s4] sm:$0x3]
    %v671 = vlaneseq
    %v672 = vshrl.u32 %v671, 7
    %v673 = vsub.s32 0, %v672
    %v674 = vrot.slane %v669, %v673
    %v675 = vlaneseq
    %v676 = vshrl.u32 %v675, 7
    %v677 = vsub.s32 1, %v676
    %v678 = vrot.slane %v669, %v677
    %s681 = smul.u32 0, 6
    %s682 = smul.addr %s681, 8
    %s683 = scalar_lea.vmem [#allocation2], %s682
    %v684 = vld [vmem:[%s683] sm:$0xff]
    %v685 = vld [vmem:[%s683 + $0x8] sm:$0xff]
    %v686 = vld [vmem:[%s683 + $0x10] sm:$0xff]
    %v687 = vld [vmem:[%s683 + $0x18] sm:$0xff]
    %v688 = vld [vmem:[%s683 + $0x20] sm:$0xff]
    %v689 = vld [vmem:[%s683 + $0x28] sm:$0xff]
    %v690 = vld [vmem:[#allocation8] sm:$0xff]
    %v691 = vld [vmem:[#allocation8 + $0x8] sm:$0xff]
    %v692 = vld [vmem:[#allocation8 + $0x10] sm:$0xff]
    %v693 = vld [vmem:[#allocation8 + $0x18] sm:$0xff]
    %v694 = vld [vmem:[#allocation8 + $0x20] sm:$0xff]
    %v695 = vld [vmem:[#allocation8 + $0x28] sm:$0xff]
    %v696 = vld [vmem:[#allocation8 + $0x30] sm:$0xff]
    %v697 = vld [vmem:[#allocation8 + $0x38] sm:$0xff]
    %v698 = vld [vmem:[#allocation8 + $0x40] sm:$0xff]
    %v699 = vld [vmem:[#allocation8 + $0x48] sm:$0xff]
    %v700 = vld [vmem:[#allocation8 + $0x50] sm:$0xff]
    %v701 = vld [vmem:[#allocation8 + $0x58] sm:$0xff]
    %v702 = vld [vmem:[#allocation8 + $0x60] sm:$0xff]
    %v703 = vld [vmem:[#allocation8 + $0x68] sm:$0xff]
    %v704 = vld [vmem:[#allocation8 + $0x70] sm:$0xff]
    %v705 = vld [vmem:[#allocation8 + $0x78] sm:$0xff]
    %v706 = vld [vmem:[#allocation8 + $0x80] sm:$0xff]
    %v707 = vld [vmem:[#allocation8 + $0x88] sm:$0xff]
    %v708 = vld [vmem:[#allocation8 + $0x90] sm:$0xff]
    %v709 = vld [vmem:[#allocation8 + $0x98] sm:$0xff]
    %v710 = vld [vmem:[#allocation8 + $0xa0] sm:$0xff]
    %v711 = vld [vmem:[#allocation8 + $0xa8] sm:$0xff]
    %v712 = vld [vmem:[#allocation8 + $0xb0] sm:$0xff]
    %v713 = vld [vmem:[#allocation8 + $0xb8] sm:$0xff]
    %v714 = vld [vmem:[#allocation8 + $0xc0] sm:$0xff]
    %v715 = vld [vmem:[#allocation8 + $0xc8] sm:$0xff]
    %v716 = vld [vmem:[#allocation8 + $0xd0] sm:$0xff]
    %v717 = vld [vmem:[#allocation8 + $0xd8] sm:$0xff]
    %v718 = vld [vmem:[#allocation8 + $0xe0] sm:$0xff]
    %v719 = vld [vmem:[#allocation8 + $0xe8] sm:$0xff]
    %v720 = vld [vmem:[#allocation8 + $0xf0] sm:$0xff]
    %v721 = vld [vmem:[#allocation8 + $0xf8] sm:$0xff]
    %v722 = vld [vmem:[#allocation8 + $0x100] sm:$0xff]
    %v723 = vld [vmem:[#allocation8 + $0x108] sm:$0xff]
    %v724 = vld [vmem:[#allocation8 + $0x110] sm:$0xff]
    %v725 = vld [vmem:[#allocation8 + $0x118] sm:$0xff]
    %v726 = vld [vmem:[#allocation8 + $0x120] sm:$0xff]
    %v727 = vld [vmem:[#allocation8 + $0x128] sm:$0xff]
    %v728 = vld [vmem:[#allocation8 + $0x130] sm:$0xff]
    %v729 = vld [vmem:[#allocation8 + $0x138] sm:$0xff]
    %v730 = vld [vmem:[#allocation8 + $0x140] sm:$0xff]
    %v731 = vld [vmem:[#allocation8 + $0x148] sm:$0xff]
    %v732 = vld [vmem:[#allocation8 + $0x150] sm:$0xff]
    %v733 = vld [vmem:[#allocation8 + $0x158] sm:$0xff]
    %v734 = vld [vmem:[#allocation8 + $0x160] sm:$0xff]
    %v735 = vld [vmem:[#allocation8 + $0x168] sm:$0xff]
    %v736 = vld [vmem:[#allocation8 + $0x170] sm:$0xff]
    %v737 = vld [vmem:[#allocation8 + $0x178] sm:$0xff]
    %v738 = vld [vmem:[#allocation8 + $0x180] sm:$0xff]
    %v739 = vld [vmem:[#allocation8 + $0x188] sm:$0xff]
    %v740 = vld [vmem:[#allocation8 + $0x190] sm:$0xff]
    %v741 = vld [vmem:[#allocation8 + $0x198] sm:$0xff]
    %v742 = vld [vmem:[#allocation8 + $0x1a0] sm:$0xff]
    %v743 = vld [vmem:[#allocation8 + $0x1a8] sm:$0xff]
    %v744 = vld [vmem:[#allocation8 + $0x1b0] sm:$0xff]
    %v745 = vld [vmem:[#allocation8 + $0x1b8] sm:$0xff]
    %v746 = vld [vmem:[#allocation8 + $0x1c0] sm:$0xff]
    %v747 = vld [vmem:[#allocation8 + $0x1c8] sm:$0xff]
    %v748 = vld [vmem:[#allocation8 + $0x1d0] sm:$0xff]
    %v749 = vld [vmem:[#allocation8 + $0x1d8] sm:$0xff]
    %v750 = vld [vmem:[#allocation8 + $0x1e0] sm:$0xff]
    %v751 = vld [vmem:[#allocation8 + $0x1e8] sm:$0xff]
    %v752 = vld [vmem:[#allocation8 + $0x1f0] sm:$0xff]
    %v753 = vld [vmem:[#allocation8 + $0x1f8] sm:$0xff]
    %v754 = vld [vmem:[#allocation8 + $0x200] sm:$0xff]
    %v755 = vld [vmem:[#allocation8 + $0x208] sm:$0xff]
    %v756 = vld [vmem:[#allocation8 + $0x210] sm:$0xff]
    %v757 = vld [vmem:[#allocation8 + $0x218] sm:$0xff]
    %v758 = vld [vmem:[#allocation8 + $0x220] sm:$0xff]
    %v759 = vld [vmem:[#allocation8 + $0x228] sm:$0xff]
    %v760 = vld [vmem:[#allocation8 + $0x230] sm:$0xff]
    %v761 = vld [vmem:[#allocation8 + $0x238] sm:$0xff]
    %v762 = vld [vmem:[#allocation8 + $0x240] sm:$0xff]
    %v763 = vld [vmem:[#allocation8 + $0x248] sm:$0xff]
    %v764 = vld [vmem:[#allocation8 + $0x250] sm:$0xff]
    %v765 = vld [vmem:[#allocation8 + $0x258] sm:$0xff]
    %v766 = vld [vmem:[#allocation8 + $0x260] sm:$0xff]
    %v767 = vld [vmem:[#allocation8 + $0x268] sm:$0xff]
    %v768 = vld [vmem:[#allocation8 + $0x270] sm:$0xff]
    %v769 = vld [vmem:[#allocation8 + $0x278] sm:$0xff]
    %v770 = vld [vmem:[#allocation8 + $0x280] sm:$0xff]
    %v771 = vld [vmem:[#allocation8 + $0x288] sm:$0xff]
    %v772 = vld [vmem:[#allocation8 + $0x290] sm:$0xff]
    %v773 = vld [vmem:[#allocation8 + $0x298] sm:$0xff]
    %v774 = vld [vmem:[#allocation8 + $0x2a0] sm:$0xff]
    %v775 = vld [vmem:[#allocation8 + $0x2a8] sm:$0xff]
    %v776 = vld [vmem:[#allocation8 + $0x2b0] sm:$0xff]
    %v777 = vld [vmem:[#allocation8 + $0x2b8] sm:$0xff]
    %v778 = vld [vmem:[#allocation8 + $0x2c0] sm:$0xff]
    %v779 = vld [vmem:[#allocation8 + $0x2c8] sm:$0xff]
    %v780 = vld [vmem:[#allocation8 + $0x2d0] sm:$0xff]
    %v781 = vld [vmem:[#allocation8 + $0x2d8] sm:$0xff]
    %v782 = vld [vmem:[#allocation8 + $0x2e0] sm:$0xff]
    %v783 = vld [vmem:[#allocation8 + $0x2e8] sm:$0xff]
    %v784 = vld [vmem:[#allocation8 + $0x2f0] sm:$0xff]
    %v785 = vld [vmem:[#allocation8 + $0x2f8] sm:$0xff]
    %v786 = vld [vmem:[#allocation8 + $0x300] sm:$0xff]
    %v787 = vld [vmem:[#allocation8 + $0x308] sm:$0xff]
    %v788 = vld [vmem:[#allocation8 + $0x310] sm:$0xff]
    %v789 = vld [vmem:[#allocation8 + $0x318] sm:$0xff]
    %v790 = vld [vmem:[#allocation8 + $0x320] sm:$0xff]
    %v791 = vld [vmem:[#allocation8 + $0x328] sm:$0xff]
    %v792 = vld [vmem:[#allocation8 + $0x330] sm:$0xff]
    %v793 = vld [vmem:[#allocation8 + $0x338] sm:$0xff]
    %v794 = vld [vmem:[#allocation8 + $0x340] sm:$0xff]
    %v795 = vld [vmem:[#allocation8 + $0x348] sm:$0xff]
    %v796 = vld [vmem:[#allocation8 + $0x350] sm:$0xff]
    %v797 = vld [vmem:[#allocation8 + $0x358] sm:$0xff]
    %v798 = vld [vmem:[#allocation8 + $0x360] sm:$0xff]
    %v799 = vld [vmem:[#allocation8 + $0x368] sm:$0xff]
    %v800 = vld [vmem:[#allocation8 + $0x370] sm:$0xff]
    %v801 = vld [vmem:[#allocation8 + $0x378] sm:$0xff]
    %v802 = vld [vmem:[#allocation8 + $0x380] sm:$0xff]
    %v803 = vld [vmem:[#allocation8 + $0x388] sm:$0xff]
    %v804 = vld [vmem:[#allocation8 + $0x390] sm:$0xff]
    %v805 = vld [vmem:[#allocation8 + $0x398] sm:$0xff]
    %v806 = vld [vmem:[#allocation8 + $0x3a0] sm:$0xff]
    %v807 = vld [vmem:[#allocation8 + $0x3a8] sm:$0xff]
    %v808 = vld [vmem:[#allocation8 + $0x3b0] sm:$0xff]
    %v809 = vld [vmem:[#allocation8 + $0x3b8] sm:$0xff]
    %v810 = vld [vmem:[#allocation8 + $0x3c0] sm:$0xff]
    %v811 = vld [vmem:[#allocation8 + $0x3c8] sm:$0xff]
    %v812 = vld [vmem:[#allocation8 + $0x3d0] sm:$0xff]
    %v813 = vld [vmem:[#allocation8 + $0x3d8] sm:$0xff]
    %v814 = vld [vmem:[#allocation8 + $0x3e0] sm:$0xff]
    %v815 = vld [vmem:[#allocation8 + $0x3e8] sm:$0xff]
    %v816 = vld [vmem:[#allocation8 + $0x3f0] sm:$0xff]
    %v817 = vld [vmem:[#allocation8 + $0x3f8] sm:$0xff]
    %v818 = vld [vmem:[#allocation8 + $0x400] sm:$0xff]
    %v819 = vld [vmem:[#allocation8 + $0x408] sm:$0xff]
    %v820 = vld [vmem:[#allocation8 + $0x410] sm:$0xff]
    %v821 = vld [vmem:[#allocation8 + $0x418] sm:$0xff]
    %v822 = vld [vmem:[#allocation8 + $0x420] sm:$0xff]
    %v823 = vld [vmem:[#allocation8 + $0x428] sm:$0xff]
    %v824 = vld [vmem:[#allocation8 + $0x430] sm:$0xff]
    %v825 = vld [vmem:[#allocation8 + $0x438] sm:$0xff]
    %v826 = vld [vmem:[#allocation8 + $0x440] sm:$0xff]
    %v827 = vld [vmem:[#allocation8 + $0x448] sm:$0xff]
    %v828 = vld [vmem:[#allocation8 + $0x450] sm:$0xff]
    %v829 = vld [vmem:[#allocation8 + $0x458] sm:$0xff]
    %v830 = vld [vmem:[#allocation8 + $0x460] sm:$0xff]
    %v831 = vld [vmem:[#allocation8 + $0x468] sm:$0xff]
    %v832 = vld [vmem:[#allocation8 + $0x470] sm:$0xff]
    %v833 = vld [vmem:[#allocation8 + $0x478] sm:$0xff]
    %v834 = vld [vmem:[#allocation8 + $0x480] sm:$0xff]
    %v835 = vld [vmem:[#allocation8 + $0x488] sm:$0xff]
    %v836 = vld [vmem:[#allocation8 + $0x490] sm:$0xff]
    %v837 = vld [vmem:[#allocation8 + $0x498] sm:$0xff]
    %v838 = vld [vmem:[#allocation8 + $0x4a0] sm:$0xff]
    %v839 = vld [vmem:[#allocation8 + $0x4a8] sm:$0xff]
    %v840 = vld [vmem:[#allocation8 + $0x4b0] sm:$0xff]
    %v841 = vld [vmem:[#allocation8 + $0x4b8] sm:$0xff]
    %v842 = vld [vmem:[#allocation8 + $0x4c0] sm:$0xff]
    %v843 = vld [vmem:[#allocation8 + $0x4c8] sm:$0xff]
    %v844 = vld [vmem:[#allocation8 + $0x4d0] sm:$0xff]
    %v845 = vld [vmem:[#allocation8 + $0x4d8] sm:$0xff]
    %v846 = vld [vmem:[#allocation8 + $0x4e0] sm:$0xff]
    %v847 = vld [vmem:[#allocation8 + $0x4e8] sm:$0xff]
    %v848 = vld [vmem:[#allocation8 + $0x4f0] sm:$0xff]
    %v849 = vld [vmem:[#allocation8 + $0x4f8] sm:$0xff]
    %v850 = vld [vmem:[#allocation8 + $0x500] sm:$0xff]
    %v851 = vld [vmem:[#allocation8 + $0x508] sm:$0xff]
    %v852 = vld [vmem:[#allocation8 + $0x510] sm:$0xff]
    %v853 = vld [vmem:[#allocation8 + $0x518] sm:$0xff]
    %v854 = vld [vmem:[#allocation8 + $0x520] sm:$0xff]
    %v855 = vld [vmem:[#allocation8 + $0x528] sm:$0xff]
    %v856 = vld [vmem:[#allocation8 + $0x530] sm:$0xff]
    %v857 = vld [vmem:[#allocation8 + $0x538] sm:$0xff]
    %v858 = vld [vmem:[#allocation8 + $0x540] sm:$0xff]
    %v859 = vld [vmem:[#allocation8 + $0x548] sm:$0xff]
    %v860 = vld [vmem:[#allocation8 + $0x550] sm:$0xff]
    %v861 = vld [vmem:[#allocation8 + $0x558] sm:$0xff]
    %v862 = vld [vmem:[#allocation8 + $0x560] sm:$0xff]
    %v863 = vld [vmem:[#allocation8 + $0x568] sm:$0xff]
    %v864 = vld [vmem:[#allocation8 + $0x570] sm:$0xff]
    %v865 = vld [vmem:[#allocation8 + $0x578] sm:$0xff]
    %v866 = vld [vmem:[#allocation8 + $0x580] sm:$0xff]
    %v867 = vld [vmem:[#allocation8 + $0x588] sm:$0xff]
    %v868 = vld [vmem:[#allocation8 + $0x590] sm:$0xff]
    %v869 = vld [vmem:[#allocation8 + $0x598] sm:$0xff]
    %v870 = vld [vmem:[#allocation8 + $0x5a0] sm:$0xff]
    %v871 = vld [vmem:[#allocation8 + $0x5a8] sm:$0xff]
    %v872 = vld [vmem:[#allocation8 + $0x5b0] sm:$0xff]
    %v873 = vld [vmem:[#allocation8 + $0x5b8] sm:$0xff]
    %v874 = vld [vmem:[#allocation8 + $0x5c0] sm:$0xff]
    %v875 = vld [vmem:[#allocation8 + $0x5c8] sm:$0xff]
    %v876 = vld [vmem:[#allocation8 + $0x5d0] sm:$0xff]
    %v877 = vld [vmem:[#allocation8 + $0x5d8] sm:$0xff]
    %v878 = vld [vmem:[#allocation8 + $0x5e0] sm:$0xff]
    %v879 = vld [vmem:[#allocation8 + $0x5e8] sm:$0xff]
    %v880 = vld [vmem:[#allocation8 + $0x5f0] sm:$0xff]
    %v881 = vld [vmem:[#allocation8 + $0x5f8] sm:$0xff]
    %882 = vmatprep.subr.mxu0 %v691
    %883 = vmatpush1.msra.mxu0 %v690
    %884 = vmatprep.subr.mxu0 %v697
    %885 = vmatpush1.msra.mxu0 %v696
    %886 = vmatprep.subr.mxu0 %v703
    %887 = vmatpush1.msra.mxu0 %v702
    %888 = vmatprep.subr.mxu0 %v709
    %889 = vmatpush1.msra.mxu0 %v708
    %890 = vmatprep.subr.mxu0 %v715
    %891 = vmatpush1.msra.mxu0 %v714
    %892 = vmatprep.subr.mxu0 %v721
    %893 = vmatpush1.msra.mxu0 %v720
    %894 = vmatprep.subr.mxu0 %v727
    %895 = vmatpush1.msra.mxu0 %v726
    %896 = vmatprep.subr.mxu0 %v733
    %897 = vmatpush1.msra.mxu0 %v732
    %898 = vmatprep.subr.mxu0 %v739
    %899 = vmatpush1.msra.mxu0 %v738
    %900 = vmatprep.subr.mxu0 %v745
    %901 = vmatpush1.msra.mxu0 %v744
    %902 = vmatprep.subr.mxu0 %v751
    %903 = vmatpush1.msra.mxu0 %v750
    %904 = vmatprep.subr.mxu0 %v757
    %905 = vmatpush1.msra.mxu0 %v756
    %906 = vmatprep.subr.mxu0 %v763
    %907 = vmatpush1.msra.mxu0 %v762
    %908 = vmatprep.subr.mxu0 %v769
    %909 = vmatpush1.msra.mxu0 %v768
    %910 = vmatprep.subr.mxu0 %v775
    %911 = vmatpush1.msra.mxu0 %v774
    %912 = vmatprep.subr.mxu0 %v781
    %913 = vmatpush1.msra.mxu0 %v780
    %914 = vmatprep.subr.mxu0 %v787
    %915 = vmatpush1.msra.mxu0 %v786
    %916 = vmatprep.subr.mxu0 %v793
    %917 = vmatpush1.msra.mxu0 %v792
    %918 = vmatprep.subr.mxu0 %v799
    %919 = vmatpush1.msra.mxu0 %v798
    %920 = vmatprep.subr.mxu0 %v805
    %921 = vmatpush1.msra.mxu0 %v804
    %922 = vmatprep.subr.mxu0 %v811
    %923 = vmatpush1.msra.mxu0 %v810
    %924 = vmatprep.subr.mxu0 %v817
    %925 = vmatpush1.msra.mxu0 %v816
    %926 = vmatprep.subr.mxu0 %v823
    %927 = vmatpush1.msra.mxu0 %v822
    %928 = vmatprep.subr.mxu0 %v829
    %929 = vmatpush1.msra.mxu0 %v828
    %930 = vmatprep.subr.mxu0 %v835
    %931 = vmatpush1.msra.mxu0 %v834
    %932 = vmatprep.subr.mxu0 %v841
    %933 = vmatpush1.msra.mxu0 %v840
    %934 = vmatprep.subr.mxu0 %v847
    %935 = vmatpush1.msra.mxu0 %v846
    %936 = vmatprep.subr.mxu0 %v853
    %937 = vmatpush1.msra.mxu0 %v852
    %938 = vmatprep.subr.mxu0 %v859
    %939 = vmatpush1.msra.mxu0 %v858
    %940 = vmatprep.subr.mxu0 %v865
    %941 = vmatpush1.msra.mxu0 %v864
    %942 = vmatprep.subr.mxu0 %v871
    %943 = vmatpush1.msra.mxu0 %v870
    %944 = vmatprep.subr.mxu0 %v877
    %945 = vmatpush1.msra.mxu0 %v876
    %946 = vmatprep.mubr.f32.mxu0 0.0
    %947 = vmatmul.mubr.f32.gmra.mrb[0].mxu0 0.0
    %v948 = vpop.f32.mrb[0].mxu0
    %v949 = vadd.f32 0.0, %v948
    %v950 = vpop.f32.mrb[0].mxu0
    %v951 = vadd.f32 0.0, %v950
    %952 = vdwg.mxu0
    %953 = vmatprep.subr.mxu0 %v693
    %954 = vmatpush1.msra.mxu0 %v692
    %955 = vmatprep.subr.mxu0 %v699
    %956 = vmatpush1.msra.mxu0 %v698
    %957 = vmatprep.subr.mxu0 %v705
    %958 = vmatpush1.msra.mxu0 %v704
    %959 = vmatprep.subr.mxu0 %v711
    %960 = vmatpush1.msra.mxu0 %v710
    %961 = vmatprep.subr.mxu0 %v717
    %962 = vmatpush1.msra.mxu0 %v716
    %963 = vmatprep.subr.mxu0 %v723
    %964 = vmatpush1.msra.mxu0 %v722
    %965 = vmatprep.subr.mxu0 %v729
    %966 = vmatpush1.msra.mxu0 %v728
    %967 = vmatprep.subr.mxu0 %v735
    %968 = vmatpush1.msra.mxu0 %v734
    %969 = vmatprep.subr.mxu0 %v741
    %970 = vmatpush1.msra.mxu0 %v740
    %971 = vmatprep.subr.mxu0 %v747
    %972 = vmatpush1.msra.mxu0 %v746
    %973 = vmatprep.subr.mxu0 %v753
    %974 = vmatpush1.msra.mxu0 %v752
    %975 = vmatprep.subr.mxu0 %v759
    %976 = vmatpush1.msra.mxu0 %v758
    %977 = vmatprep.subr.mxu0 %v765
    %978 = vmatpush1.msra.mxu0 %v764
    %979 = vmatprep.subr.mxu0 %v771
    %980 = vmatpush1.msra.mxu0 %v770
    %981 = vmatprep.subr.mxu0 %v777
    %982 = vmatpush1.msra.mxu0 %v776
    %983 = vmatprep.subr.mxu0 %v783
    %984 = vmatpush1.msra.mxu0 %v782
    %985 = vmatprep.subr.mxu0 %v789
    %986 = vmatpush1.msra.mxu0 %v788
    %987 = vmatprep.subr.mxu0 %v795
    %988 = vmatpush1.msra.mxu0 %v794
    %989 = vmatprep.subr.mxu0 %v801
    %990 = vmatpush1.msra.mxu0 %v800
    %991 = vmatprep.subr.mxu0 %v807
    %992 = vmatpush1.msra.mxu0 %v806
    %993 = vmatprep.subr.mxu0 %v813
    %994 = vmatpush1.msra.mxu0 %v812
    %995 = vmatprep.subr.mxu0 %v819
    %996 = vmatpush1.msra.mxu0 %v818
    %997 = vmatprep.subr.mxu0 %v825
    %998 = vmatpush1.msra.mxu0 %v824
    %999 = vmatprep.subr.mxu0 %v831
    %1000 = vmatpush1.msra.mxu0 %v830
    %1001 = vmatprep.subr.mxu0 %v837
    %1002 = vmatpush1.msra.mxu0 %v836
    %1003 = vmatprep.subr.mxu0 %v843
    %1004 = vmatpush1.msra.mxu0 %v842
    %1005 = vmatprep.subr.mxu0 %v849
    %1006 = vmatpush1.msra.mxu0 %v848
    %1007 = vmatprep.subr.mxu0 %v855
    %1008 = vmatpush1.msra.mxu0 %v854
    %1009 = vmatprep.subr.mxu0 %v861
    %1010 = vmatpush1.msra.mxu0 %v860
    %1011 = vmatprep.subr.mxu0 %v867
    %1012 = vmatpush1.msra.mxu0 %v866
    %1013 = vmatprep.subr.mxu0 %v873
    %1014 = vmatpush1.msra.mxu0 %v872
    %1015 = vmatprep.subr.mxu0 %v879
    %1016 = vmatpush1.msra.mxu0 %v878
    %1017 = vmatprep.mubr.f32.mxu0 0.0
    %1018 = vmatmul.mubr.f32.gmra.mrb[0].mxu0 0.0
    %v1019 = vpop.f32.mrb[0].mxu0
    %v1020 = vadd.f32 0.0, %v1019
    %v1021 = vpop.f32.mrb[0].mxu0
    %v1022 = vadd.f32 0.0, %v1021
    %1023 = vdwg.mxu0
    %1024 = vmatprep.subr.mxu0 %v695
    %1025 = vmatpush1.msra.mxu0 %v694
    %1026 = vmatprep.subr.mxu0 %v701
    %1027 = vmatpush1.msra.mxu0 %v700
    %1028 = vmatprep.subr.mxu0 %v707
    %1029 = vmatpush1.msra.mxu0 %v706
    %1030 = vmatprep.subr.mxu0 %v713
    %1031 = vmatpush1.msra.mxu0 %v712
    %1032 = vmatprep.subr.mxu0 %v719
    %1033 = vmatpush1.msra.mxu0 %v718
    %1034 = vmatprep.subr.mxu0 %v725
    %1035 = vmatpush1.msra.mxu0 %v724
    %1036 = vmatprep.subr.mxu0 %v731
    %1037 = vmatpush1.msra.mxu0 %v730
    %1038 = vmatprep.subr.mxu0 %v737
    %1039 = vmatpush1.msra.mxu0 %v736
    %1040 = vmatprep.subr.mxu0 %v743
    %1041 = vmatpush1.msra.mxu0 %v742
    %1042 = vmatprep.subr.mxu0 %v749
    %1043 = vmatpush1.msra.mxu0 %v748
    %1044 = vmatprep.subr.mxu0 %v755
    %1045 = vmatpush1.msra.mxu0 %v754
    %1046 = vmatprep.subr.mxu0 %v761
    %1047 = vmatpush1.msra.mxu0 %v760
    %1048 = vmatprep.subr.mxu0 %v767
    %1049 = vmatpush1.msra.mxu0 %v766
    %1050 = vmatprep.subr.mxu0 %v773
    %1051 = vmatpush1.msra.mxu0 %v772
    %1052 = vmatprep.subr.mxu0 %v779
    %1053 = vmatpush1.msra.mxu0 %v778
    %1054 = vmatprep.subr.mxu0 %v785
    %1055 = vmatpush1.msra.mxu0 %v784
    %1056 = vmatprep.subr.mxu0 %v791
    %1057 = vmatpush1.msra.mxu0 %v790
    %1058 = vmatprep.subr.mxu0 %v797
    %1059 = vmatpush1.msra.mxu0 %v796
    %1060 = vmatprep.subr.mxu0 %v803
    %1061 = vmatpush1.msra.mxu0 %v802
    %1062 = vmatprep.subr.mxu0 %v809
    %1063 = vmatpush1.msra.mxu0 %v808
    %1064 = vmatprep.subr.mxu0 %v815
    %1065 = vmatpush1.msra.mxu0 %v814
    %1066 = vmatprep.subr.mxu0 %v821
    %1067 = vmatpush1.msra.mxu0 %v820
    %1068 = vmatprep.subr.mxu0 %v827
    %1069 = vmatpush1.msra.mxu0 %v826
    %1070 = vmatprep.subr.mxu0 %v833
    %1071 = vmatpush1.msra.mxu0 %v832
    %1072 = vmatprep.subr.mxu0 %v839
    %1073 = vmatpush1.msra.mxu0 %v838
    %1074 = vmatprep.subr.mxu0 %v845
    %1075 = vmatpush1.msra.mxu0 %v844
    %1076 = vmatprep.subr.mxu0 %v851
    %1077 = vmatpush1.msra.mxu0 %v850
    %1078 = vmatprep.subr.mxu0 %v857
    %1079 = vmatpush1.msra.mxu0 %v856
    %1080 = vmatprep.subr.mxu0 %v863
    %1081 = vmatpush1.msra.mxu0 %v862
    %1082 = vmatprep.subr.mxu0 %v869
    %1083 = vmatpush1.msra.mxu0 %v868
    %1084 = vmatprep.subr.mxu0 %v875
    %1085 = vmatpush1.msra.mxu0 %v874
    %1086 = vmatprep.subr.mxu0 %v881
    %1087 = vmatpush1.msra.mxu0 %v880
    %1088 = vmatprep.mubr.f32.mxu0 0.0
    %1089 = vmatmul.mubr.f32.gmra.mrb[0].mxu0 0.0
    %v1090 = vpop.f32.mrb[0].mxu0
    %v1091 = vadd.f32 0.0, %v1090
    %v1092 = vpop.f32.mrb[0].mxu0
    %v1093 = vadd.f32 0.0, %v1092
    %1094 = vdwg.mxu0
    %v1095 = vadd.f32 %v684, %v949
    %v1096 = vadd.f32 %v685, %v951
    %v1097 = vxor.u32 %v1095, 2147483648
    %v1098 = vxor.u32 %v1096, 2147483648
    %v1099 = vmul.f32 %v1097, 1.442695
    %v1100 = vpow.pop %v1099
    %v1101 = vmul.f32 %v1098, 1.442695
    %v1102 = vpow.pop %v1101
    %v1103 = vadd.f32 %v1100, 1.0
    %v1104 = vadd.f32 %v1102, 1.0
    %v1105 = vrcp.pop %v1103
    %v1106 = vmul.f32 1.0, %v1105
    %v1107 = vrcp.pop %v1104
    %v1108 = vmul.f32 1.0, %v1107
    %v1109 = vadd.f32 %v686, %v1020
    %v1110 = vadd.f32 %v687, %v1022
    %v1111 = vxor.u32 %v1109, 2147483648
    %v1112 = vxor.u32 %v1110, 2147483648
    %v1113 = vmul.f32 %v1111, 1.442695
    %v1114 = vpow.pop %v1113
    %v1115 = vmul.f32 %v1112, 1.442695
    %v1116 = vpow.pop %v1115
    %v1117 = vadd.f32 %v1114, 1.0
    %v1118 = vadd.f32 %v1116, 1.0
    %v1119 = vrcp.pop %v1117
    %v1120 = vmul.f32 1.0, %v1119
    %v1121 = vrcp.pop %v1118
    %v1122 = vmul.f32 1.0, %v1121
    %v1123 = vadd.f32 %v1091, %v674
    %v1124 = vadd.f32 %v1093, %v678
    %v1125 = vmul.f32 %v1106, %v1123
    %v1126 = vmul.f32 %v1108, %v1124
    %v1127 = vadd.f32 %v688, %v1125
    %v1128 = vadd.f32 %v689, %v1126
    %v1129 = vtanh.pop %v1127
    %v1130 = vtanh.pop %v1128
    %v1131 = vsub.f32 1.0, %v1120
    %v1132 = vsub.f32 1.0, %v1122
    %v1133 = vmul.f32 %v1131, %v1129
    %v1134 = vmul.f32 %v1132, %v1130
    %v1135 = vmul.f32 %v1120, 0.0
    %v1136 = vmul.f32 %v1122, 0.0
    %v1137 = vadd.f32 %v1133, %v1135
    %v1138 = vadd.f32 %v1134, %v1136
    %s1139 = smul.u32 1, 6
    %s1140 = smul.addr %s1139, 8
    %s1141 = scalar_lea.vmem [#allocation2], %s1140
    %v1142 = vld [vmem:[%s1141] sm:$0xff]
    %v1143 = vld [vmem:[%s1141 + $0x8] sm:$0xff]
    %v1144 = vld [vmem:[%s1141 + $0x10] sm:$0xff]
    %v1145 = vld [vmem:[%s1141 + $0x18] sm:$0xff]
    %v1146 = vld [vmem:[%s1141 + $0x20] sm:$0xff]
    %v1147 = vld [vmem:[%s1141 + $0x28] sm:$0xff]
    %1148 = vmatprep.subr.mxu0 %v691
    %1149 = vmatpush1.msra.mxu0 %v690
    %1150 = vmatprep.subr.mxu0 %v697
    %1151 = vmatpush1.msra.mxu0 %v696
    %1152 = vmatprep.subr.mxu0 %v703
    %1153 = vmatpush1.msra.mxu0 %v702
    %1154 = vmatprep.subr.mxu0 %v709
    %1155 = vmatpush1.msra.mxu0 %v708
    %1156 = vmatprep.subr.mxu0 %v715
    %1157 = vmatpush1.msra.mxu0 %v714
    %1158 = vmatprep.subr.mxu0 %v721
    %1159 = vmatpush1.msra.mxu0 %v720
    %1160 = vmatprep.subr.mxu0 %v727
    %1161 = vmatpush1.msra.mxu0 %v726
    %1162 = vmatprep.subr.mxu0 %v733
    %1163 = vmatpush1.msra.mxu0 %v732
    %1164 = vmatprep.subr.mxu0 %v739
    %1165 = vmatpush1.msra.mxu0 %v738
    %1166 = vmatprep.subr.mxu0 %v745
    %1167 = vmatpush1.msra.mxu0 %v744
    %1168 = vmatprep.subr.mxu0 %v751
    %1169 = vmatpush1.msra.mxu0 %v750
    %1170 = vmatprep.subr.mxu0 %v757
    %1171 = vmatpush1.msra.mxu0 %v756
    %1172 = vmatprep.subr.mxu0 %v763
    %1173 = vmatpush1.msra.mxu0 %v762
    %1174 = vmatprep.subr.mxu0 %v769
    %1175 = vmatpush1.msra.mxu0 %v768
    %1176 = vmatprep.subr.mxu0 %v775
    %1177 = vmatpush1.msra.mxu0 %v774
    %1178 = vmatprep.subr.mxu0 %v781
    %1179 = vmatpush1.msra.mxu0 %v780
    %1180 = vmatprep.subr.mxu0 %v787
    %1181 = vmatpush1.msra.mxu0 %v786
    %1182 = vmatprep.subr.mxu0 %v793
    %1183 = vmatpush1.msra.mxu0 %v792
    %1184 = vmatprep.subr.mxu0 %v799
    %1185 = vmatpush1.msra.mxu0 %v798
    %1186 = vmatprep.subr.mxu0 %v805
    %1187 = vmatpush1.msra.mxu0 %v804
    %1188 = vmatprep.subr.mxu0 %v811
    %1189 = vmatpush1.msra.mxu0 %v810
    %1190 = vmatprep.subr.mxu0 %v817
    %1191 = vmatpush1.msra.mxu0 %v816
    %1192 = vmatprep.subr.mxu0 %v823
    %1193 = vmatpush1.msra.mxu0 %v822
    %1194 = vmatprep.subr.mxu0 %v829
    %1195 = vmatpush1.msra.mxu0 %v828
    %1196 = vmatprep.subr.mxu0 %v835
    %1197 = vmatpush1.msra.mxu0 %v834
    %1198 = vmatprep.subr.mxu0 %v841
    %1199 = vmatpush1.msra.mxu0 %v840
    %1200 = vmatprep.subr.mxu0 %v847
    %1201 = vmatpush1.msra.mxu0 %v846
    %1202 = vmatprep.subr.mxu0 %v853
    %1203 = vmatpush1.msra.mxu0 %v852
    %1204 = vmatprep.subr.mxu0 %v859
    %1205 = vmatpush1.msra.mxu0 %v858
    %1206 = vmatprep.subr.mxu0 %v865
    %1207 = vmatpush1.msra.mxu0 %v864
    %1208 = vmatprep.subr.mxu0 %v871
    %1209 = vmatpush1.msra.mxu0 %v870
    %1210 = vmatprep.subr.mxu0 %v877
    %1211 = vmatpush1.msra.mxu0 %v876
    %1212 = vmatprep.mubr.f32.mxu0 %v1138
    %1213 = vmatmul.mubr.f32.gmra.mrb[0].mxu0 %v1137
    %v1214 = vpop.f32.mrb[0].mxu0
    %v1215 = vadd.f32 0.0, %v1214
    %v1216 = vpop.f32.mrb[0].mxu0
    %v1217 = vadd.f32 0.0, %v1216
    %1218 = vdwg.mxu0
    %1219 = vmatprep.subr.mxu0 %v693
    %1220 = vmatpush1.msra.mxu0 %v692
    %1221 = vmatprep.subr.mxu0 %v699
    %1222 = vmatpush1.msra.mxu0 %v698
    %1223 = vmatprep.subr.mxu0 %v705
    %1224 = vmatpush1.msra.mxu0 %v704
    %1225 = vmatprep.subr.mxu0 %v711
    %1226 = vmatpush1.msra.mxu0 %v710
    %1227 = vmatprep.subr.mxu0 %v717
    %1228 = vmatpush1.msra.mxu0 %v716
    %1229 = vmatprep.subr.mxu0 %v723
    %1230 = vmatpush1.msra.mxu0 %v722
    %1231 = vmatprep.subr.mxu0 %v729
    %1232 = vmatpush1.msra.mxu0 %v728
    %1233 = vmatprep.subr.mxu0 %v735
    %1234 = vmatpush1.msra.mxu0 %v734
    %1235 = vmatprep.subr.mxu0 %v741
    %1236 = vmatpush1.msra.mxu0 %v740
    %1237 = vmatprep.subr.mxu0 %v747
    %1238 = vmatpush1.msra.mxu0 %v746
    %1239 = vmatprep.subr.mxu0 %v753
    %1240 = vmatpush1.msra.mxu0 %v752
    %1241 = vmatprep.subr.mxu0 %v759
    %1242 = vmatpush1.msra.mxu0 %v758
    %1243 = vmatprep.subr.mxu0 %v765
    %1244 = vmatpush1.msra.mxu0 %v764
    %1245 = vmatprep.subr.mxu0 %v771
    %1246 = vmatpush1.msra.mxu0 %v770
    %1247 = vmatprep.subr.mxu0 %v777
    %1248 = vmatpush1.msra.mxu0 %v776
    %1249 = vmatprep.subr.mxu0 %v783
    %1250 = vmatpush1.msra.mxu0 %v782
    %1251 = vmatprep.subr.mxu0 %v789
    %1252 = vmatpush1.msra.mxu0 %v788
    %1253 = vmatprep.subr.mxu0 %v795
    %1254 = vmatpush1.msra.mxu0 %v794
    %1255 = vmatprep.subr.mxu0 %v801
    %1256 = vmatpush1.msra.mxu0 %v800
    %1257 = vmatprep.subr.mxu0 %v807
    %1258 = vmatpush1.msra.mxu0 %v806
    %1259 = vmatprep.subr.mxu0 %v813
    %1260 = vmatpush1.msra.mxu0 %v812
    %1261 = vmatprep.subr.mxu0 %v819
    %1262 = vmatpush1.msra.mxu0 %v818
    %1263 = vmatprep.subr.mxu0 %v825
    %1264 = vmatpush1.msra.mxu0 %v824
    %1265 = vmatprep.subr.mxu0 %v831
    %1266 = vmatpush1.msra.mxu0 %v830
    %1267 = vmatprep.subr.mxu0 %v837
    %1268 = vmatpush1.msra.mxu0 %v836
    %1269 = vmatprep.subr.mxu0 %v843
    %1270 = vmatpush1.msra.mxu0 %v842
    %1271 = vmatprep.subr.mxu0 %v849
    %1272 = vmatpush1.msra.mxu0 %v848
    %1273 = vmatprep.subr.mxu0 %v855
    %1274 = vmatpush1.msra.mxu0 %v854
    %1275 = vmatprep.subr.mxu0 %v861
    %1276 = vmatpush1.msra.mxu0 %v860
    %1277 = vmatprep.subr.mxu0 %v867
    %1278 = vmatpush1.msra.mxu0 %v866
    %1279 = vmatprep.subr.mxu0 %v873
    %1280 = vmatpush1.msra.mxu0 %v872
    %1281 = vmatprep.subr.mxu0 %v879
    %1282 = vmatpush1.msra.mxu0 %v878
    %1283 = vmatprep.mubr.f32.mxu0 %v1138
    %1284 = vmatmul.mubr.f32.gmra.mrb[0].mxu0 %v1137
    %v1285 = vpop.f32.mrb[0].mxu0
    %v1286 = vadd.f32 0.0, %v1285
    %v1287 = vpop.f32.mrb[0].mxu0
    %v1288 = vadd.f32 0.0, %v1287
    %1289 = vdwg.mxu0
    %1290 = vmatprep.subr.mxu0 %v695
    %1291 = vmatpush1.msra.mxu0 %v694
    %1292 = vmatprep.subr.mxu0 %v701
    %1293 = vmatpush1.msra.mxu0 %v700
    %1294 = vmatprep.subr.mxu0 %v707
    %1295 = vmatpush1.msra.mxu0 %v706
    %1296 = vmatprep.subr.mxu0 %v713
    %1297 = vmatpush1.msra.mxu0 %v712
    %1298 = vmatprep.subr.mxu0 %v719
    %1299 = vmatpush1.msra.mxu0 %v718
    %1300 = vmatprep.subr.mxu0 %v725
    %1301 = vmatpush1.msra.mxu0 %v724
    %1302 = vmatprep.subr.mxu0 %v731
    %1303 = vmatpush1.msra.mxu0 %v730
    %1304 = vmatprep.subr.mxu0 %v737
    %1305 = vmatpush1.msra.mxu0 %v736
    %1306 = vmatprep.subr.mxu0 %v743
    %1307 = vmatpush1.msra.mxu0 %v742
    %1308 = vmatprep.subr.mxu0 %v749
    %1309 = vmatpush1.msra.mxu0 %v748
    %1310 = vmatprep.subr.mxu0 %v755
    %1311 = vmatpush1.msra.mxu0 %v754
    %1312 = vmatprep.subr.mxu0 %v761
    %1313 = vmatpush1.msra.mxu0 %v760
    %1314 = vmatprep.subr.mxu0 %v767
    %1315 = vmatpush1.msra.mxu0 %v766
    %1316 = vmatprep.subr.mxu0 %v773
    %1317 = vmatpush1.msra.mxu0 %v772
    %1318 = vmatprep.subr.mxu0 %v779
    %1319 = vmatpush1.msra.mxu0 %v778
    %1320 = vmatprep.subr.mxu0 %v785
    %1321 = vmatpush1.msra.mxu0 %v784
    %1322 = vmatprep.subr.mxu0 %v791
    %1323 = vmatpush1.msra.mxu0 %v790
    %1324 = vmatprep.subr.mxu0 %v797
    %1325 = vmatpush1.msra.mxu0 %v796
    %1326 = vmatprep.subr.mxu0 %v803
    %1327 = vmatpush1.msra.mxu0 %v802
    %1328 = vmatprep.subr.mxu0 %v809
    %1329 = vmatpush1.msra.mxu0 %v808
    %1330 = vmatprep.subr.mxu0 %v815
    %1331 = vmatpush1.msra.mxu0 %v814
    %1332 = vmatprep.subr.mxu0 %v821
    %1333 = vmatpush1.msra.mxu0 %v820
    %1334 = vmatprep.subr.mxu0 %v827
    %1335 = vmatpush1.msra.mxu0 %v826
    %1336 = vmatprep.subr.mxu0 %v833
    %1337 = vmatpush1.msra.mxu0 %v832
    %1338 = vmatprep.subr.mxu0 %v839
    %1339 = vmatpush1.msra.mxu0 %v838
    %1340 = vmatprep.subr.mxu0 %v845
    %1341 = vmatpush1.msra.mxu0 %v844
    %1342 = vmatprep.subr.mxu0 %v851
    %1343 = vmatpush1.msra.mxu0 %v850
    %1344 = vmatprep.subr.mxu0 %v857
    %1345 = vmatpush1.msra.mxu0 %v856
    %1346 = vmatprep.subr.mxu0 %v863
    %1347 = vmatpush1.msra.mxu0 %v862
    %1348 = vmatprep.subr.mxu0 %v869
    %1349 = vmatpush1.msra.mxu0 %v868
    %1350 = vmatprep.subr.mxu0 %v875
    %1351 = vmatpush1.msra.mxu0 %v874
    %1352 = vmatprep.subr.mxu0 %v881
    %1353 = vmatpush1.msra.mxu0 %v880
    %1354 = vmatprep.mubr.f32.mxu0 %v1138
    %1355 = vmatmul.mubr.f32.gmra.mrb[0].mxu0 %v1137
    %v1356 = vpop.f32.mrb[0].mxu0
    %v1357 = vadd.f32 0.0, %v1356
    %v1358 = vpop.f32.mrb[0].mxu0
    %v1359 = vadd.f32 0.0, %v1358
    %1360 = vdwg.mxu0
    %v1361 = vadd.f32 %v1142, %v1215
    %v1362 = vadd.f32 %v1143, %v1217
    %v1363 = vxor.u32 %v1361, 2147483648
    %v1364 = vxor.u32 %v1362, 2147483648
    %v1365 = vmul.f32 %v1363, 1.442695
    %v1366 = vpow.pop %v1365
    %v1367 = vmul.f32 %v1364, 1.442695
    %v1368 = vpow.pop %v1367
    %v1369 = vadd.f32 %v1366, 1.0
    %v1370 = vadd.f32 %v1368, 1.0
    %v1371 = vrcp.pop %v1369
    %v1372 = vmul.f32 1.0, %v1371
    %v1373 = vrcp.pop %v1370
    %v1374 = vmul.f32 1.0, %v1373
    %v1375 = vadd.f32 %v1144, %v1286
    %v1376 = vadd.f32 %v1145, %v1288
    %v1377 = vxor.u32 %v1375, 2147483648
    %v1378 = vxor.u32 %v1376, 2147483648
    %v1379 = vmul.f32 %v1377, 1.442695
    %v1380 = vpow.pop %v1379
    %v1381 = vmul.f32 %v1378, 1.442695
    %v1382 = vpow.pop %v1381
    %v1383 = vadd.f32 %v1380, 1.0
    %v1384 = vadd.f32 %v1382, 1.0
    %v1385 = vrcp.pop %v1383
    %v1386 = vmul.f32 1.0, %v1385
    %v1387 = vrcp.pop %v1384
    %v1388 = vmul.f32 1.0, %v1387
    %v1389 = vadd.f32 %v1357, %v674
    %v1390 = vadd.f32 %v1359, %v678
    %v1391 = vmul.f32 %v1372, %v1389
    %v1392 = vmul.f32 %v1374, %v1390
    %v1393 = vadd.f32 %v1146, %v1391
    %v1394 = vadd.f32 %v1147, %v1392
    %v1395 = vtanh.pop %v1393
    %v1396 = vtanh.pop %v1394
    %v1397 = vsub.f32 1.0, %v1386
    %v1398 = vsub.f32 1.0, %v1388
    %v1399 = vmul.f32 %v1397, %v1395
    %v1400 = vmul.f32 %v1398, %v1396
    %v1401 = vmul.f32 %v1386, %v1137
    %v1402 = vmul.f32 %v1388, %v1138
    %v1403 = vadd.f32 %v1399, %v1401
    %v1404 = vadd.f32 %v1400, %v1402
    %s1405 = smul.u32 2, 6
    %s1406 = smul.addr %s1405, 8
    %s1407 = scalar_lea.vmem [#allocation2], %s1406
    %v1408 = vld [vmem:[%s1407] sm:$0xff]
    %v1409 = vld [vmem:[%s1407 + $0x8] sm:$0xff]
    %v1410 = vld [vmem:[%s1407 + $0x10] sm:$0xff]
    %v1411 = vld [vmem:[%s1407 + $0x18] sm:$0xff]
    %v1412 = vld [vmem:[%s1407 + $0x20] sm:$0xff]
    %v1413 = vld [vmem:[%s1407 + $0x28] sm:$0xff]
    %1414 = vmatprep.subr.mxu0 %v691
    %1415 = vmatpush1.msra.mxu0 %v690
    %1416 = vmatprep.subr.mxu0 %v697
    %1417 = vmatpush1.msra.mxu0 %v696
    %1418 = vmatprep.subr.mxu0 %v703
    %1419 = vmatpush1.msra.mxu0 %v702
    %1420 = vmatprep.subr.mxu0 %v709
    %1421 = vmatpush1.msra.mxu0 %v708
    %1422 = vmatprep.subr.mxu0 %v715
    %1423 = vmatpush1.msra.mxu0 %v714
    %1424 = vmatprep.subr.mxu0 %v721
    %1425 = vmatpush1.msra.mxu0 %v720
    %1426 = vmatprep.subr.mxu0 %v727
    %1427 = vmatpush1.msra.mxu0 %v726
    %1428 = vmatprep.subr.mxu0 %v733
    %1429 = vmatpush1.msra.mxu0 %v732
    %1430 = vmatprep.subr.mxu0 %v739
    %1431 = vmatpush1.msra.mxu0 %v738
    %1432 = vmatprep.subr.mxu0 %v745
    %1433 = vmatpush1.msra.mxu0 %v744
    %1434 = vmatprep.subr.mxu0 %v751
    %1435 = vmatpush1.msra.mxu0 %v750
    %1436 = vmatprep.subr.mxu0 %v757
    %1437 = vmatpush1.msra.mxu0 %v756
    %1438 = vmatprep.subr.mxu0 %v763
    %1439 = vmatpush1.msra.mxu0 %v762
    %1440 = vmatprep.subr.mxu0 %v769
    %1441 = vmatpush1.msra.mxu0 %v768
    %1442 = vmatprep.subr.mxu0 %v775
    %1443 = vmatpush1.msra.mxu0 %v774
    %1444 = vmatprep.subr.mxu0 %v781
    %1445 = vmatpush1.msra.mxu0 %v780
    %1446 = vmatprep.subr.mxu0 %v787
    %1447 = vmatpush1.msra.mxu0 %v786
    %1448 = vmatprep.subr.mxu0 %v793
    %1449 = vmatpush1.msra.mxu0 %v792
    %1450 = vmatprep.subr.mxu0 %v799
    %1451 = vmatpush1.msra.mxu0 %v798
    %1452 = vmatprep.subr.mxu0 %v805
    %1453 = vmatpush1.msra.mxu0 %v804
    %1454 = vmatprep.subr.mxu0 %v811
    %1455 = vmatpush1.msra.mxu0 %v810
    %1456 = vmatprep.subr.mxu0 %v817
    %1457 = vmatpush1.msra.mxu0 %v816
    %1458 = vmatprep.subr.mxu0 %v823
    %1459 = vmatpush1.msra.mxu0 %v822
    %1460 = vmatprep.subr.mxu0 %v829
    %1461 = vmatpush1.msra.mxu0 %v828
    %1462 = vmatprep.subr.mxu0 %v835
    %1463 = vmatpush1.msra.mxu0 %v834
    %1464 = vmatprep.subr.mxu0 %v841
    %1465 = vmatpush1.msra.mxu0 %v840
    %1466 = vmatprep.subr.mxu0 %v847
    %1467 = vmatpush1.msra.mxu0 %v846
    %1468 = vmatprep.subr.mxu0 %v853
    %1469 = vmatpush1.msra.mxu0 %v852
    %1470 = vmatprep.subr.mxu0 %v859
    %1471 = vmatpush1.msra.mxu0 %v858
    %1472 = vmatprep.subr.mxu0 %v865
    %1473 = vmatpush1.msra.mxu0 %v864
    %1474 = vmatprep.subr.mxu0 %v871
    %1475 = vmatpush1.msra.mxu0 %v870
    %1476 = vmatprep.subr.mxu0 %v877
    %1477 = vmatpush1.msra.mxu0 %v876
    %1478 = vmatprep.mubr.f32.mxu0 %v1404
    %1479 = vmatmul.mubr.f32.gmra.mrb[0].mxu0 %v1403
    %v1480 = vpop.f32.mrb[0].mxu0
    %v1481 = vadd.f32 0.0, %v1480
    %v1482 = vpop.f32.mrb[0].mxu0
    %v1483 = vadd.f32 0.0, %v1482
    %1484 = vdwg.mxu0
    %1485 = vmatprep.subr.mxu0 %v693
    %1486 = vmatpush1.msra.mxu0 %v692
    %1487 = vmatprep.subr.mxu0 %v699
    %1488 = vmatpush1.msra.mxu0 %v698
    %1489 = vmatprep.subr.mxu0 %v705
    %1490 = vmatpush1.msra.mxu0 %v704
    %1491 = vmatprep.subr.mxu0 %v711
    %1492 = vmatpush1.msra.mxu0 %v710
    %1493 = vmatprep.subr.mxu0 %v717
    %1494 = vmatpush1.msra.mxu0 %v716
    %1495 = vmatprep.subr.mxu0 %v723
    %1496 = vmatpush1.msra.mxu0 %v722
    %1497 = vmatprep.subr.mxu0 %v729
    %1498 = vmatpush1.msra.mxu0 %v728
    %1499 = vmatprep.subr.mxu0 %v735
    %1500 = vmatpush1.msra.mxu0 %v734
    %1501 = vmatprep.subr.mxu0 %v741
    %1502 = vmatpush1.msra.mxu0 %v740
    %1503 = vmatprep.subr.mxu0 %v747
    %1504 = vmatpush1.msra.mxu0 %v746
    %1505 = vmatprep.subr.mxu0 %v753
    %1506 = vmatpush1.msra.mxu0 %v752
    %1507 = vmatprep.subr.mxu0 %v759
    %1508 = vmatpush1.msra.mxu0 %v758
    %1509 = vmatprep.subr.mxu0 %v765
    %1510 = vmatpush1.msra.mxu0 %v764
    %1511 = vmatprep.subr.mxu0 %v771
    %1512 = vmatpush1.msra.mxu0 %v770
    %1513 = vmatprep.subr.mxu0 %v777
    %1514 = vmatpush1.msra.mxu0 %v776
    %1515 = vmatprep.subr.mxu0 %v783
    %1516 = vmatpush1.msra.mxu0 %v782
    %1517 = vmatprep.subr.mxu0 %v789
    %1518 = vmatpush1.msra.mxu0 %v788
    %1519 = vmatprep.subr.mxu0 %v795
    %1520 = vmatpush1.msra.mxu0 %v794
    %1521 = vmatprep.subr.mxu0 %v801
    %1522 = vmatpush1.msra.mxu0 %v800
    %1523 = vmatprep.subr.mxu0 %v807
    %1524 = vmatpush1.msra.mxu0 %v806
    %1525 = vmatprep.subr.mxu0 %v813
    %1526 = vmatpush1.msra.mxu0 %v812
    %1527 = vmatprep.subr.mxu0 %v819
    %1528 = vmatpush1.msra.mxu0 %v818
    %1529 = vmatprep.subr.mxu0 %v825
    %1530 = vmatpush1.msra.mxu0 %v824
    %1531 = vmatprep.subr.mxu0 %v831
    %1532 = vmatpush1.msra.mxu0 %v830
    %1533 = vmatprep.subr.mxu0 %v837
    %1534 = vmatpush1.msra.mxu0 %v836
    %1535 = vmatprep.subr.mxu0 %v843
    %1536 = vmatpush1.msra.mxu0 %v842
    %1537 = vmatprep.subr.mxu0 %v849
    %1538 = vmatpush1.msra.mxu0 %v848
    %1539 = vmatprep.subr.mxu0 %v855
    %1540 = vmatpush1.msra.mxu0 %v854
    %1541 = vmatprep.subr.mxu0 %v861
    %1542 = vmatpush1.msra.mxu0 %v860
    %1543 = vmatprep.subr.mxu0 %v867
    %1544 = vmatpush1.msra.mxu0 %v866
    %1545 = vmatprep.subr.mxu0 %v873
    %1546 = vmatpush1.msra.mxu0 %v872
    %1547 = vmatprep.subr.mxu0 %v879
    %1548 = vmatpush1.msra.mxu0 %v878
    %1549 = vmatprep.mubr.f32.mxu0 %v1404
    %1550 = vmatmul.mubr.f32.gmra.mrb[0].mxu0 %v1403
    %v1551 = vpop.f32.mrb[0].mxu0
    %v1552 = vadd.f32 0.0, %v1551
    %v1553 = vpop.f32.mrb[0].mxu0
    %v1554 = vadd.f32 0.0, %v1553
    %1555 = vdwg.mxu0
    %1556 = vmatprep.subr.mxu0 %v695
    %1557 = vmatpush1.msra.mxu0 %v694
    %1558 = vmatprep.subr.mxu0 %v701
    %1559 = vmatpush1.msra.mxu0 %v700
    %1560 = vmatprep.subr.mxu0 %v707
    %1561 = vmatpush1.msra.mxu0 %v706
    %1562 = vmatprep.subr.mxu0 %v713
    %1563 = vmatpush1.msra.mxu0 %v712
    %1564 = vmatprep.subr.mxu0 %v719
    %1565 = vmatpush1.msra.mxu0 %v718
    %1566 = vmatprep.subr.mxu0 %v725
    %1567 = vmatpush1.msra.mxu0 %v724
    %1568 = vmatprep.subr.mxu0 %v731
    %1569 = vmatpush1.msra.mxu0 %v730
    %1570 = vmatprep.subr.mxu0 %v737
    %1571 = vmatpush1.msra.mxu0 %v736
    %1572 = vmatprep.subr.mxu0 %v743
    %1573 = vmatpush1.msra.mxu0 %v742
    %1574 = vmatprep.subr.mxu0 %v749
    %1575 = vmatpush1.msra.mxu0 %v748
    %1576 = vmatprep.subr.mxu0 %v755
    %1577 = vmatpush1.msra.mxu0 %v754
    %1578 = vmatprep.subr.mxu0 %v761
    %1579 = vmatpush1.msra.mxu0 %v760
    %1580 = vmatprep.subr.mxu0 %v767
    %1581 = vmatpush1.msra.mxu0 %v766
    %1582 = vmatprep.subr.mxu0 %v773
    %1583 = vmatpush1.msra.mxu0 %v772
    %1584 = vmatprep.subr.mxu0 %v779
    %1585 = vmatpush1.msra.mxu0 %v778
    %1586 = vmatprep.subr.mxu0 %v785
    %1587 = vmatpush1.msra.mxu0 %v784
    %1588 = vmatprep.subr.mxu0 %v791
    %1589 = vmatpush1.msra.mxu0 %v790
    %1590 = vmatprep.subr.mxu0 %v797
    %1591 = vmatpush1.msra.mxu0 %v796
    %1592 = vmatprep.subr.mxu0 %v803
    %1593 = vmatpush1.msra.mxu0 %v802
    %1594 = vmatprep.subr.mxu0 %v809
    %1595 = vmatpush1.msra.mxu0 %v808
    %1596 = vmatprep.subr.mxu0 %v815
    %1597 = vmatpush1.msra.mxu0 %v814
    %1598 = vmatprep.subr.mxu0 %v821
    %1599 = vmatpush1.msra.mxu0 %v820
    %1600 = vmatprep.subr.mxu0 %v827
    %1601 = vmatpush1.msra.mxu0 %v826
    %1602 = vmatprep.subr.mxu0 %v833
    %1603 = vmatpush1.msra.mxu0 %v832
    %1604 = vmatprep.subr.mxu0 %v839
    %1605 = vmatpush1.msra.mxu0 %v838
    %1606 = vmatprep.subr.mxu0 %v845
    %1607 = vmatpush1.msra.mxu0 %v844
    %1608 = vmatprep.subr.mxu0 %v851
    %1609 = vmatpush1.msra.mxu0 %v850
    %1610 = vmatprep.subr.mxu0 %v857
    %1611 = vmatpush1.msra.mxu0 %v856
    %1612 = vmatprep.subr.mxu0 %v863
    %1613 = vmatpush1.msra.mxu0 %v862
    %1614 = vmatprep.subr.mxu0 %v869
    %1615 = vmatpush1.msra.mxu0 %v868
    %1616 = vmatprep.subr.mxu0 %v875
    %1617 = vmatpush1.msra.mxu0 %v874
    %1618 = vmatprep.subr.mxu0 %v881
    %1619 = vmatpush1.msra.mxu0 %v880
    %1620 = vmatprep.mubr.f32.mxu0 %v1404
    %1621 = vmatmul.mubr.f32.gmra.mrb[0].mxu0 %v1403
    %v1622 = vpop.f32.mrb[0].mxu0
    %v1623 = vadd.f32 0.0, %v1622
    %v1624 = vpop.f32.mrb[0].mxu0
    %v1625 = vadd.f32 0.0, %v1624
    %1626 = vdwg.mxu0
    %v1627 = vadd.f32 %v1408, %v1481
    %v1628 = vadd.f32 %v1409, %v1483
    %v1629 = vxor.u32 %v1627, 2147483648
    %v1630 = vxor.u32 %v1628, 2147483648
    %v1631 = vmul.f32 %v1629, 1.442695
    %v1632 = vpow.pop %v1631
    %v1633 = vmul.f32 %v1630, 1.442695
    %v1634 = vpow.pop %v1633
    %v1635 = vadd.f32 %v1632, 1.0
    %v1636 = vadd.f32 %v1634, 1.0
    %v1637 = vrcp.pop %v1635
    %v1638 = vmul.f32 1.0, %v1637
    %v1639 = vrcp.pop %v1636
    %v1640 = vmul.f32 1.0, %v1639
    %v1641 = vadd.f32 %v1410, %v1552
    %v1642 = vadd.f32 %v1411, %v1554
    %v1643 = vxor.u32 %v1641, 2147483648
    %v1644 = vxor.u32 %v1642, 2147483648
    %v1645 = vmul.f32 %v1643, 1.442695
    %v1646 = vpow.pop %v1645
    %v1647 = vmul.f32 %v1644, 1.442695
    %v1648 = vpow.pop %v1647
    %v1649 = vadd.f32 %v1646, 1.0
    %v1650 = vadd.f32 %v1648, 1.0
    %v1651 = vrcp.pop %v1649
    %v1652 = vmul.f32 1.0, %v1651
    %v1653 = vrcp.pop %v1650
    %v1654 = vmul.f32 1.0, %v1653
    %v1655 = vadd.f32 %v1623, %v674
    %v1656 = vadd.f32 %v1625, %v678
    %v1657 = vmul.f32 %v1638, %v1655
    %v1658 = vmul.f32 %v1640, %v1656
    %v1659 = vadd.f32 %v1412, %v1657
    %v1660 = vadd.f32 %v1413, %v1658
    %v1661 = vtanh.pop %v1659
    %v1662 = vtanh.pop %v1660
    %v1663 = vsub.f32 1.0, %v1652
    %v1664 = vsub.f32 1.0, %v1654
    %v1665 = vmul.f32 %v1663, %v1661
    %v1666 = vmul.f32 %v1664, %v1662
    %v1667 = vmul.f32 %v1652, %v1403
    %v1668 = vmul.f32 %v1654, %v1404
    %v1669 = vadd.f32 %v1665, %v1667
    %v1670 = vadd.f32 %v1666, %v1668
    %s1671 = smul.u32 3, 6
    %s1672 = smul.addr %s1671, 8
    %s1673 = scalar_lea.vmem [#allocation2], %s1672
    %v1674 = vld [vmem:[%s1673] sm:$0xff]
    %v1675 = vld [vmem:[%s1673 + $0x8] sm:$0xff]
    %v1676 = vld [vmem:[%s1673 + $0x10] sm:$0xff]
    %v1677 = vld [vmem:[%s1673 + $0x18] sm:$0xff]
    %v1678 = vld [vmem:[%s1673 + $0x20] sm:$0xff]
    %v1679 = vld [vmem:[%s1673 + $0x28] sm:$0xff]
    %1680 = vmatprep.subr.mxu0 %v691
    %1681 = vmatpush1.msra.mxu0 %v690
    %1682 = vmatprep.subr.mxu0 %v697
    %1683 = vmatpush1.msra.mxu0 %v696
    %1684 = vmatprep.subr.mxu0 %v703
    %1685 = vmatpush1.msra.mxu0 %v702
    %1686 = vmatprep.subr.mxu0 %v709
    %1687 = vmatpush1.msra.mxu0 %v708
    %1688 = vmatprep.subr.mxu0 %v715
    %1689 = vmatpush1.msra.mxu0 %v714
    %1690 = vmatprep.subr.mxu0 %v721
    %1691 = vmatpush1.msra.mxu0 %v720
    %1692 = vmatprep.subr.mxu0 %v727
    %1693 = vmatpush1.msra.mxu0 %v726
    %1694 = vmatprep.subr.mxu0 %v733
    %1695 = vmatpush1.msra.mxu0 %v732
    %1696 = vmatprep.subr.mxu0 %v739
    %1697 = vmatpush1.msra.mxu0 %v738
    %1698 = vmatprep.subr.mxu0 %v745
    %1699 = vmatpush1.msra.mxu0 %v744
    %1700 = vmatprep.subr.mxu0 %v751
    %1701 = vmatpush1.msra.mxu0 %v750
    %1702 = vmatprep.subr.mxu0 %v757
    %1703 = vmatpush1.msra.mxu0 %v756
    %1704 = vmatprep.subr.mxu0 %v763
    %1705 = vmatpush1.msra.mxu0 %v762
    %1706 = vmatprep.subr.mxu0 %v769
    %1707 = vmatpush1.msra.mxu0 %v768
    %1708 = vmatprep.subr.mxu0 %v775
    %1709 = vmatpush1.msra.mxu0 %v774
    %1710 = vmatprep.subr.mxu0 %v781
    %1711 = vmatpush1.msra.mxu0 %v780
    %1712 = vmatprep.subr.mxu0 %v787
    %1713 = vmatpush1.msra.mxu0 %v786
    %1714 = vmatprep.subr.mxu0 %v793
    %1715 = vmatpush1.msra.mxu0 %v792
    %1716 = vmatprep.subr.mxu0 %v799
    %1717 = vmatpush1.msra.mxu0 %v798
    %1718 = vmatprep.subr.mxu0 %v805
    %1719 = vmatpush1.msra.mxu0 %v804
    %1720 = vmatprep.subr.mxu0 %v811
    %1721 = vmatpush1.msra.mxu0 %v810
    %1722 = vmatprep.subr.mxu0 %v817
    %1723 = vmatpush1.msra.mxu0 %v816
    %1724 = vmatprep.subr.mxu0 %v823
    %1725 = vmatpush1.msra.mxu0 %v822
    %1726 = vmatprep.subr.mxu0 %v829
    %1727 = vmatpush1.msra.mxu0 %v828
    %1728 = vmatprep.subr.mxu0 %v835
    %1729 = vmatpush1.msra.mxu0 %v834
    %1730 = vmatprep.subr.mxu0 %v841
    %1731 = vmatpush1.msra.mxu0 %v840
    %1732 = vmatprep.subr.mxu0 %v847
    %1733 = vmatpush1.msra.mxu0 %v846
    %1734 = vmatprep.subr.mxu0 %v853
    %1735 = vmatpush1.msra.mxu0 %v852
    %1736 = vmatprep.subr.mxu0 %v859
    %1737 = vmatpush1.msra.mxu0 %v858
    %1738 = vmatprep.subr.mxu0 %v865
    %1739 = vmatpush1.msra.mxu0 %v864
    %1740 = vmatprep.subr.mxu0 %v871
    %1741 = vmatpush1.msra.mxu0 %v870
    %1742 = vmatprep.subr.mxu0 %v877
    %1743 = vmatpush1.msra.mxu0 %v876
    %1744 = vmatprep.mubr.f32.mxu0 %v1670
    %1745 = vmatmul.mubr.f32.gmra.mrb[0].mxu0 %v1669
    %v1746 = vpop.f32.mrb[0].mxu0
    %v1747 = vadd.f32 0.0, %v1746
    %v1748 = vpop.f32.mrb[0].mxu0
    %v1749 = vadd.f32 0.0, %v1748
    %1750 = vdwg.mxu0
    %1751 = vmatprep.subr.mxu0 %v693
    %1752 = vmatpush1.msra.mxu0 %v692
    %1753 = vmatprep.subr.mxu0 %v699
    %1754 = vmatpush1.msra.mxu0 %v698
    %1755 = vmatprep.subr.mxu0 %v705
    %1756 = vmatpush1.msra.mxu0 %v704
    %1757 = vmatprep.subr.mxu0 %v711
    %1758 = vmatpush1.msra.mxu0 %v710
    %1759 = vmatprep.subr.mxu0 %v717
    %1760 = vmatpush1.msra.mxu0 %v716
    %1761 = vmatprep.subr.mxu0 %v723
    %1762 = vmatpush1.msra.mxu0 %v722
    %1763 = vmatprep.subr.mxu0 %v729
    %1764 = vmatpush1.msra.mxu0 %v728
    %1765 = vmatprep.subr.mxu0 %v735
    %1766 = vmatpush1.msra.mxu0 %v734
    %1767 = vmatprep.subr.mxu0 %v741
    %1768 = vmatpush1.msra.mxu0 %v740
    %1769 = vmatprep.subr.mxu0 %v747
    %1770 = vmatpush1.msra.mxu0 %v746
    %1771 = vmatprep.subr.mxu0 %v753
    %1772 = vmatpush1.msra.mxu0 %v752
    %1773 = vmatprep.subr.mxu0 %v759
    %1774 = vmatpush1.msra.mxu0 %v758
    %1775 = vmatprep.subr.mxu0 %v765
    %1776 = vmatpush1.msra.mxu0 %v764
    %1777 = vmatprep.subr.mxu0 %v771
    %1778 = vmatpush1.msra.mxu0 %v770
    %1779 = vmatprep.subr.mxu0 %v777
    %1780 = vmatpush1.msra.mxu0 %v776
    %1781 = vmatprep.subr.mxu0 %v783
    %1782 = vmatpush1.msra.mxu0 %v782
    %1783 = vmatprep.subr.mxu0 %v789
    %1784 = vmatpush1.msra.mxu0 %v788
    %1785 = vmatprep.subr.mxu0 %v795
    %1786 = vmatpush1.msra.mxu0 %v794
    %1787 = vmatprep.subr.mxu0 %v801
    %1788 = vmatpush1.msra.mxu0 %v800
    %1789 = vmatprep.subr.mxu0 %v807
    %1790 = vmatpush1.msra.mxu0 %v806
    %1791 = vmatprep.subr.mxu0 %v813
    %1792 = vmatpush1.msra.mxu0 %v812
    %1793 = vmatprep.subr.mxu0 %v819
    %1794 = vmatpush1.msra.mxu0 %v818
    %1795 = vmatprep.subr.mxu0 %v825
    %1796 = vmatpush1.msra.mxu0 %v824
    %1797 = vmatprep.subr.mxu0 %v831
    %1798 = vmatpush1.msra.mxu0 %v830
    %1799 = vmatprep.subr.mxu0 %v837
    %1800 = vmatpush1.msra.mxu0 %v836
    %1801 = vmatprep.subr.mxu0 %v843
    %1802 = vmatpush1.msra.mxu0 %v842
    %1803 = vmatprep.subr.mxu0 %v849
    %1804 = vmatpush1.msra.mxu0 %v848
    %1805 = vmatprep.subr.mxu0 %v855
    %1806 = vmatpush1.msra.mxu0 %v854
    %1807 = vmatprep.subr.mxu0 %v861
    %1808 = vmatpush1.msra.mxu0 %v860
    %1809 = vmatprep.subr.mxu0 %v867
    %1810 = vmatpush1.msra.mxu0 %v866
    %1811 = vmatprep.subr.mxu0 %v873
    %1812 = vmatpush1.msra.mxu0 %v872
    %1813 = vmatprep.subr.mxu0 %v879
    %1814 = vmatpush1.msra.mxu0 %v878
    %1815 = vmatprep.mubr.f32.mxu0 %v1670
    %1816 = vmatmul.mubr.f32.gmra.mrb[0].mxu0 %v1669
    %v1817 = vpop.f32.mrb[0].mxu0
    %v1818 = vadd.f32 0.0, %v1817
    %v1819 = vpop.f32.mrb[0].mxu0
    %v1820 = vadd.f32 0.0, %v1819
    %1821 = vdwg.mxu0
    %1822 = vmatprep.subr.mxu0 %v695
    %1823 = vmatpush1.msra.mxu0 %v694
    %1824 = vmatprep.subr.mxu0 %v701
    %1825 = vmatpush1.msra.mxu0 %v700
    %1826 = vmatprep.subr.mxu0 %v707
    %1827 = vmatpush1.msra.mxu0 %v706
    %1828 = vmatprep.subr.mxu0 %v713
    %1829 = vmatpush1.msra.mxu0 %v712
    %1830 = vmatprep.subr.mxu0 %v719
    %1831 = vmatpush1.msra.mxu0 %v718
    %1832 = vmatprep.subr.mxu0 %v725
    %1833 = vmatpush1.msra.mxu0 %v724
    %1834 = vmatprep.subr.mxu0 %v731
    %1835 = vmatpush1.msra.mxu0 %v730
    %1836 = vmatprep.subr.mxu0 %v737
    %1837 = vmatpush1.msra.mxu0 %v736
    %1838 = vmatprep.subr.mxu0 %v743
    %1839 = vmatpush1.msra.mxu0 %v742
    %1840 = vmatprep.subr.mxu0 %v749
    %1841 = vmatpush1.msra.mxu0 %v748
    %1842 = vmatprep.subr.mxu0 %v755
    %1843 = vmatpush1.msra.mxu0 %v754
    %1844 = vmatprep.subr.mxu0 %v761
    %1845 = vmatpush1.msra.mxu0 %v760
    %1846 = vmatprep.subr.mxu0 %v767
    %1847 = vmatpush1.msra.mxu0 %v766
    %1848 = vmatprep.subr.mxu0 %v773
    %1849 = vmatpush1.msra.mxu0 %v772
    %1850 = vmatprep.subr.mxu0 %v779
    %1851 = vmatpush1.msra.mxu0 %v778
    %1852 = vmatprep.subr.mxu0 %v785
    %1853 = vmatpush1.msra.mxu0 %v784
    %1854 = vmatprep.subr.mxu0 %v791
    %1855 = vmatpush1.msra.mxu0 %v790
    %1856 = vmatprep.subr.mxu0 %v797
    %1857 = vmatpush1.msra.mxu0 %v796
    %1858 = vmatprep.subr.mxu0 %v803
    %1859 = vmatpush1.msra.mxu0 %v802
    %1860 = vmatprep.subr.mxu0 %v809
    %1861 = vmatpush1.msra.mxu0 %v808
    %1862 = vmatprep.subr.mxu0 %v815
    %1863 = vmatpush1.msra.mxu0 %v814
    %1864 = vmatprep.subr.mxu0 %v821
    %1865 = vmatpush1.msra.mxu0 %v820
    %1866 = vmatprep.subr.mxu0 %v827
    %1867 = vmatpush1.msra.mxu0 %v826
    %1868 = vmatprep.subr.mxu0 %v833
    %1869 = vmatpush1.msra.mxu0 %v832
    %1870 = vmatprep.subr.mxu0 %v839
    %1871 = vmatpush1.msra.mxu0 %v838
    %1872 = vmatprep.subr.mxu0 %v845
    %1873 = vmatpush1.msra.mxu0 %v844
    %1874 = vmatprep.subr.mxu0 %v851
    %1875 = vmatpush1.msra.mxu0 %v850
    %1876 = vmatprep.subr.mxu0 %v857
    %1877 = vmatpush1.msra.mxu0 %v856
    %1878 = vmatprep.subr.mxu0 %v863
    %1879 = vmatpush1.msra.mxu0 %v862
    %1880 = vmatprep.subr.mxu0 %v869
    %1881 = vmatpush1.msra.mxu0 %v868
    %1882 = vmatprep.subr.mxu0 %v875
    %1883 = vmatpush1.msra.mxu0 %v874
    %1884 = vmatprep.subr.mxu0 %v881
    %1885 = vmatpush1.msra.mxu0 %v880
    %1886 = vmatprep.mubr.f32.mxu0 %v1670
    %1887 = vmatmul.mubr.f32.gmra.mrb[0].mxu0 %v1669
    %v1888 = vpop.f32.mrb[0].mxu0
    %v1889 = vadd.f32 0.0, %v1888
    %v1890 = vpop.f32.mrb[0].mxu0
    %v1891 = vadd.f32 0.0, %v1890
    %1892 = vdwg.mxu0
    %v1893 = vadd.f32 %v1674, %v1747
    %v1894 = vadd.f32 %v1675, %v1749
    %v1895 = vxor.u32 %v1893, 2147483648
    %v1896 = vxor.u32 %v1894, 2147483648
    %v1897 = vmul.f32 %v1895, 1.442695
    %v1898 = vpow.pop %v1897
    %v1899 = vmul.f32 %v1896, 1.442695
    %v1900 = vpow.pop %v1899
    %v1901 = vadd.f32 %v1898, 1.0
    %v1902 = vadd.f32 %v1900, 1.0
    %v1903 = vrcp.pop %v1901
    %v1904 = vmul.f32 1.0, %v1903
    %v1905 = vrcp.pop %v1902
    %v1906 = vmul.f32 1.0, %v1905
    %v1907 = vadd.f32 %v1676, %v1818
    %v1908 = vadd.f32 %v1677, %v1820
    %v1909 = vxor.u32 %v1907, 2147483648
    %v1910 = vxor.u32 %v1908, 2147483648
    %v1911 = vmul.f32 %v1909, 1.442695
    %v1912 = vpow.pop %v1911
    %v1913 = vmul.f32 %v1910, 1.442695
    %v1914 = vpow.pop %v1913
    %v1915 = vadd.f32 %v1912, 1.0
    %v1916 = vadd.f32 %v1914, 1.0
    %v1917 = vrcp.pop %v1915
    %v1918 = vmul.f32 1.0, %v1917
    %v1919 = vrcp.pop %v1916
    %v1920 = vmul.f32 1.0, %v1919
    %v1921 = vadd.f32 %v1889, %v674
    %v1922 = vadd.f32 %v1891, %v678
    %v1923 = vmul.f32 %v1904, %v1921
    %v1924 = vmul.f32 %v1906, %v1922
    %v1925 = vadd.f32 %v1678, %v1923
    %v1926 = vadd.f32 %v1679, %v1924
    %v1927 = vtanh.pop %v1925
    %v1928 = vtanh.pop %v1926
    %v1929 = vsub.f32 1.0, %v1918
    %v1930 = vsub.f32 1.0, %v1920
    %v1931 = vmul.f32 %v1929, %v1927
    %v1932 = vmul.f32 %v1930, %v1928
    %v1933 = vmul.f32 %v1918, %v1669
    %v1934 = vmul.f32 %v1920, %v1670
    %v1935 = vadd.f32 %v1931, %v1933
    %v1936 = vadd.f32 %v1932, %v1934
    %s1937 = smul.u32 4, 6
    %s1938 = smul.addr %s1937, 8
    %s1939 = scalar_lea.vmem [#allocation2], %s1938
    %v1940 = vld [vmem:[%s1939] sm:$0xff]
    %v1941 = vld [vmem:[%s1939 + $0x8] sm:$0xff]
    %v1942 = vld [vmem:[%s1939 + $0x10] sm:$0xff]
    %v1943 = vld [vmem:[%s1939 + $0x18] sm:$0xff]
    %v1944 = vld [vmem:[%s1939 + $0x20] sm:$0xff]
    %v1945 = vld [vmem:[%s1939 + $0x28] sm:$0xff]
    %1946 = vmatprep.subr.mxu0 %v691
    %1947 = vmatpush1.msra.mxu0 %v690
    %1948 = vmatprep.subr.mxu0 %v697
    %1949 = vmatpush1.msra.mxu0 %v696
    %1950 = vmatprep.subr.mxu0 %v703
    %1951 = vmatpush1.msra.mxu0 %v702
    %1952 = vmatprep.subr.mxu0 %v709
    %1953 = vmatpush1.msra.mxu0 %v708
    %1954 = vmatprep.subr.mxu0 %v715
    %1955 = vmatpush1.msra.mxu0 %v714
    %1956 = vmatprep.subr.mxu0 %v721
    %1957 = vmatpush1.msra.mxu0 %v720
    %1958 = vmatprep.subr.mxu0 %v727
    %1959 = vmatpush1.msra.mxu0 %v726
    %1960 = vmatprep.subr.mxu0 %v733
    %1961 = vmatpush1.msra.mxu0 %v732
    %1962 = vmatprep.subr.mxu0 %v739
    %1963 = vmatpush1.msra.mxu0 %v738
    %1964 = vmatprep.subr.mxu0 %v745
    %1965 = vmatpush1.msra.mxu0 %v744
    %1966 = vmatprep.subr.mxu0 %v751
    %1967 = vmatpush1.msra.mxu0 %v750
    %1968 = vmatprep.subr.mxu0 %v757
    %1969 = vmatpush1.msra.mxu0 %v756
    %1970 = vmatprep.subr.mxu0 %v763
    %1971 = vmatpush1.msra.mxu0 %v762
    %1972 = vmatprep.subr.mxu0 %v769
    %1973 = vmatpush1.msra.mxu0 %v768
    %1974 = vmatprep.subr.mxu0 %v775
    %1975 = vmatpush1.msra.mxu0 %v774
    %1976 = vmatprep.subr.mxu0 %v781
    %1977 = vmatpush1.msra.mxu0 %v780
    %1978 = vmatprep.subr.mxu0 %v787
    %1979 = vmatpush1.msra.mxu0 %v786
    %1980 = vmatprep.subr.mxu0 %v793
    %1981 = vmatpush1.msra.mxu0 %v792
    %1982 = vmatprep.subr.mxu0 %v799
    %1983 = vmatpush1.msra.mxu0 %v798
    %1984 = vmatprep.subr.mxu0 %v805
    %1985 = vmatpush1.msra.mxu0 %v804
    %1986 = vmatprep.subr.mxu0 %v811
    %1987 = vmatpush1.msra.mxu0 %v810
    %1988 = vmatprep.subr.mxu0 %v817
    %1989 = vmatpush1.msra.mxu0 %v816
    %1990 = vmatprep.subr.mxu0 %v823
    %1991 = vmatpush1.msra.mxu0 %v822
    %1992 = vmatprep.subr.mxu0 %v829
    %1993 = vmatpush1.msra.mxu0 %v828
    %1994 = vmatprep.subr.mxu0 %v835
    %1995 = vmatpush1.msra.mxu0 %v834
    %1996 = vmatprep.subr.mxu0 %v841
    %1997 = vmatpush1.msra.mxu0 %v840
    %1998 = vmatprep.subr.mxu0 %v847
    %1999 = vmatpush1.msra.mxu0 %v846
    %2000 = vmatprep.subr.mxu0 %v853
    %2001 = vmatpush1.msra.mxu0 %v852
    %2002 = vmatprep.subr.mxu0 %v859
    %2003 = vmatpush1.msra.mxu0 %v858
    %2004 = vmatprep.subr.mxu0 %v865
    %2005 = vmatpush1.msra.mxu0 %v864
    %2006 = vmatprep.subr.mxu0 %v871
    %2007 = vmatpush1.msra.mxu0 %v870
    %2008 = vmatprep.subr.mxu0 %v877
    %2009 = vmatpush1.msra.mxu0 %v876
    %2010 = vmatprep.mubr.f32.mxu0 %v1936
    %2011 = vmatmul.mubr.f32.gmra.mrb[0].mxu0 %v1935
    %v2012 = vpop.f32.mrb[0].mxu0
    %v2013 = vadd.f32 0.0, %v2012
    %v2014 = vpop.f32.mrb[0].mxu0
    %v2015 = vadd.f32 0.0, %v2014
    %2016 = vdwg.mxu0
    %2017 = vmatprep.subr.mxu0 %v693
    %2018 = vmatpush1.msra.mxu0 %v692
    %2019 = vmatprep.subr.mxu0 %v699
    %2020 = vmatpush1.msra.mxu0 %v698
    %2021 = vmatprep.subr.mxu0 %v705
    %2022 = vmatpush1.msra.mxu0 %v704
    %2023 = vmatprep.subr.mxu0 %v711
    %2024 = vmatpush1.msra.mxu0 %v710
    %2025 = vmatprep.subr.mxu0 %v717
    %2026 = vmatpush1.msra.mxu0 %v716
    %2027 = vmatprep.subr.mxu0 %v723
    %2028 = vmatpush1.msra.mxu0 %v722
    %2029 = vmatprep.subr.mxu0 %v729
    %2030 = vmatpush1.msra.mxu0 %v728
    %2031 = vmatprep.subr.mxu0 %v735
    %2032 = vmatpush1.msra.mxu0 %v734
    %2033 = vmatprep.subr.mxu0 %v741
    %2034 = vmatpush1.msra.mxu0 %v740
    %2035 = vmatprep.subr.mxu0 %v747
    %2036 = vmatpush1.msra.mxu0 %v746
    %2037 = vmatprep.subr.mxu0 %v753
    %2038 = vmatpush1.msra.mxu0 %v752
    %2039 = vmatprep.subr.mxu0 %v759
    %2040 = vmatpush1.msra.mxu0 %v758
    %2041 = vmatprep.subr.mxu0 %v765
    %2042 = vmatpush1.msra.mxu0 %v764
    %2043 = vmatprep.subr.mxu0 %v771
    %2044 = vmatpush1.msra.mxu0 %v770
    %2045 = vmatprep.subr.mxu0 %v777
    %2046 = vmatpush1.msra.mxu0 %v776
    %2047 = vmatprep.subr.mxu0 %v783
    %2048 = vmatpush1.msra.mxu0 %v782
    %2049 = vmatprep.subr.mxu0 %v789
    %2050 = vmatpush1.msra.mxu0 %v788
    %2051 = vmatprep.subr.mxu0 %v795
    %2052 = vmatpush1.msra.mxu0 %v794
    %2053 = vmatprep.subr.mxu0 %v801
    %2054 = vmatpush1.msra.mxu0 %v800
    %2055 = vmatprep.subr.mxu0 %v807
    %2056 = vmatpush1.msra.mxu0 %v806
    %2057 = vmatprep.subr.mxu0 %v813
    %2058 = vmatpush1.msra.mxu0 %v812
    %2059 = vmatprep.subr.mxu0 %v819
    %2060 = vmatpush1.msra.mxu0 %v818
    %2061 = vmatprep.subr.mxu0 %v825
    %2062 = vmatpush1.msra.mxu0 %v824
    %2063 = vmatprep.subr.mxu0 %v831
    %2064 = vmatpush1.msra.mxu0 %v830
    %2065 = vmatprep.subr.mxu0 %v837
    %2066 = vmatpush1.msra.mxu0 %v836
    %2067 = vmatprep.subr.mxu0 %v843
    %2068 = vmatpush1.msra.mxu0 %v842
    %2069 = vmatprep.subr.mxu0 %v849
    %2070 = vmatpush1.msra.mxu0 %v848
    %2071 = vmatprep.subr.mxu0 %v855
    %2072 = vmatpush1.msra.mxu0 %v854
    %2073 = vmatprep.subr.mxu0 %v861
    %2074 = vmatpush1.msra.mxu0 %v860
    %2075 = vmatprep.subr.mxu0 %v867
    %2076 = vmatpush1.msra.mxu0 %v866
    %2077 = vmatprep.subr.mxu0 %v873
    %2078 = vmatpush1.msra.mxu0 %v872
    %2079 = vmatprep.subr.mxu0 %v879
    %2080 = vmatpush1.msra.mxu0 %v878
    %2081 = vmatprep.mubr.f32.mxu0 %v1936
    %2082 = vmatmul.mubr.f32.gmra.mrb[0].mxu0 %v1935
    %v2083 = vpop.f32.mrb[0].mxu0
    %v2084 = vadd.f32 0.0, %v2083
    %v2085 = vpop.f32.mrb[0].mxu0
    %v2086 = vadd.f32 0.0, %v2085
    %2087 = vdwg.mxu0
    %2088 = vmatprep.subr.mxu0 %v695
    %2089 = vmatpush1.msra.mxu0 %v694
    %2090 = vmatprep.subr.mxu0 %v701
    %2091 = vmatpush1.msra.mxu0 %v700
    %2092 = vmatprep.subr.mxu0 %v707
    %2093 = vmatpush1.msra.mxu0 %v706
    %2094 = vmatprep.subr.mxu0 %v713
    %2095 = vmatpush1.msra.mxu0 %v712
    %2096 = vmatprep.subr.mxu0 %v719
    %2097 = vmatpush1.msra.mxu0 %v718
    %2098 = vmatprep.subr.mxu0 %v725
    %2099 = vmatpush1.msra.mxu0 %v724
    %2100 = vmatprep.subr.mxu0 %v731
    %2101 = vmatpush1.msra.mxu0 %v730
    %2102 = vmatprep.subr.mxu0 %v737
    %2103 = vmatpush1.msra.mxu0 %v736
    %2104 = vmatprep.subr.mxu0 %v743
    %2105 = vmatpush1.msra.mxu0 %v742
    %2106 = vmatprep.subr.mxu0 %v749
    %2107 = vmatpush1.msra.mxu0 %v748
    %2108 = vmatprep.subr.mxu0 %v755
    %2109 = vmatpush1.msra.mxu0 %v754
    %2110 = vmatprep.subr.mxu0 %v761
    %2111 = vmatpush1.msra.mxu0 %v760
    %2112 = vmatprep.subr.mxu0 %v767
    %2113 = vmatpush1.msra.mxu0 %v766
    %2114 = vmatprep.subr.mxu0 %v773
    %2115 = vmatpush1.msra.mxu0 %v772
    %2116 = vmatprep.subr.mxu0 %v779
    %2117 = vmatpush1.msra.mxu0 %v778
    %2118 = vmatprep.subr.mxu0 %v785
    %2119 = vmatpush1.msra.mxu0 %v784
    %2120 = vmatprep.subr.mxu0 %v791
    %2121 = vmatpush1.msra.mxu0 %v790
    %2122 = vmatprep.subr.mxu0 %v797
    %2123 = vmatpush1.msra.mxu0 %v796
    %2124 = vmatprep.subr.mxu0 %v803
    %2125 = vmatpush1.msra.mxu0 %v802
    %2126 = vmatprep.subr.mxu0 %v809
    %2127 = vmatpush1.msra.mxu0 %v808
    %2128 = vmatprep.subr.mxu0 %v815
    %2129 = vmatpush1.msra.mxu0 %v814
    %2130 = vmatprep.subr.mxu0 %v821
    %2131 = vmatpush1.msra.mxu0 %v820
    %2132 = vmatprep.subr.mxu0 %v827
    %2133 = vmatpush1.msra.mxu0 %v826
    %2134 = vmatprep.subr.mxu0 %v833
    %2135 = vmatpush1.msra.mxu0 %v832
    %2136 = vmatprep.subr.mxu0 %v839
    %2137 = vmatpush1.msra.mxu0 %v838
    %2138 = vmatprep.subr.mxu0 %v845
    %2139 = vmatpush1.msra.mxu0 %v844
    %2140 = vmatprep.subr.mxu0 %v851
    %2141 = vmatpush1.msra.mxu0 %v850
    %2142 = vmatprep.subr.mxu0 %v857
    %2143 = vmatpush1.msra.mxu0 %v856
    %2144 = vmatprep.subr.mxu0 %v863
    %2145 = vmatpush1.msra.mxu0 %v862
    %2146 = vmatprep.subr.mxu0 %v869
    %2147 = vmatpush1.msra.mxu0 %v868
    %2148 = vmatprep.subr.mxu0 %v875
    %2149 = vmatpush1.msra.mxu0 %v874
    %2150 = vmatprep.subr.mxu0 %v881
    %2151 = vmatpush1.msra.mxu0 %v880
    %2152 = vmatprep.mubr.f32.mxu0 %v1936
    %2153 = vmatmul.mubr.f32.gmra.mrb[0].mxu0 %v1935
    %v2154 = vpop.f32.mrb[0].mxu0
    %v2155 = vadd.f32 0.0, %v2154
    %v2156 = vpop.f32.mrb[0].mxu0
    %v2157 = vadd.f32 0.0, %v2156
    %2158 = vdwg.mxu0
    %v2159 = vadd.f32 %v1940, %v2013
    %v2160 = vadd.f32 %v1941, %v2015
    %v2161 = vxor.u32 %v2159, 2147483648
    %v2162 = vxor.u32 %v2160, 2147483648
    %v2163 = vmul.f32 %v2161, 1.442695
    %v2164 = vpow.pop %v2163
    %v2165 = vmul.f32 %v2162, 1.442695
    %v2166 = vpow.pop %v2165
    %v2167 = vadd.f32 %v2164, 1.0
    %v2168 = vadd.f32 %v2166, 1.0
    %v2169 = vrcp.pop %v2167
    %v2170 = vmul.f32 1.0, %v2169
    %v2171 = vrcp.pop %v2168
    %v2172 = vmul.f32 1.0, %v2171
    %v2173 = vadd.f32 %v1942, %v2084
    %v2174 = vadd.f32 %v1943, %v2086
    %v2175 = vxor.u32 %v2173, 2147483648
    %v2176 = vxor.u32 %v2174, 2147483648
    %v2177 = vmul.f32 %v2175, 1.442695
    %v2178 = vpow.pop %v2177
    %v2179 = vmul.f32 %v2176, 1.442695
    %v2180 = vpow.pop %v2179
    %v2181 = vadd.f32 %v2178, 1.0
    %v2182 = vadd.f32 %v2180, 1.0
    %v2183 = vrcp.pop %v2181
    %v2184 = vmul.f32 1.0, %v2183
    %v2185 = vrcp.pop %v2182
    %v2186 = vmul.f32 1.0, %v2185
    %v2187 = vadd.f32 %v2155, %v674
    %v2188 = vadd.f32 %v2157, %v678
    %v2189 = vmul.f32 %v2170, %v2187
    %v2190 = vmul.f32 %v2172, %v2188
    %v2191 = vadd.f32 %v1944, %v2189
    %v2192 = vadd.f32 %v1945, %v2190
    %v2193 = vtanh.pop %v2191
    %v2194 = vtanh.pop %v2192
    %v2195 = vsub.f32 1.0, %v2184
    %v2196 = vsub.f32 1.0, %v2186
    %v2197 = vmul.f32 %v2195, %v2193
    %v2198 = vmul.f32 %v2196, %v2194
    %v2199 = vmul.f32 %v2184, %v1935
    %v2200 = vmul.f32 %v2186, %v1936
    %v2201 = vadd.f32 %v2197, %v2199
    %v2202 = vadd.f32 %v2198, %v2200
    %s2203 = smul.u32 5, 6
    %s2204 = smul.addr %s2203, 8
    %s2205 = scalar_lea.vmem [#allocation2], %s2204
    %v2206 = vld [vmem:[%s2205] sm:$0xff]
    %v2207 = vld [vmem:[%s2205 + $0x8] sm:$0xff]
    %v2208 = vld [vmem:[%s2205 + $0x10] sm:$0xff]
    %v2209 = vld [vmem:[%s2205 + $0x18] sm:$0xff]
    %v2210 = vld [vmem:[%s2205 + $0x20] sm:$0xff]
    %v2211 = vld [vmem:[%s2205 + $0x28] sm:$0xff]
    %2212 = vmatprep.subr.mxu0 %v691
    %2213 = vmatpush1.msra.mxu0 %v690
    %2214 = vmatprep.subr.mxu0 %v697
    %2215 = vmatpush1.msra.mxu0 %v696
    %2216 = vmatprep.subr.mxu0 %v703
    %2217 = vmatpush1.msra.mxu0 %v702
    %2218 = vmatprep.subr.mxu0 %v709
    %2219 = vmatpush1.msra.mxu0 %v708
    %2220 = vmatprep.subr.mxu0 %v715
    %2221 = vmatpush1.msra.mxu0 %v714
    %2222 = vmatprep.subr.mxu0 %v721
    %2223 = vmatpush1.msra.mxu0 %v720
    %2224 = vmatprep.subr.mxu0 %v727
    %2225 = vmatpush1.msra.mxu0 %v726
    %2226 = vmatprep.subr.mxu0 %v733
    %2227 = vmatpush1.msra.mxu0 %v732
    %2228 = vmatprep.subr.mxu0 %v739
    %2229 = vmatpush1.msra.mxu0 %v738
    %2230 = vmatprep.subr.mxu0 %v745
    %2231 = vmatpush1.msra.mxu0 %v744
    %2232 = vmatprep.subr.mxu0 %v751
    %2233 = vmatpush1.msra.mxu0 %v750
    %2234 = vmatprep.subr.mxu0 %v757
    %2235 = vmatpush1.msra.mxu0 %v756
    %2236 = vmatprep.subr.mxu0 %v763
    %2237 = vmatpush1.msra.mxu0 %v762
    %2238 = vmatprep.subr.mxu0 %v769
    %2239 = vmatpush1.msra.mxu0 %v768
    %2240 = vmatprep.subr.mxu0 %v775
    %2241 = vmatpush1.msra.mxu0 %v774
    %2242 = vmatprep.subr.mxu0 %v781
    %2243 = vmatpush1.msra.mxu0 %v780
    %2244 = vmatprep.subr.mxu0 %v787
    %2245 = vmatpush1.msra.mxu0 %v786
    %2246 = vmatprep.subr.mxu0 %v793
    %2247 = vmatpush1.msra.mxu0 %v792
    %2248 = vmatprep.subr.mxu0 %v799
    %2249 = vmatpush1.msra.mxu0 %v798
    %2250 = vmatprep.subr.mxu0 %v805
    %2251 = vmatpush1.msra.mxu0 %v804
    %2252 = vmatprep.subr.mxu0 %v811
    %2253 = vmatpush1.msra.mxu0 %v810
    %2254 = vmatprep.subr.mxu0 %v817
    %2255 = vmatpush1.msra.mxu0 %v816
    %2256 = vmatprep.subr.mxu0 %v823
    %2257 = vmatpush1.msra.mxu0 %v822
    %2258 = vmatprep.subr.mxu0 %v829
    %2259 = vmatpush1.msra.mxu0 %v828
    %2260 = vmatprep.subr.mxu0 %v835
    %2261 = vmatpush1.msra.mxu0 %v834
    %2262 = vmatprep.subr.mxu0 %v841
    %2263 = vmatpush1.msra.mxu0 %v840
    %2264 = vmatprep.subr.mxu0 %v847
    %2265 = vmatpush1.msra.mxu0 %v846
    %2266 = vmatprep.subr.mxu0 %v853
    %2267 = vmatpush1.msra.mxu0 %v852
    %2268 = vmatprep.subr.mxu0 %v859
    %2269 = vmatpush1.msra.mxu0 %v858
    %2270 = vmatprep.subr.mxu0 %v865
    %2271 = vmatpush1.msra.mxu0 %v864
    %2272 = vmatprep.subr.mxu0 %v871
    %2273 = vmatpush1.msra.mxu0 %v870
    %2274 = vmatprep.subr.mxu0 %v877
    %2275 = vmatpush1.msra.mxu0 %v876
    %2276 = vmatprep.mubr.f32.mxu0 %v2202
    %2277 = vmatmul.mubr.f32.gmra.mrb[0].mxu0 %v2201
    %v2278 = vpop.f32.mrb[0].mxu0
    %v2279 = vadd.f32 0.0, %v2278
    %v2280 = vpop.f32.mrb[0].mxu0
    %v2281 = vadd.f32 0.0, %v2280
    %2282 = vdwg.mxu0
    %2283 = vmatprep.subr.mxu0 %v693
    %2284 = vmatpush1.msra.mxu0 %v692
    %2285 = vmatprep.subr.mxu0 %v699
    %2286 = vmatpush1.msra.mxu0 %v698
    %2287 = vmatprep.subr.mxu0 %v705
    %2288 = vmatpush1.msra.mxu0 %v704
    %2289 = vmatprep.subr.mxu0 %v711
    %2290 = vmatpush1.msra.mxu0 %v710
    %2291 = vmatprep.subr.mxu0 %v717
    %2292 = vmatpush1.msra.mxu0 %v716
    %2293 = vmatprep.subr.mxu0 %v723
    %2294 = vmatpush1.msra.mxu0 %v722
    %2295 = vmatprep.subr.mxu0 %v729
    %2296 = vmatpush1.msra.mxu0 %v728
    %2297 = vmatprep.subr.mxu0 %v735
    %2298 = vmatpush1.msra.mxu0 %v734
    %2299 = vmatprep.subr.mxu0 %v741
    %2300 = vmatpush1.msra.mxu0 %v740
    %2301 = vmatprep.subr.mxu0 %v747
    %2302 = vmatpush1.msra.mxu0 %v746
    %2303 = vmatprep.subr.mxu0 %v753
    %2304 = vmatpush1.msra.mxu0 %v752
    %2305 = vmatprep.subr.mxu0 %v759
    %2306 = vmatpush1.msra.mxu0 %v758
    %2307 = vmatprep.subr.mxu0 %v765
    %2308 = vmatpush1.msra.mxu0 %v764
    %2309 = vmatprep.subr.mxu0 %v771
    %2310 = vmatpush1.msra.mxu0 %v770
    %2311 = vmatprep.subr.mxu0 %v777
    %2312 = vmatpush1.msra.mxu0 %v776
    %2313 = vmatprep.subr.mxu0 %v783
    %2314 = vmatpush1.msra.mxu0 %v782
    %2315 = vmatprep.subr.mxu0 %v789
    %2316 = vmatpush1.msra.mxu0 %v788
    %2317 = vmatprep.subr.mxu0 %v795
    %2318 = vmatpush1.msra.mxu0 %v794
    %2319 = vmatprep.subr.mxu0 %v801
    %2320 = vmatpush1.msra.mxu0 %v800
    %2321 = vmatprep.subr.mxu0 %v807
    %2322 = vmatpush1.msra.mxu0 %v806
    %2323 = vmatprep.subr.mxu0 %v813
    %2324 = vmatpush1.msra.mxu0 %v812
    %2325 = vmatprep.subr.mxu0 %v819
    %2326 = vmatpush1.msra.mxu0 %v818
    %2327 = vmatprep.subr.mxu0 %v825
    %2328 = vmatpush1.msra.mxu0 %v824
    %2329 = vmatprep.subr.mxu0 %v831
    %2330 = vmatpush1.msra.mxu0 %v830
    %2331 = vmatprep.subr.mxu0 %v837
    %2332 = vmatpush1.msra.mxu0 %v836
    %2333 = vmatprep.subr.mxu0 %v843
    %2334 = vmatpush1.msra.mxu0 %v842
    %2335 = vmatprep.subr.mxu0 %v849
    %2336 = vmatpush1.msra.mxu0 %v848
    %2337 = vmatprep.subr.mxu0 %v855
    %2338 = vmatpush1.msra.mxu0 %v854
    %2339 = vmatprep.subr.mxu0 %v861
    %2340 = vmatpush1.msra.mxu0 %v860
    %2341 = vmatprep.subr.mxu0 %v867
    %2342 = vmatpush1.msra.mxu0 %v866
    %2343 = vmatprep.subr.mxu0 %v873
    %2344 = vmatpush1.msra.mxu0 %v872
    %2345 = vmatprep.subr.mxu0 %v879
    %2346 = vmatpush1.msra.mxu0 %v878
    %2347 = vmatprep.mubr.f32.mxu0 %v2202
    %2348 = vmatmul.mubr.f32.gmra.mrb[0].mxu0 %v2201
    %v2349 = vpop.f32.mrb[0].mxu0
    %v2350 = vadd.f32 0.0, %v2349
    %v2351 = vpop.f32.mrb[0].mxu0
    %v2352 = vadd.f32 0.0, %v2351
    %2353 = vdwg.mxu0
    %2354 = vmatprep.subr.mxu0 %v695
    %2355 = vmatpush1.msra.mxu0 %v694
    %2356 = vmatprep.subr.mxu0 %v701
    %2357 = vmatpush1.msra.mxu0 %v700
    %2358 = vmatprep.subr.mxu0 %v707
    %2359 = vmatpush1.msra.mxu0 %v706
    %2360 = vmatprep.subr.mxu0 %v713
    %2361 = vmatpush1.msra.mxu0 %v712
    %2362 = vmatprep.subr.mxu0 %v719
    %2363 = vmatpush1.msra.mxu0 %v718
    %2364 = vmatprep.subr.mxu0 %v725
    %2365 = vmatpush1.msra.mxu0 %v724
    %2366 = vmatprep.subr.mxu0 %v731
    %2367 = vmatpush1.msra.mxu0 %v730
    %2368 = vmatprep.subr.mxu0 %v737
    %2369 = vmatpush1.msra.mxu0 %v736
    %2370 = vmatprep.subr.mxu0 %v743
    %2371 = vmatpush1.msra.mxu0 %v742
    %2372 = vmatprep.subr.mxu0 %v749
    %2373 = vmatpush1.msra.mxu0 %v748
    %2374 = vmatprep.subr.mxu0 %v755
    %2375 = vmatpush1.msra.mxu0 %v754
    %2376 = vmatprep.subr.mxu0 %v761
    %2377 = vmatpush1.msra.mxu0 %v760
    %2378 = vmatprep.subr.mxu0 %v767
    %2379 = vmatpush1.msra.mxu0 %v766
    %2380 = vmatprep.subr.mxu0 %v773
    %2381 = vmatpush1.msra.mxu0 %v772
    %2382 = vmatprep.subr.mxu0 %v779
    %2383 = vmatpush1.msra.mxu0 %v778
    %2384 = vmatprep.subr.mxu0 %v785
    %2385 = vmatpush1.msra.mxu0 %v784
    %2386 = vmatprep.subr.mxu0 %v791
    %2387 = vmatpush1.msra.mxu0 %v790
    %2388 = vmatprep.subr.mxu0 %v797
    %2389 = vmatpush1.msra.mxu0 %v796
    %2390 = vmatprep.subr.mxu0 %v803
    %2391 = vmatpush1.msra.mxu0 %v802
    %2392 = vmatprep.subr.mxu0 %v809
    %2393 = vmatpush1.msra.mxu0 %v808
    %2394 = vmatprep.subr.mxu0 %v815
    %2395 = vmatpush1.msra.mxu0 %v814
    %2396 = vmatprep.subr.mxu0 %v821
    %2397 = vmatpush1.msra.mxu0 %v820
    %2398 = vmatprep.subr.mxu0 %v827
    %2399 = vmatpush1.msra.mxu0 %v826
    %2400 = vmatprep.subr.mxu0 %v833
    %2401 = vmatpush1.msra.mxu0 %v832
    %2402 = vmatprep.subr.mxu0 %v839
    %2403 = vmatpush1.msra.mxu0 %v838
    %2404 = vmatprep.subr.mxu0 %v845
    %2405 = vmatpush1.msra.mxu0 %v844
    %2406 = vmatprep.subr.mxu0 %v851
    %2407 = vmatpush1.msra.mxu0 %v850
    %2408 = vmatprep.subr.mxu0 %v857
    %2409 = vmatpush1.msra.mxu0 %v856
    %2410 = vmatprep.subr.mxu0 %v863
    %2411 = vmatpush1.msra.mxu0 %v862
    %2412 = vmatprep.subr.mxu0 %v869
    %2413 = vmatpush1.msra.mxu0 %v868
    %2414 = vmatprep.subr.mxu0 %v875
    %2415 = vmatpush1.msra.mxu0 %v874
    %2416 = vmatprep.subr.mxu0 %v881
    %2417 = vmatpush1.msra.mxu0 %v880
    %2418 = vmatprep.mubr.f32.mxu0 %v2202
    %2419 = vmatmul.mubr.f32.gmra.mrb[0].mxu0 %v2201
    %v2420 = vpop.f32.mrb[0].mxu0
    %v2421 = vadd.f32 0.0, %v2420
    %v2422 = vpop.f32.mrb[0].mxu0
    %v2423 = vadd.f32 0.0, %v2422
    %2424 = vdwg.mxu0
    %v2425 = vadd.f32 %v2206, %v2279
    %v2426 = vadd.f32 %v2207, %v2281
    %v2427 = vxor.u32 %v2425, 2147483648
    %v2428 = vxor.u32 %v2426, 2147483648
    %v2429 = vmul.f32 %v2427, 1.442695
    %v2430 = vpow.pop %v2429
    %v2431 = vmul.f32 %v2428, 1.442695
    %v2432 = vpow.pop %v2431
    %v2433 = vadd.f32 %v2430, 1.0
    %v2434 = vadd.f32 %v2432, 1.0
    %v2435 = vrcp.pop %v2433
    %v2436 = vmul.f32 1.0, %v2435
    %v2437 = vrcp.pop %v2434
    %v2438 = vmul.f32 1.0, %v2437
    %v2439 = vadd.f32 %v2208, %v2350
    %v2440 = vadd.f32 %v2209, %v2352
    %v2441 = vxor.u32 %v2439, 2147483648
    %v2442 = vxor.u32 %v2440, 2147483648
    %v2443 = vmul.f32 %v2441, 1.442695
    %v2444 = vpow.pop %v2443
    %v2445 = vmul.f32 %v2442, 1.442695
    %v2446 = vpow.pop %v2445
    %v2447 = vadd.f32 %v2444, 1.0
    %v2448 = vadd.f32 %v2446, 1.0
    %v2449 = vrcp.pop %v2447
    %v2450 = vmul.f32 1.0, %v2449
    %v2451 = vrcp.pop %v2448
    %v2452 = vmul.f32 1.0, %v2451
    %v2453 = vadd.f32 %v2421, %v674
    %v2454 = vadd.f32 %v2423, %v678
    %v2455 = vmul.f32 %v2436, %v2453
    %v2456 = vmul.f32 %v2438, %v2454
    %v2457 = vadd.f32 %v2210, %v2455
    %v2458 = vadd.f32 %v2211, %v2456
    %v2459 = vtanh.pop %v2457
    %v2460 = vtanh.pop %v2458
    %v2461 = vsub.f32 1.0, %v2450
    %v2462 = vsub.f32 1.0, %v2452
    %v2463 = vmul.f32 %v2461, %v2459
    %v2464 = vmul.f32 %v2462, %v2460
    %v2465 = vmul.f32 %v2450, %v2201
    %v2466 = vmul.f32 %v2452, %v2202
    %v2467 = vadd.f32 %v2463, %v2465
    %v2468 = vadd.f32 %v2464, %v2466
    %s2469 = smul.u32 6, 6
    %s2470 = smul.addr %s2469, 8
    %s2471 = scalar_lea.vmem [#allocation2], %s2470
    %v2472 = vld [vmem:[%s2471] sm:$0xff]
    %v2473 = vld [vmem:[%s2471 + $0x8] sm:$0xff]
    %v2474 = vld [vmem:[%s2471 + $0x10] sm:$0xff]
    %v2475 = vld [vmem:[%s2471 + $0x18] sm:$0xff]
    %v2476 = vld [vmem:[%s2471 + $0x20] sm:$0xff]
    %v2477 = vld [vmem:[%s2471 + $0x28] sm:$0xff]
    %2478 = vmatprep.subr.mxu0 %v691
    %2479 = vmatpush1.msra.mxu0 %v690
    %2480 = vmatprep.subr.mxu0 %v697
    %2481 = vmatpush1.msra.mxu0 %v696
    %2482 = vmatprep.subr.mxu0 %v703
    %2483 = vmatpush1.msra.mxu0 %v702
    %2484 = vmatprep.subr.mxu0 %v709
    %2485 = vmatpush1.msra.mxu0 %v708
    %2486 = vmatprep.subr.mxu0 %v715
    %2487 = vmatpush1.msra.mxu0 %v714
    %2488 = vmatprep.subr.mxu0 %v721
    %2489 = vmatpush1.msra.mxu0 %v720
    %2490 = vmatprep.subr.mxu0 %v727
    %2491 = vmatpush1.msra.mxu0 %v726
    %2492 = vmatprep.subr.mxu0 %v733
    %2493 = vmatpush1.msra.mxu0 %v732
    %2494 = vmatprep.subr.mxu0 %v739
    %2495 = vmatpush1.msra.mxu0 %v738
    %2496 = vmatprep.subr.mxu0 %v745
    %2497 = vmatpush1.msra.mxu0 %v744
    %2498 = vmatprep.subr.mxu0 %v751
    %2499 = vmatpush1.msra.mxu0 %v750
    %2500 = vmatprep.subr.mxu0 %v757
    %2501 = vmatpush1.msra.mxu0 %v756
    %2502 = vmatprep.subr.mxu0 %v763
    %2503 = vmatpush1.msra.mxu0 %v762
    %2504 = vmatprep.subr.mxu0 %v769
    %2505 = vmatpush1.msra.mxu0 %v768
    %2506 = vmatprep.subr.mxu0 %v775
    %2507 = vmatpush1.msra.mxu0 %v774
    %2508 = vmatprep.subr.mxu0 %v781
    %2509 = vmatpush1.msra.mxu0 %v780
    %2510 = vmatprep.subr.mxu0 %v787
    %2511 = vmatpush1.msra.mxu0 %v786
    %2512 = vmatprep.subr.mxu0 %v793
    %2513 = vmatpush1.msra.mxu0 %v792
    %2514 = vmatprep.subr.mxu0 %v799
    %2515 = vmatpush1.msra.mxu0 %v798
    %2516 = vmatprep.subr.mxu0 %v805
    %2517 = vmatpush1.msra.mxu0 %v804
    %2518 = vmatprep.subr.mxu0 %v811
    %2519 = vmatpush1.msra.mxu0 %v810
    %2520 = vmatprep.subr.mxu0 %v817
    %2521 = vmatpush1.msra.mxu0 %v816
    %2522 = vmatprep.subr.mxu0 %v823
    %2523 = vmatpush1.msra.mxu0 %v822
    %2524 = vmatprep.subr.mxu0 %v829
    %2525 = vmatpush1.msra.mxu0 %v828
    %2526 = vmatprep.subr.mxu0 %v835
    %2527 = vmatpush1.msra.mxu0 %v834
    %2528 = vmatprep.subr.mxu0 %v841
    %2529 = vmatpush1.msra.mxu0 %v840
    %2530 = vmatprep.subr.mxu0 %v847
    %2531 = vmatpush1.msra.mxu0 %v846
    %2532 = vmatprep.subr.mxu0 %v853
    %2533 = vmatpush1.msra.mxu0 %v852
    %2534 = vmatprep.subr.mxu0 %v859
    %2535 = vmatpush1.msra.mxu0 %v858
    %2536 = vmatprep.subr.mxu0 %v865
    %2537 = vmatpush1.msra.mxu0 %v864
    %2538 = vmatprep.subr.mxu0 %v871
    %2539 = vmatpush1.msra.mxu0 %v870
    %2540 = vmatprep.subr.mxu0 %v877
    %2541 = vmatpush1.msra.mxu0 %v876
    %2542 = vmatprep.mubr.f32.mxu0 %v2468
    %2543 = vmatmul.mubr.f32.gmra.mrb[0].mxu0 %v2467
    %v2544 = vpop.f32.mrb[0].mxu0
    %v2545 = vadd.f32 0.0, %v2544
    %v2546 = vpop.f32.mrb[0].mxu0
    %v2547 = vadd.f32 0.0, %v2546
    %2548 = vdwg.mxu0
    %2549 = vmatprep.subr.mxu0 %v693
    %2550 = vmatpush1.msra.mxu0 %v692
    %2551 = vmatprep.subr.mxu0 %v699
    %2552 = vmatpush1.msra.mxu0 %v698
    %2553 = vmatprep.subr.mxu0 %v705
    %2554 = vmatpush1.msra.mxu0 %v704
    %2555 = vmatprep.subr.mxu0 %v711
    %2556 = vmatpush1.msra.mxu0 %v710
    %2557 = vmatprep.subr.mxu0 %v717
    %2558 = vmatpush1.msra.mxu0 %v716
    %2559 = vmatprep.subr.mxu0 %v723
    %2560 = vmatpush1.msra.mxu0 %v722
    %2561 = vmatprep.subr.mxu0 %v729
    %2562 = vmatpush1.msra.mxu0 %v728
    %2563 = vmatprep.subr.mxu0 %v735
    %2564 = vmatpush1.msra.mxu0 %v734
    %2565 = vmatprep.subr.mxu0 %v741
    %2566 = vmatpush1.msra.mxu0 %v740
    %2567 = vmatprep.subr.mxu0 %v747
    %2568 = vmatpush1.msra.mxu0 %v746
    %2569 = vmatprep.subr.mxu0 %v753
    %2570 = vmatpush1.msra.mxu0 %v752
    %2571 = vmatprep.subr.mxu0 %v759
    %2572 = vmatpush1.msra.mxu0 %v758
    %2573 = vmatprep.subr.mxu0 %v765
    %2574 = vmatpush1.msra.mxu0 %v764
    %2575 = vmatprep.subr.mxu0 %v771
    %2576 = vmatpush1.msra.mxu0 %v770
    %2577 = vmatprep.subr.mxu0 %v777
    %2578 = vmatpush1.msra.mxu0 %v776
    %2579 = vmatprep.subr.mxu0 %v783
    %2580 = vmatpush1.msra.mxu0 %v782
    %2581 = vmatprep.subr.mxu0 %v789
    %2582 = vmatpush1.msra.mxu0 %v788
    %2583 = vmatprep.subr.mxu0 %v795
    %2584 = vmatpush1.msra.mxu0 %v794
    %2585 = vmatprep.subr.mxu0 %v801
    %2586 = vmatpush1.msra.mxu0 %v800
    %2587 = vmatprep.subr.mxu0 %v807
    %2588 = vmatpush1.msra.mxu0 %v806
    %2589 = vmatprep.subr.mxu0 %v813
    %2590 = vmatpush1.msra.mxu0 %v812
    %2591 = vmatprep.subr.mxu0 %v819
    %2592 = vmatpush1.msra.mxu0 %v818
    %2593 = vmatprep.subr.mxu0 %v825
    %2594 = vmatpush1.msra.mxu0 %v824
    %2595 = vmatprep.subr.mxu0 %v831
    %2596 = vmatpush1.msra.mxu0 %v830
    %2597 = vmatprep.subr.mxu0 %v837
    %2598 = vmatpush1.msra.mxu0 %v836
    %2599 = vmatprep.subr.mxu0 %v843
    %2600 = vmatpush1.msra.mxu0 %v842
    %2601 = vmatprep.subr.mxu0 %v849
    %2602 = vmatpush1.msra.mxu0 %v848
    %2603 = vmatprep.subr.mxu0 %v855
    %2604 = vmatpush1.msra.mxu0 %v854
    %2605 = vmatprep.subr.mxu0 %v861
    %2606 = vmatpush1.msra.mxu0 %v860
    %2607 = vmatprep.subr.mxu0 %v867
    %2608 = vmatpush1.msra.mxu0 %v866
    %2609 = vmatprep.subr.mxu0 %v873
    %2610 = vmatpush1.msra.mxu0 %v872
    %2611 = vmatprep.subr.mxu0 %v879
    %2612 = vmatpush1.msra.mxu0 %v878
    %2613 = vmatprep.mubr.f32.mxu0 %v2468
    %2614 = vmatmul.mubr.f32.gmra.mrb[0].mxu0 %v2467
    %v2615 = vpop.f32.mrb[0].mxu0
    %v2616 = vadd.f32 0.0, %v2615
    %v2617 = vpop.f32.mrb[0].mxu0
    %v2618 = vadd.f32 0.0, %v2617
    %2619 = vdwg.mxu0
    %2620 = vmatprep.subr.mxu0 %v695
    %2621 = vmatpush1.msra.mxu0 %v694
    %2622 = vmatprep.subr.mxu0 %v701
    %2623 = vmatpush1.msra.mxu0 %v700
    %2624 = vmatprep.subr.mxu0 %v707
    %2625 = vmatpush1.msra.mxu0 %v706
    %2626 = vmatprep.subr.mxu0 %v713
    %2627 = vmatpush1.msra.mxu0 %v712
    %2628 = vmatprep.subr.mxu0 %v719
    %2629 = vmatpush1.msra.mxu0 %v718
    %2630 = vmatprep.subr.mxu0 %v725
    %2631 = vmatpush1.msra.mxu0 %v724
    %2632 = vmatprep.subr.mxu0 %v731
    %2633 = vmatpush1.msra.mxu0 %v730
    %2634 = vmatprep.subr.mxu0 %v737
    %2635 = vmatpush1.msra.mxu0 %v736
    %2636 = vmatprep.subr.mxu0 %v743
    %2637 = vmatpush1.msra.mxu0 %v742
    %2638 = vmatprep.subr.mxu0 %v749
    %2639 = vmatpush1.msra.mxu0 %v748
    %2640 = vmatprep.subr.mxu0 %v755
    %2641 = vmatpush1.msra.mxu0 %v754
    %2642 = vmatprep.subr.mxu0 %v761
    %2643 = vmatpush1.msra.mxu0 %v760
    %2644 = vmatprep.subr.mxu0 %v767
    %2645 = vmatpush1.msra.mxu0 %v766
    %2646 = vmatprep.subr.mxu0 %v773
    %2647 = vmatpush1.msra.mxu0 %v772
    %2648 = vmatprep.subr.mxu0 %v779
    %2649 = vmatpush1.msra.mxu0 %v778
    %2650 = vmatprep.subr.mxu0 %v785
    %2651 = vmatpush1.msra.mxu0 %v784
    %2652 = vmatprep.subr.mxu0 %v791
    %2653 = vmatpush1.msra.mxu0 %v790
    %2654 = vmatprep.subr.mxu0 %v797
    %2655 = vmatpush1.msra.mxu0 %v796
    %2656 = vmatprep.subr.mxu0 %v803
    %2657 = vmatpush1.msra.mxu0 %v802
    %2658 = vmatprep.subr.mxu0 %v809
    %2659 = vmatpush1.msra.mxu0 %v808
    %2660 = vmatprep.subr.mxu0 %v815
    %2661 = vmatpush1.msra.mxu0 %v814
    %2662 = vmatprep.subr.mxu0 %v821
    %2663 = vmatpush1.msra.mxu0 %v820
    %2664 = vmatprep.subr.mxu0 %v827
    %2665 = vmatpush1.msra.mxu0 %v826
    %2666 = vmatprep.subr.mxu0 %v833
    %2667 = vmatpush1.msra.mxu0 %v832
    %2668 = vmatprep.subr.mxu0 %v839
    %2669 = vmatpush1.msra.mxu0 %v838
    %2670 = vmatprep.subr.mxu0 %v845
    %2671 = vmatpush1.msra.mxu0 %v844
    %2672 = vmatprep.subr.mxu0 %v851
    %2673 = vmatpush1.msra.mxu0 %v850
    %2674 = vmatprep.subr.mxu0 %v857
    %2675 = vmatpush1.msra.mxu0 %v856
    %2676 = vmatprep.subr.mxu0 %v863
    %2677 = vmatpush1.msra.mxu0 %v862
    %2678 = vmatprep.subr.mxu0 %v869
    %2679 = vmatpush1.msra.mxu0 %v868
    %2680 = vmatprep.subr.mxu0 %v875
    %2681 = vmatpush1.msra.mxu0 %v874
    %2682 = vmatprep.subr.mxu0 %v881
    %2683 = vmatpush1.msra.mxu0 %v880
    %2684 = vmatprep.mubr.f32.mxu0 %v2468
    %2685 = vmatmul.mubr.f32.gmra.mrb[0].mxu0 %v2467
    %v2686 = vpop.f32.mrb[0].mxu0
    %v2687 = vadd.f32 0.0, %v2686
    %v2688 = vpop.f32.mrb[0].mxu0
    %v2689 = vadd.f32 0.0, %v2688
    %2690 = vdwg.mxu0
    %v2691 = vadd.f32 %v2472, %v2545
    %v2692 = vadd.f32 %v2473, %v2547
    %v2693 = vxor.u32 %v2691, 2147483648
    %v2694 = vxor.u32 %v2692, 2147483648
    %v2695 = vmul.f32 %v2693, 1.442695
    %v2696 = vpow.pop %v2695
    %v2697 = vmul.f32 %v2694, 1.442695
    %v2698 = vpow.pop %v2697
    %v2699 = vadd.f32 %v2696, 1.0
    %v2700 = vadd.f32 %v2698, 1.0
    %v2701 = vrcp.pop %v2699
    %v2702 = vmul.f32 1.0, %v2701
    %v2703 = vrcp.pop %v2700
    %v2704 = vmul.f32 1.0, %v2703
    %v2705 = vadd.f32 %v2474, %v2616
    %v2706 = vadd.f32 %v2475, %v2618
    %v2707 = vxor.u32 %v2705, 2147483648
    %v2708 = vxor.u32 %v2706, 2147483648
    %v2709 = vmul.f32 %v2707, 1.442695
    %v2710 = vpow.pop %v2709
    %v2711 = vmul.f32 %v2708, 1.442695
    %v2712 = vpow.pop %v2711
    %v2713 = vadd.f32 %v2710, 1.0
    %v2714 = vadd.f32 %v2712, 1.0
    %v2715 = vrcp.pop %v2713
    %v2716 = vmul.f32 1.0, %v2715
    %v2717 = vrcp.pop %v2714
    %v2718 = vmul.f32 1.0, %v2717
    %v2719 = vadd.f32 %v2687, %v674
    %v2720 = vadd.f32 %v2689, %v678
    %v2721 = vmul.f32 %v2702, %v2719
    %v2722 = vmul.f32 %v2704, %v2720
    %v2723 = vadd.f32 %v2476, %v2721
    %v2724 = vadd.f32 %v2477, %v2722
    %v2725 = vtanh.pop %v2723
    %v2726 = vtanh.pop %v2724
    %v2727 = vsub.f32 1.0, %v2716
    %v2728 = vsub.f32 1.0, %v2718
    %v2729 = vmul.f32 %v2727, %v2725
    %v2730 = vmul.f32 %v2728, %v2726
    %v2731 = vmul.f32 %v2716, %v2467
    %v2732 = vmul.f32 %v2718, %v2468
    %v2733 = vadd.f32 %v2729, %v2731
    %v2734 = vadd.f32 %v2730, %v2732
    %s2735 = smul.u32 7, 6
    %s2736 = smul.addr %s2735, 8
    %s2737 = scalar_lea.vmem [#allocation2], %s2736
    %v2738 = vld [vmem:[%s2737] sm:$0xff]
    %v2739 = vld [vmem:[%s2737 + $0x8] sm:$0xff]
    %v2740 = vld [vmem:[%s2737 + $0x10] sm:$0xff]
    %v2741 = vld [vmem:[%s2737 + $0x18] sm:$0xff]
    %v2742 = vld [vmem:[%s2737 + $0x20] sm:$0xff]
    %v2743 = vld [vmem:[%s2737 + $0x28] sm:$0xff]
    %2744 = vmatprep.subr.mxu0 %v691
    %2745 = vmatpush1.msra.mxu0 %v690
    %2746 = vmatprep.subr.mxu0 %v697
    %2747 = vmatpush1.msra.mxu0 %v696
    %2748 = vmatprep.subr.mxu0 %v703
    %2749 = vmatpush1.msra.mxu0 %v702
    %2750 = vmatprep.subr.mxu0 %v709
    %2751 = vmatpush1.msra.mxu0 %v708
    %2752 = vmatprep.subr.mxu0 %v715
    %2753 = vmatpush1.msra.mxu0 %v714
    %2754 = vmatprep.subr.mxu0 %v721
    %2755 = vmatpush1.msra.mxu0 %v720
    %2756 = vmatprep.subr.mxu0 %v727
    %2757 = vmatpush1.msra.mxu0 %v726
    %2758 = vmatprep.subr.mxu0 %v733
    %2759 = vmatpush1.msra.mxu0 %v732
    %2760 = vmatprep.subr.mxu0 %v739
    %2761 = vmatpush1.msra.mxu0 %v738
    %2762 = vmatprep.subr.mxu0 %v745
    %2763 = vmatpush1.msra.mxu0 %v744
    %2764 = vmatprep.subr.mxu0 %v751
    %2765 = vmatpush1.msra.mxu0 %v750
    %2766 = vmatprep.subr.mxu0 %v757
    %2767 = vmatpush1.msra.mxu0 %v756
    %2768 = vmatprep.subr.mxu0 %v763
    %2769 = vmatpush1.msra.mxu0 %v762
    %2770 = vmatprep.subr.mxu0 %v769
    %2771 = vmatpush1.msra.mxu0 %v768
    %2772 = vmatprep.subr.mxu0 %v775
    %2773 = vmatpush1.msra.mxu0 %v774
    %2774 = vmatprep.subr.mxu0 %v781
    %2775 = vmatpush1.msra.mxu0 %v780
    %2776 = vmatprep.subr.mxu0 %v787
    %2777 = vmatpush1.msra.mxu0 %v786
    %2778 = vmatprep.subr.mxu0 %v793
    %2779 = vmatpush1.msra.mxu0 %v792
    %2780 = vmatprep.subr.mxu0 %v799
    %2781 = vmatpush1.msra.mxu0 %v798
    %2782 = vmatprep.subr.mxu0 %v805
    %2783 = vmatpush1.msra.mxu0 %v804
    %2784 = vmatprep.subr.mxu0 %v811
    %2785 = vmatpush1.msra.mxu0 %v810
    %2786 = vmatprep.subr.mxu0 %v817
    %2787 = vmatpush1.msra.mxu0 %v816
    %2788 = vmatprep.subr.mxu0 %v823
    %2789 = vmatpush1.msra.mxu0 %v822
    %2790 = vmatprep.subr.mxu0 %v829
    %2791 = vmatpush1.msra.mxu0 %v828
    %2792 = vmatprep.subr.mxu0 %v835
    %2793 = vmatpush1.msra.mxu0 %v834
    %2794 = vmatprep.subr.mxu0 %v841
    %2795 = vmatpush1.msra.mxu0 %v840
    %2796 = vmatprep.subr.mxu0 %v847
    %2797 = vmatpush1.msra.mxu0 %v846
    %2798 = vmatprep.subr.mxu0 %v853
    %2799 = vmatpush1.msra.mxu0 %v852
    %2800 = vmatprep.subr.mxu0 %v859
    %2801 = vmatpush1.msra.mxu0 %v858
    %2802 = vmatprep.subr.mxu0 %v865
    %2803 = vmatpush1.msra.mxu0 %v864
    %2804 = vmatprep.subr.mxu0 %v871
    %2805 = vmatpush1.msra.mxu0 %v870
    %2806 = vmatprep.subr.mxu0 %v877
    %2807 = vmatpush1.msra.mxu0 %v876
    %2808 = vmatprep.mubr.f32.mxu0 %v2734
    %2809 = vmatmul.mubr.f32.gmra.mrb[0].mxu0 %v2733
    %v2810 = vpop.f32.mrb[0].mxu0
    %v2811 = vadd.f32 0.0, %v2810
    %v2812 = vpop.f32.mrb[0].mxu0
    %v2813 = vadd.f32 0.0, %v2812
    %2814 = vdwg.mxu0
    %2815 = vmatprep.subr.mxu0 %v693
    %2816 = vmatpush1.msra.mxu0 %v692
    %2817 = vmatprep.subr.mxu0 %v699
    %2818 = vmatpush1.msra.mxu0 %v698
    %2819 = vmatprep.subr.mxu0 %v705
    %2820 = vmatpush1.msra.mxu0 %v704
    %2821 = vmatprep.subr.mxu0 %v711
    %2822 = vmatpush1.msra.mxu0 %v710
    %2823 = vmatprep.subr.mxu0 %v717
    %2824 = vmatpush1.msra.mxu0 %v716
    %2825 = vmatprep.subr.mxu0 %v723
    %2826 = vmatpush1.msra.mxu0 %v722
    %2827 = vmatprep.subr.mxu0 %v729
    %2828 = vmatpush1.msra.mxu0 %v728
    %2829 = vmatprep.subr.mxu0 %v735
    %2830 = vmatpush1.msra.mxu0 %v734
    %2831 = vmatprep.subr.mxu0 %v741
    %2832 = vmatpush1.msra.mxu0 %v740
    %2833 = vmatprep.subr.mxu0 %v747
    %2834 = vmatpush1.msra.mxu0 %v746
    %2835 = vmatprep.subr.mxu0 %v753
    %2836 = vmatpush1.msra.mxu0 %v752
    %2837 = vmatprep.subr.mxu0 %v759
    %2838 = vmatpush1.msra.mxu0 %v758
    %2839 = vmatprep.subr.mxu0 %v765
    %2840 = vmatpush1.msra.mxu0 %v764
    %2841 = vmatprep.subr.mxu0 %v771
    %2842 = vmatpush1.msra.mxu0 %v770
    %2843 = vmatprep.subr.mxu0 %v777
    %2844 = vmatpush1.msra.mxu0 %v776
    %2845 = vmatprep.subr.mxu0 %v783
    %2846 = vmatpush1.msra.mxu0 %v782
    %2847 = vmatprep.subr.mxu0 %v789
    %2848 = vmatpush1.msra.mxu0 %v788
    %2849 = vmatprep.subr.mxu0 %v795
    %2850 = vmatpush1.msra.mxu0 %v794
    %2851 = vmatprep.subr.mxu0 %v801
    %2852 = vmatpush1.msra.mxu0 %v800
    %2853 = vmatprep.subr.mxu0 %v807
    %2854 = vmatpush1.msra.mxu0 %v806
    %2855 = vmatprep.subr.mxu0 %v813
    %2856 = vmatpush1.msra.mxu0 %v812
    %2857 = vmatprep.subr.mxu0 %v819
    %2858 = vmatpush1.msra.mxu0 %v818
    %2859 = vmatprep.subr.mxu0 %v825
    %2860 = vmatpush1.msra.mxu0 %v824
    %2861 = vmatprep.subr.mxu0 %v831
    %2862 = vmatpush1.msra.mxu0 %v830
    %2863 = vmatprep.subr.mxu0 %v837
    %2864 = vmatpush1.msra.mxu0 %v836
    %2865 = vmatprep.subr.mxu0 %v843
    %2866 = vmatpush1.msra.mxu0 %v842
    %2867 = vmatprep.subr.mxu0 %v849
    %2868 = vmatpush1.msra.mxu0 %v848
    %2869 = vmatprep.subr.mxu0 %v855
    %2870 = vmatpush1.msra.mxu0 %v854
    %2871 = vmatprep.subr.mxu0 %v861
    %2872 = vmatpush1.msra.mxu0 %v860
    %2873 = vmatprep.subr.mxu0 %v867
    %2874 = vmatpush1.msra.mxu0 %v866
    %2875 = vmatprep.subr.mxu0 %v873
    %2876 = vmatpush1.msra.mxu0 %v872
    %2877 = vmatprep.subr.mxu0 %v879
    %2878 = vmatpush1.msra.mxu0 %v878
    %2879 = vmatprep.mubr.f32.mxu0 %v2734
    %2880 = vmatmul.mubr.f32.gmra.mrb[0].mxu0 %v2733
    %v2881 = vpop.f32.mrb[0].mxu0
    %v2882 = vadd.f32 0.0, %v2881
    %v2883 = vpop.f32.mrb[0].mxu0
    %v2884 = vadd.f32 0.0, %v2883
    %2885 = vdwg.mxu0
    %2886 = vmatprep.subr.mxu0 %v695
    %2887 = vmatpush1.msra.mxu0 %v694
    %2888 = vmatprep.subr.mxu0 %v701
    %2889 = vmatpush1.msra.mxu0 %v700
    %2890 = vmatprep.subr.mxu0 %v707
    %2891 = vmatpush1.msra.mxu0 %v706
    %2892 = vmatprep.subr.mxu0 %v713
    %2893 = vmatpush1.msra.mxu0 %v712
    %2894 = vmatprep.subr.mxu0 %v719
    %2895 = vmatpush1.msra.mxu0 %v718
    %2896 = vmatprep.subr.mxu0 %v725
    %2897 = vmatpush1.msra.mxu0 %v724
    %2898 = vmatprep.subr.mxu0 %v731
    %2899 = vmatpush1.msra.mxu0 %v730
    %2900 = vmatprep.subr.mxu0 %v737
    %2901 = vmatpush1.msra.mxu0 %v736
    %2902 = vmatprep.subr.mxu0 %v743
    %2903 = vmatpush1.msra.mxu0 %v742
    %2904 = vmatprep.subr.mxu0 %v749
    %2905 = vmatpush1.msra.mxu0 %v748
    %2906 = vmatprep.subr.mxu0 %v755
    %2907 = vmatpush1.msra.mxu0 %v754
    %2908 = vmatprep.subr.mxu0 %v761
    %2909 = vmatpush1.msra.mxu0 %v760
    %2910 = vmatprep.subr.mxu0 %v767
    %2911 = vmatpush1.msra.mxu0 %v766
    %2912 = vmatprep.subr.mxu0 %v773
    %2913 = vmatpush1.msra.mxu0 %v772
    %2914 = vmatprep.subr.mxu0 %v779
    %2915 = vmatpush1.msra.mxu0 %v778
    %2916 = vmatprep.subr.mxu0 %v785
    %2917 = vmatpush1.msra.mxu0 %v784
    %2918 = vmatprep.subr.mxu0 %v791
    %2919 = vmatpush1.msra.mxu0 %v790
    %2920 = vmatprep.subr.mxu0 %v797
    %2921 = vmatpush1.msra.mxu0 %v796
    %2922 = vmatprep.subr.mxu0 %v803
    %2923 = vmatpush1.msra.mxu0 %v802
    %2924 = vmatprep.subr.mxu0 %v809
    %2925 = vmatpush1.msra.mxu0 %v808
    %2926 = vmatprep.subr.mxu0 %v815
    %2927 = vmatpush1.msra.mxu0 %v814
    %2928 = vmatprep.subr.mxu0 %v821
    %2929 = vmatpush1.msra.mxu0 %v820
    %2930 = vmatprep.subr.mxu0 %v827
    %2931 = vmatpush1.msra.mxu0 %v826
    %2932 = vmatprep.subr.mxu0 %v833
    %2933 = vmatpush1.msra.mxu0 %v832
    %2934 = vmatprep.subr.mxu0 %v839
    %2935 = vmatpush1.msra.mxu0 %v838
    %2936 = vmatprep.subr.mxu0 %v845
    %2937 = vmatpush1.msra.mxu0 %v844
    %2938 = vmatprep.subr.mxu0 %v851
    %2939 = vmatpush1.msra.mxu0 %v850
    %2940 = vmatprep.subr.mxu0 %v857
    %2941 = vmatpush1.msra.mxu0 %v856
    %2942 = vmatprep.subr.mxu0 %v863
    %2943 = vmatpush1.msra.mxu0 %v862
    %2944 = vmatprep.subr.mxu0 %v869
    %2945 = vmatpush1.msra.mxu0 %v868
    %2946 = vmatprep.subr.mxu0 %v875
    %2947 = vmatpush1.msra.mxu0 %v874
    %2948 = vmatprep.subr.mxu0 %v881
    %2949 = vmatpush1.msra.mxu0 %v880
    %2950 = vmatprep.mubr.f32.mxu0 %v2734
    %2951 = vmatmul.mubr.f32.gmra.mrb[0].mxu0 %v2733
    %v2952 = vpop.f32.mrb[0].mxu0
    %v2953 = vadd.f32 0.0, %v2952
    %v2954 = vpop.f32.mrb[0].mxu0
    %v2955 = vadd.f32 0.0, %v2954
    %2956 = vdwg.mxu0
    %v2957 = vadd.f32 %v2738, %v2811
    %v2958 = vadd.f32 %v2739, %v2813
    %v2959 = vxor.u32 %v2957, 2147483648
    %v2960 = vxor.u32 %v2958, 2147483648
    %v2961 = vmul.f32 %v2959, 1.442695
    %v2962 = vpow.pop %v2961
    %v2963 = vmul.f32 %v2960, 1.442695
    %v2964 = vpow.pop %v2963
    %v2965 = vadd.f32 %v2962, 1.0
    %v2966 = vadd.f32 %v2964, 1.0
    %v2967 = vrcp.pop %v2965
    %v2968 = vmul.f32 1.0, %v2967
    %v2969 = vrcp.pop %v2966
    %v2970 = vmul.f32 1.0, %v2969
    %v2971 = vadd.f32 %v2740, %v2882
    %v2972 = vadd.f32 %v2741, %v2884
    %v2973 = vxor.u32 %v2971, 2147483648
    %v2974 = vxor.u32 %v2972, 2147483648
    %v2975 = vmul.f32 %v2973, 1.442695
    %v2976 = vpow.pop %v2975
    %v2977 = vmul.f32 %v2974, 1.442695
    %v2978 = vpow.pop %v2977
    %v2979 = vadd.f32 %v2976, 1.0
    %v2980 = vadd.f32 %v2978, 1.0
    %v2981 = vrcp.pop %v2979
    %v2982 = vmul.f32 1.0, %v2981
    %v2983 = vrcp.pop %v2980
    %v2984 = vmul.f32 1.0, %v2983
    %v2985 = vadd.f32 %v2953, %v674
    %v2986 = vadd.f32 %v2955, %v678
    %v2987 = vmul.f32 %v2968, %v2985
    %v2988 = vmul.f32 %v2970, %v2986
    %v2989 = vadd.f32 %v2742, %v2987
    %v2990 = vadd.f32 %v2743, %v2988
    %v2991 = vtanh.pop %v2989
    %v2992 = vtanh.pop %v2990
    %v2993 = vsub.f32 1.0, %v2982
    %v2994 = vsub.f32 1.0, %v2984
    %v2995 = vmul.f32 %v2993, %v2991
    %v2996 = vmul.f32 %v2994, %v2992
    %v2997 = vmul.f32 %v2982, %v2733
    %v2998 = vmul.f32 %v2984, %v2734
    %v2999 = vadd.f32 %v2995, %v2997
    %v3000 = vadd.f32 %v2996, %v2998
    %v3001 = vld [vmem:[#allocation9] sm:$0xff]
    %v3002 = vld [vmem:[#allocation9 + $0x8] sm:$0xff]
    %v3003 = vld [vmem:[#allocation9 + $0x10] sm:$0xff]
    %v3004 = vld [vmem:[#allocation9 + $0x18] sm:$0xff]
    %v3005 = vld [vmem:[#allocation9 + $0x20] sm:$0xff]
    %v3006 = vld [vmem:[#allocation9 + $0x28] sm:$0xff]
    %v3007 = vld [vmem:[#allocation9 + $0x30] sm:$0xff]
    %v3008 = vld [vmem:[#allocation9 + $0x38] sm:$0xff]
    %v3009 = vld [vmem:[#allocation9 + $0x40] sm:$0xff]
    %v3010 = vld [vmem:[#allocation9 + $0x48] sm:$0xff]
    %v3011 = vld [vmem:[#allocation9 + $0x50] sm:$0xff]
    %v3012 = vld [vmem:[#allocation9 + $0x58] sm:$0xff]
    %v3013 = vld [vmem:[#allocation9 + $0x60] sm:$0xff]
    %v3014 = vld [vmem:[#allocation9 + $0x68] sm:$0xff]
    %v3015 = vld [vmem:[#allocation9 + $0x70] sm:$0xff]
    %v3016 = vld [vmem:[#allocation9 + $0x78] sm:$0xff]
    %v3017 = vld [vmem:[#allocation9 + $0x80] sm:$0xff]
    %v3018 = vld [vmem:[#allocation9 + $0x88] sm:$0xff]
    %v3019 = vld [vmem:[#allocation9 + $0x90] sm:$0xff]
    %v3020 = vld [vmem:[#allocation9 + $0x98] sm:$0xff]
    %v3021 = vld [vmem:[#allocation9 + $0xa0] sm:$0xff]
    %v3022 = vld [vmem:[#allocation9 + $0xa8] sm:$0xff]
    %v3023 = vld [vmem:[#allocation9 + $0xb0] sm:$0xff]
    %v3024 = vld [vmem:[#allocation9 + $0xb8] sm:$0xff]
    %v3025 = vld [vmem:[#allocation9 + $0xc0] sm:$0xff]
    %v3026 = vld [vmem:[#allocation9 + $0xc8] sm:$0xff]
    %v3027 = vld [vmem:[#allocation9 + $0xd0] sm:$0xff]
    %v3028 = vld [vmem:[#allocation9 + $0xd8] sm:$0xff]
    %v3029 = vld [vmem:[#allocation9 + $0xe0] sm:$0xff]
    %v3030 = vld [vmem:[#allocation9 + $0xe8] sm:$0xff]
    %v3031 = vld [vmem:[#allocation9 + $0xf0] sm:$0xff]
    %v3032 = vld [vmem:[#allocation9 + $0xf8] sm:$0xff]
    %v3033 = vld [vmem:[#allocation9 + $0x100] sm:$0xff]
    %v3034 = vld [vmem:[#allocation9 + $0x108] sm:$0xff]
    %v3035 = vld [vmem:[#allocation9 + $0x110] sm:$0xff]
    %v3036 = vld [vmem:[#allocation9 + $0x118] sm:$0xff]
    %v3037 = vld [vmem:[#allocation9 + $0x120] sm:$0xff]
    %v3038 = vld [vmem:[#allocation9 + $0x128] sm:$0xff]
    %v3039 = vld [vmem:[#allocation9 + $0x130] sm:$0xff]
    %v3040 = vld [vmem:[#allocation9 + $0x138] sm:$0xff]
    %v3041 = vld [vmem:[#allocation9 + $0x140] sm:$0xff]
    %v3042 = vld [vmem:[#allocation9 + $0x148] sm:$0xff]
    %v3043 = vld [vmem:[#allocation9 + $0x150] sm:$0xff]
    %v3044 = vld [vmem:[#allocation9 + $0x158] sm:$0xff]
    %v3045 = vld [vmem:[#allocation9 + $0x160] sm:$0xff]
    %v3046 = vld [vmem:[#allocation9 + $0x168] sm:$0xff]
    %v3047 = vld [vmem:[#allocation9 + $0x170] sm:$0xff]
    %v3048 = vld [vmem:[#allocation9 + $0x178] sm:$0xff]
    %v3049 = vld [vmem:[#allocation9 + $0x180] sm:$0xff]
    %v3050 = vld [vmem:[#allocation9 + $0x188] sm:$0xff]
    %v3051 = vld [vmem:[#allocation9 + $0x190] sm:$0xff]
    %v3052 = vld [vmem:[#allocation9 + $0x198] sm:$0xff]
    %v3053 = vld [vmem:[#allocation9 + $0x1a0] sm:$0xff]
    %v3054 = vld [vmem:[#allocation9 + $0x1a8] sm:$0xff]
    %v3055 = vld [vmem:[#allocation9 + $0x1b0] sm:$0xff]
    %v3056 = vld [vmem:[#allocation9 + $0x1b8] sm:$0xff]
    %v3057 = vld [vmem:[#allocation9 + $0x1c0] sm:$0xff]
    %v3058 = vld [vmem:[#allocation9 + $0x1c8] sm:$0xff]
    %v3059 = vld [vmem:[#allocation9 + $0x1d0] sm:$0xff]
    %v3060 = vld [vmem:[#allocation9 + $0x1d8] sm:$0xff]
    %v3061 = vld [vmem:[#allocation9 + $0x1e0] sm:$0xff]
    %v3062 = vld [vmem:[#allocation9 + $0x1e8] sm:$0xff]
    %v3063 = vld [vmem:[#allocation9 + $0x1f0] sm:$0xff]
    %v3064 = vld [vmem:[#allocation9 + $0x1f8] sm:$0xff]
    %v3065 = vld [vmem:[#allocation9 + $0x200] sm:$0xff]
    %v3066 = vld [vmem:[#allocation9 + $0x208] sm:$0xff]
    %v3067 = vld [vmem:[#allocation9 + $0x210] sm:$0xff]
    %v3068 = vld [vmem:[#allocation9 + $0x218] sm:$0xff]
    %v3069 = vld [vmem:[#allocation9 + $0x220] sm:$0xff]
    %v3070 = vld [vmem:[#allocation9 + $0x228] sm:$0xff]
    %v3071 = vld [vmem:[#allocation9 + $0x230] sm:$0xff]
    %v3072 = vld [vmem:[#allocation9 + $0x238] sm:$0xff]
    %v3073 = vld [vmem:[#allocation9 + $0x240] sm:$0xff]
    %v3074 = vld [vmem:[#allocation9 + $0x248] sm:$0xff]
    %v3075 = vld [vmem:[#allocation9 + $0x250] sm:$0xff]
    %v3076 = vld [vmem:[#allocation9 + $0x258] sm:$0xff]
    %v3077 = vld [vmem:[#allocation9 + $0x260] sm:$0xff]
    %v3078 = vld [vmem:[#allocation9 + $0x268] sm:$0xff]
    %v3079 = vld [vmem:[#allocation9 + $0x270] sm:$0xff]
    %v3080 = vld [vmem:[#allocation9 + $0x278] sm:$0xff]
    %v3081 = vld [vmem:[#allocation9 + $0x280] sm:$0xff]
    %v3082 = vld [vmem:[#allocation9 + $0x288] sm:$0xff]
    %v3083 = vld [vmem:[#allocation9 + $0x290] sm:$0xff]
    %v3084 = vld [vmem:[#allocation9 + $0x298] sm:$0xff]
    %v3085 = vld [vmem:[#allocation9 + $0x2a0] sm:$0xff]
    %v3086 = vld [vmem:[#allocation9 + $0x2a8] sm:$0xff]
    %v3087 = vld [vmem:[#allocation9 + $0x2b0] sm:$0xff]
    %v3088 = vld [vmem:[#allocation9 + $0x2b8] sm:$0xff]
    %v3089 = vld [vmem:[#allocation9 + $0x2c0] sm:$0xff]
    %v3090 = vld [vmem:[#allocation9 + $0x2c8] sm:$0xff]
    %v3091 = vld [vmem:[#allocation9 + $0x2d0] sm:$0xff]
    %v3092 = vld [vmem:[#allocation9 + $0x2d8] sm:$0xff]
    %v3093 = vld [vmem:[#allocation9 + $0x2e0] sm:$0xff]
    %v3094 = vld [vmem:[#allocation9 + $0x2e8] sm:$0xff]
    %v3095 = vld [vmem:[#allocation9 + $0x2f0] sm:$0xff]
    %v3096 = vld [vmem:[#allocation9 + $0x2f8] sm:$0xff]
    %v3097 = vld [vmem:[#allocation9 + $0x300] sm:$0xff]
    %v3098 = vld [vmem:[#allocation9 + $0x308] sm:$0xff]
    %v3099 = vld [vmem:[#allocation9 + $0x310] sm:$0xff]
    %v3100 = vld [vmem:[#allocation9 + $0x318] sm:$0xff]
    %v3101 = vld [vmem:[#allocation9 + $0x320] sm:$0xff]
    %v3102 = vld [vmem:[#allocation9 + $0x328] sm:$0xff]
    %v3103 = vld [vmem:[#allocation9 + $0x330] sm:$0xff]
    %v3104 = vld [vmem:[#allocation9 + $0x338] sm:$0xff]
    %v3105 = vld [vmem:[#allocation9 + $0x340] sm:$0xff]
    %v3106 = vld [vmem:[#allocation9 + $0x348] sm:$0xff]
    %v3107 = vld [vmem:[#allocation9 + $0x350] sm:$0xff]
    %v3108 = vld [vmem:[#allocation9 + $0x358] sm:$0xff]
    %v3109 = vld [vmem:[#allocation9 + $0x360] sm:$0xff]
    %v3110 = vld [vmem:[#allocation9 + $0x368] sm:$0xff]
    %v3111 = vld [vmem:[#allocation9 + $0x370] sm:$0xff]
    %v3112 = vld [vmem:[#allocation9 + $0x378] sm:$0xff]
    %v3113 = vld [vmem:[#allocation9 + $0x380] sm:$0xff]
    %v3114 = vld [vmem:[#allocation9 + $0x388] sm:$0xff]
    %v3115 = vld [vmem:[#allocation9 + $0x390] sm:$0xff]
    %v3116 = vld [vmem:[#allocation9 + $0x398] sm:$0xff]
    %v3117 = vld [vmem:[#allocation9 + $0x3a0] sm:$0xff]
    %v3118 = vld [vmem:[#allocation9 + $0x3a8] sm:$0xff]
    %v3119 = vld [vmem:[#allocation9 + $0x3b0] sm:$0xff]
    %v3120 = vld [vmem:[#allocation9 + $0x3b8] sm:$0xff]
    %v3121 = vld [vmem:[#allocation9 + $0x3c0] sm:$0xff]
    %v3122 = vld [vmem:[#allocation9 + $0x3c8] sm:$0xff]
    %v3123 = vld [vmem:[#allocation9 + $0x3d0] sm:$0xff]
    %v3124 = vld [vmem:[#allocation9 + $0x3d8] sm:$0xff]
    %v3125 = vld [vmem:[#allocation9 + $0x3e0] sm:$0xff]
    %v3126 = vld [vmem:[#allocation9 + $0x3e8] sm:$0xff]
    %v3127 = vld [vmem:[#allocation9 + $0x3f0] sm:$0xff]
    %v3128 = vld [vmem:[#allocation9 + $0x3f8] sm:$0xff]
    %v3129 = vld [vmem:[%s6] sm:$0xf]
    %v3131 = vlaneseq
    %v3132 = vshrl.u32 %v3131, 7
    %v3133 = vsub.s32 0, %v3132
    %v3134 = vrot.slane %v3129, %v3133
    %v3135 = vlaneseq
    %v3136 = vshrl.u32 %v3135, 7
    %v3137 = vsub.s32 1, %v3136
    %v3138 = vrot.slane %v3129, %v3137
    %v3139 = vlaneseq
    %v3140 = vshrl.u32 %v3139, 7
    %v3141 = vsub.s32 2, %v3140
    %v3142 = vrot.slane %v3129, %v3141
    %v3143 = vlaneseq
    %v3144 = vshrl.u32 %v3143, 7
    %v3145 = vsub.s32 3, %v3144
    %v3146 = vrot.slane %v3129, %v3145
    %3151 = vmatprep.subr.mxu0 %v3002
    %3152 = vmatpush1.msra.mxu0 %v3001
    %3153 = vmatprep.subr.mxu0 %v3006
    %3154 = vmatpush1.msra.mxu0 %v3005
    %3155 = vmatprep.subr.mxu0 %v3010
    %3156 = vmatpush1.msra.mxu0 %v3009
    %3157 = vmatprep.subr.mxu0 %v3014
    %3158 = vmatpush1.msra.mxu0 %v3013
    %3159 = vmatprep.subr.mxu0 %v3018
    %3160 = vmatpush1.msra.mxu0 %v3017
    %3161 = vmatprep.subr.mxu0 %v3022
    %3162 = vmatpush1.msra.mxu0 %v3021
    %3163 = vmatprep.subr.mxu0 %v3026
    %3164 = vmatpush1.msra.mxu0 %v3025
    %3165 = vmatprep.subr.mxu0 %v3030
    %3166 = vmatpush1.msra.mxu0 %v3029
    %3167 = vmatprep.subr.mxu0 %v3034
    %3168 = vmatpush1.msra.mxu0 %v3033
    %3169 = vmatprep.subr.mxu0 %v3038
    %3170 = vmatpush1.msra.mxu0 %v3037
    %3171 = vmatprep.subr.mxu0 %v3042
    %3172 = vmatpush1.msra.mxu0 %v3041
    %3173 = vmatprep.subr.mxu0 %v3046
    %3174 = vmatpush1.msra.mxu0 %v3045
    %3175 = vmatprep.subr.mxu0 %v3050
    %3176 = vmatpush1.msra.mxu0 %v3049
    %3177 = vmatprep.subr.mxu0 %v3054
    %3178 = vmatpush1.msra.mxu0 %v3053
    %3179 = vmatprep.subr.mxu0 %v3058
    %3180 = vmatpush1.msra.mxu0 %v3057
    %3181 = vmatprep.subr.mxu0 %v3062
    %3182 = vmatpush1.msra.mxu0 %v3061
    %3183 = vmatprep.subr.mxu0 %v3066
    %3184 = vmatpush1.msra.mxu0 %v3065
    %3185 = vmatprep.subr.mxu0 %v3070
    %3186 = vmatpush1.msra.mxu0 %v3069
    %3187 = vmatprep.subr.mxu0 %v3074
    %3188 = vmatpush1.msra.mxu0 %v3073
    %3189 = vmatprep.subr.mxu0 %v3078
    %3190 = vmatpush1.msra.mxu0 %v3077
    %3191 = vmatprep.subr.mxu0 %v3082
    %3192 = vmatpush1.msra.mxu0 %v3081
    %3193 = vmatprep.subr.mxu0 %v3086
    %3194 = vmatpush1.msra.mxu0 %v3085
    %3195 = vmatprep.subr.mxu0 %v3090
    %3196 = vmatpush1.msra.mxu0 %v3089
    %3197 = vmatprep.subr.mxu0 %v3094
    %3198 = vmatpush1.msra.mxu0 %v3093
    %3199 = vmatprep.subr.mxu0 %v3098
    %3200 = vmatpush1.msra.mxu0 %v3097
    %3201 = vmatprep.subr.mxu0 %v3102
    %3202 = vmatpush1.msra.mxu0 %v3101
    %3203 = vmatprep.subr.mxu0 %v3106
    %3204 = vmatpush1.msra.mxu0 %v3105
    %3205 = vmatprep.subr.mxu0 %v3110
    %3206 = vmatpush1.msra.mxu0 %v3109
    %3207 = vmatprep.subr.mxu0 %v3114
    %3208 = vmatpush1.msra.mxu0 %v3113
    %3209 = vmatprep.subr.mxu0 %v3118
    %3210 = vmatpush1.msra.mxu0 %v3117
    %3211 = vmatprep.subr.mxu0 %v3122
    %3212 = vmatpush1.msra.mxu0 %v3121
    %3213 = vmatprep.subr.mxu0 %v3126
    %3214 = vmatpush1.msra.mxu0 %v3125
    %3215 = vmatprep.mubr.f32.mxu0 %v3000
    %3216 = vmatmul.mubr.f32.gmra.mrb[0].mxu0 %v2999
    %v3217 = vpop.f32.mrb[0].mxu0
    %v3218 = vadd.f32 %v3134, %v3217
    %v3219 = vpop.f32.mrb[0].mxu0
    %v3220 = vadd.f32 %v3138, %v3219
    %3221 = vdwg.mxu0
    %3222 = vmatprep.subr.mxu0 %v3004
    %3223 = vmatpush1.msra.mxu0 %v3003
    %3224 = vmatprep.subr.mxu0 %v3008
    %3225 = vmatpush1.msra.mxu0 %v3007
    %3226 = vmatprep.subr.mxu0 %v3012
    %3227 = vmatpush1.msra.mxu0 %v3011
    %3228 = vmatprep.subr.mxu0 %v3016
    %3229 = vmatpush1.msra.mxu0 %v3015
    %3230 = vmatprep.subr.mxu0 %v3020
    %3231 = vmatpush1.msra.mxu0 %v3019
    %3232 = vmatprep.subr.mxu0 %v3024
    %3233 = vmatpush1.msra.mxu0 %v3023
    %3234 = vmatprep.subr.mxu0 %v3028
    %3235 = vmatpush1.msra.mxu0 %v3027
    %3236 = vmatprep.subr.mxu0 %v3032
    %3237 = vmatpush1.msra.mxu0 %v3031
    %3238 = vmatprep.subr.mxu0 %v3036
    %3239 = vmatpush1.msra.mxu0 %v3035
    %3240 = vmatprep.subr.mxu0 %v3040
    %3241 = vmatpush1.msra.mxu0 %v3039
    %3242 = vmatprep.subr.mxu0 %v3044
    %3243 = vmatpush1.msra.mxu0 %v3043
    %3244 = vmatprep.subr.mxu0 %v3048
    %3245 = vmatpush1.msra.mxu0 %v3047
    %3246 = vmatprep.subr.mxu0 %v3052
    %3247 = vmatpush1.msra.mxu0 %v3051
    %3248 = vmatprep.subr.mxu0 %v3056
    %3249 = vmatpush1.msra.mxu0 %v3055
    %3250 = vmatprep.subr.mxu0 %v3060
    %3251 = vmatpush1.msra.mxu0 %v3059
    %3252 = vmatprep.subr.mxu0 %v3064
    %3253 = vmatpush1.msra.mxu0 %v3063
    %3254 = vmatprep.subr.mxu0 %v3068
    %3255 = vmatpush1.msra.mxu0 %v3067
    %3256 = vmatprep.subr.mxu0 %v3072
    %3257 = vmatpush1.msra.mxu0 %v3071
    %3258 = vmatprep.subr.mxu0 %v3076
    %3259 = vmatpush1.msra.mxu0 %v3075
    %3260 = vmatprep.subr.mxu0 %v3080
    %3261 = vmatpush1.msra.mxu0 %v3079
    %3262 = vmatprep.subr.mxu0 %v3084
    %3263 = vmatpush1.msra.mxu0 %v3083
    %3264 = vmatprep.subr.mxu0 %v3088
    %3265 = vmatpush1.msra.mxu0 %v3087
    %3266 = vmatprep.subr.mxu0 %v3092
    %3267 = vmatpush1.msra.mxu0 %v3091
    %3268 = vmatprep.subr.mxu0 %v3096
    %3269 = vmatpush1.msra.mxu0 %v3095
    %3270 = vmatprep.subr.mxu0 %v3100
    %3271 = vmatpush1.msra.mxu0 %v3099
    %3272 = vmatprep.subr.mxu0 %v3104
    %3273 = vmatpush1.msra.mxu0 %v3103
    %3274 = vmatprep.subr.mxu0 %v3108
    %3275 = vmatpush1.msra.mxu0 %v3107
    %3276 = vmatprep.subr.mxu0 %v3112
    %3277 = vmatpush1.msra.mxu0 %v3111
    %3278 = vmatprep.subr.mxu0 %v3116
    %3279 = vmatpush1.msra.mxu0 %v3115
    %3280 = vmatprep.subr.mxu0 %v3120
    %3281 = vmatpush1.msra.mxu0 %v3119
    %3282 = vmatprep.subr.mxu0 %v3124
    %3283 = vmatpush1.msra.mxu0 %v3123
    %3284 = vmatprep.subr.mxu0 %v3128
    %3285 = vmatpush1.msra.mxu0 %v3127
    %3286 = vmatprep.mubr.f32.mxu0 %v3000
    %3287 = vmatmul.mubr.f32.gmra.mrb[0].mxu0 %v2999
    %v3288 = vpop.f32.mrb[0].mxu0
    %v3289 = vadd.f32 %v3142, %v3288
    %v3290 = vpop.f32.mrb[0].mxu0
    %v3291 = vadd.f32 %v3146, %v3290
    %3292 = vdwg.mxu0
    %v3293 = vmax.f32 %v3218, 0.0
    %v3294 = vmax.f32 %v3220, 0.0
    %v3295 = vmax.f32 %v3289, 0.0
    %v3296 = vmax.f32 %v3291, 0.0
    %v3297 = vld [vmem:[#allocation11] sm:$0xff]
    %v3298 = vld [vmem:[#allocation11 + $0x8] sm:$0xff]
    %v3299 = vld [vmem:[#allocation11 + $0x10] sm:$0xff]
    %v3300 = vld [vmem:[#allocation11 + $0x18] sm:$0xff]
    %v3301 = vld [vmem:[#allocation11 + $0x20] sm:$0xff]
    %v3302 = vld [vmem:[#allocation11 + $0x28] sm:$0xff]
    %v3303 = vld [vmem:[#allocation11 + $0x30] sm:$0xff]
    %v3304 = vld [vmem:[#allocation11 + $0x38] sm:$0xff]
    %v3305 = vld [vmem:[#allocation11 + $0x40] sm:$0xff]
    %v3306 = vld [vmem:[#allocation11 + $0x48] sm:$0xff]
    %v3307 = vld [vmem:[#allocation11 + $0x50] sm:$0xff]
    %v3308 = vld [vmem:[#allocation11 + $0x58] sm:$0xff]
    %v3309 = vld [vmem:[#allocation11 + $0x60] sm:$0xff]
    %v3310 = vld [vmem:[#allocation11 + $0x68] sm:$0xff]
    %v3311 = vld [vmem:[#allocation11 + $0x70] sm:$0xff]
    %v3312 = vld [vmem:[#allocation11 + $0x78] sm:$0xff]
    %v3313 = vld [vmem:[#allocation11 + $0x80] sm:$0xff]
    %v3314 = vld [vmem:[#allocation11 + $0x88] sm:$0xff]
    %v3315 = vld [vmem:[#allocation11 + $0x90] sm:$0xff]
    %v3316 = vld [vmem:[#allocation11 + $0x98] sm:$0xff]
    %v3317 = vld [vmem:[#allocation11 + $0xa0] sm:$0xff]
    %v3318 = vld [vmem:[#allocation11 + $0xa8] sm:$0xff]
    %v3319 = vld [vmem:[#allocation11 + $0xb0] sm:$0xff]
    %v3320 = vld [vmem:[#allocation11 + $0xb8] sm:$0xff]
    %v3321 = vld [vmem:[#allocation11 + $0xc0] sm:$0xff]
    %v3322 = vld [vmem:[#allocation11 + $0xc8] sm:$0xff]
    %v3323 = vld [vmem:[#allocation11 + $0xd0] sm:$0xff]
    %v3324 = vld [vmem:[#allocation11 + $0xd8] sm:$0xff]
    %v3325 = vld [vmem:[#allocation11 + $0xe0] sm:$0xff]
    %v3326 = vld [vmem:[#allocation11 + $0xe8] sm:$0xff]
    %v3327 = vld [vmem:[#allocation11 + $0xf0] sm:$0xff]
    %v3328 = vld [vmem:[#allocation11 + $0xf8] sm:$0xff]
    %v3329 = vld [vmem:[#allocation11 + $0x100] sm:$0xff]
    %v3330 = vld [vmem:[#allocation11 + $0x108] sm:$0xff]
    %v3331 = vld [vmem:[#allocation11 + $0x110] sm:$0xff]
    %v3332 = vld [vmem:[#allocation11 + $0x118] sm:$0xff]
    %v3333 = vld [vmem:[#allocation11 + $0x120] sm:$0xff]
    %v3334 = vld [vmem:[#allocation11 + $0x128] sm:$0xff]
    %v3335 = vld [vmem:[#allocation11 + $0x130] sm:$0xff]
    %v3336 = vld [vmem:[#allocation11 + $0x138] sm:$0xff]
    %v3337 = vld [vmem:[#allocation11 + $0x140] sm:$0xff]
    %v3338 = vld [vmem:[#allocation11 + $0x148] sm:$0xff]
    %v3339 = vld [vmem:[#allocation11 + $0x150] sm:$0xff]
    %v3340 = vld [vmem:[#allocation11 + $0x158] sm:$0xff]
    %v3341 = vld [vmem:[#allocation11 + $0x160] sm:$0xff]
    %v3342 = vld [vmem:[#allocation11 + $0x168] sm:$0xff]
    %v3343 = vld [vmem:[#allocation11 + $0x170] sm:$0xff]
    %v3344 = vld [vmem:[#allocation11 + $0x178] sm:$0xff]
    %v3345 = vld [vmem:[#allocation11 + $0x180] sm:$0xff]
    %v3346 = vld [vmem:[#allocation11 + $0x188] sm:$0xff]
    %v3347 = vld [vmem:[#allocation11 + $0x190] sm:$0xff]
    %v3348 = vld [vmem:[#allocation11 + $0x198] sm:$0xff]
    %v3349 = vld [vmem:[#allocation11 + $0x1a0] sm:$0xff]
    %v3350 = vld [vmem:[#allocation11 + $0x1a8] sm:$0xff]
    %v3351 = vld [vmem:[#allocation11 + $0x1b0] sm:$0xff]
    %v3352 = vld [vmem:[#allocation11 + $0x1b8] sm:$0xff]
    %v3353 = vld [vmem:[#allocation11 + $0x1c0] sm:$0xff]
    %v3354 = vld [vmem:[#allocation11 + $0x1c8] sm:$0xff]
    %v3355 = vld [vmem:[#allocation11 + $0x1d0] sm:$0xff]
    %v3356 = vld [vmem:[#allocation11 + $0x1d8] sm:$0xff]
    %v3357 = vld [vmem:[#allocation11 + $0x1e0] sm:$0xff]
    %v3358 = vld [vmem:[#allocation11 + $0x1e8] sm:$0xff]
    %v3359 = vld [vmem:[#allocation11 + $0x1f0] sm:$0xff]
    %v3360 = vld [vmem:[#allocation11 + $0x1f8] sm:$0xff]
    %v3361 = vld [vmem:[%s8] sm:$0x1]
    %v3363 = vlaneseq
    %v3364 = vshrl.u32 %v3363, 7
    %v3365 = vsub.s32 0, %v3364
    %v3366 = vrot.slane %v3361, %v3365
    %3368 = vmatprep.subr.mxu0 0.0
    %3369 = vmatpush1.msra.mxu0 %v3297
    %3370 = vmatprep.subr.mxu0 0.0
    %3371 = vmatpush1.msra.mxu0 %v3298
    %3372 = vmatprep.subr.mxu0 0.0
    %3373 = vmatpush1.msra.mxu0 %v3299
    %3374 = vmatprep.subr.mxu0 0.0
    %3375 = vmatpush1.msra.mxu0 %v3300
    %3376 = vmatprep.subr.mxu0 0.0
    %3377 = vmatpush1.msra.mxu0 %v3301
    %3378 = vmatprep.subr.mxu0 0.0
    %3379 = vmatpush1.msra.mxu0 %v3302
    %3380 = vmatprep.subr.mxu0 0.0
    %3381 = vmatpush1.msra.mxu0 %v3303
    %3382 = vmatprep.subr.mxu0 0.0
    %3383 = vmatpush1.msra.mxu0 %v3304
    %3384 = vmatprep.subr.mxu0 0.0
    %3385 = vmatpush1.msra.mxu0 %v3305
    %3386 = vmatprep.subr.mxu0 0.0
    %3387 = vmatpush1.msra.mxu0 %v3306
    %3388 = vmatprep.subr.mxu0 0.0
    %3389 = vmatpush1.msra.mxu0 %v3307
    %3390 = vmatprep.subr.mxu0 0.0
    %3391 = vmatpush1.msra.mxu0 %v3308
    %3392 = vmatprep.subr.mxu0 0.0
    %3393 = vmatpush1.msra.mxu0 %v3309
    %3394 = vmatprep.subr.mxu0 0.0
    %3395 = vmatpush1.msra.mxu0 %v3310
    %3396 = vmatprep.subr.mxu0 0.0
    %3397 = vmatpush1.msra.mxu0 %v3311
    %3398 = vmatprep.subr.mxu0 0.0
    %3399 = vmatpush1.msra.mxu0 %v3312
    %3400 = vmatprep.subr.mxu0 0.0
    %3401 = vmatpush1.msra.mxu0 %v3313
    %3402 = vmatprep.subr.mxu0 0.0
    %3403 = vmatpush1.msra.mxu0 %v3314
    %3404 = vmatprep.subr.mxu0 0.0
    %3405 = vmatpush1.msra.mxu0 %v3315
    %3406 = vmatprep.subr.mxu0 0.0
    %3407 = vmatpush1.msra.mxu0 %v3316
    %3408 = vmatprep.subr.mxu0 0.0
    %3409 = vmatpush1.msra.mxu0 %v3317
    %3410 = vmatprep.subr.mxu0 0.0
    %3411 = vmatpush1.msra.mxu0 %v3318
    %3412 = vmatprep.subr.mxu0 0.0
    %3413 = vmatpush1.msra.mxu0 %v3319
    %3414 = vmatprep.subr.mxu0 0.0
    %3415 = vmatpush1.msra.mxu0 %v3320
    %3416 = vmatprep.subr.mxu0 0.0
    %3417 = vmatpush1.msra.mxu0 %v3321
    %3418 = vmatprep.subr.mxu0 0.0
    %3419 = vmatpush1.msra.mxu0 %v3322
    %3420 = vmatprep.subr.mxu0 0.0
    %3421 = vmatpush1.msra.mxu0 %v3323
    %3422 = vmatprep.subr.mxu0 0.0
    %3423 = vmatpush1.msra.mxu0 %v3324
    %3424 = vmatprep.subr.mxu0 0.0
    %3425 = vmatpush1.msra.mxu0 %v3325
    %3426 = vmatprep.subr.mxu0 0.0
    %3427 = vmatpush1.msra.mxu0 %v3326
    %3428 = vmatprep.subr.mxu0 0.0
    %3429 = vmatpush1.msra.mxu0 %v3327
    %3430 = vmatprep.subr.mxu0 0.0
    %3431 = vmatpush1.msra.mxu0 %v3328
    %3432 = vmatprep.mubr.f32.mxu0 %v3294
    %3433 = vmatmul.mubr.f32.gmra.mrb[0].mxu0 %v3293
    %v3434 = vpop.f32.mrb[0].mxu0
    %v3435 = vadd.f32 %v3366, %v3434
    %v3436 = vpop.f32.mrb[0].mxu0
    %3437 = vdwg.mxu0
    %3438 = vmatprep.subr.mxu0 0.0
    %3439 = vmatpush1.msra.mxu0 %v3329
    %3440 = vmatprep.subr.mxu0 0.0
    %3441 = vmatpush1.msra.mxu0 %v3330
    %3442 = vmatprep.subr.mxu0 0.0
    %3443 = vmatpush1.msra.mxu0 %v3331
    %3444 = vmatprep.subr.mxu0 0.0
    %3445 = vmatpush1.msra.mxu0 %v3332
    %3446 = vmatprep.subr.mxu0 0.0
    %3447 = vmatpush1.msra.mxu0 %v3333
    %3448 = vmatprep.subr.mxu0 0.0
    %3449 = vmatpush1.msra.mxu0 %v3334
    %3450 = vmatprep.subr.mxu0 0.0
    %3451 = vmatpush1.msra.mxu0 %v3335
    %3452 = vmatprep.subr.mxu0 0.0
    %3453 = vmatpush1.msra.mxu0 %v3336
    %3454 = vmatprep.subr.mxu0 0.0
    %3455 = vmatpush1.msra.mxu0 %v3337
    %3456 = vmatprep.subr.mxu0 0.0
    %3457 = vmatpush1.msra.mxu0 %v3338
    %3458 = vmatprep.subr.mxu0 0.0
    %3459 = vmatpush1.msra.mxu0 %v3339
    %3460 = vmatprep.subr.mxu0 0.0
    %3461 = vmatpush1.msra.mxu0 %v3340
    %3462 = vmatprep.subr.mxu0 0.0
    %3463 = vmatpush1.msra.mxu0 %v3341
    %3464 = vmatprep.subr.mxu0 0.0
    %3465 = vmatpush1.msra.mxu0 %v3342
    %3466 = vmatprep.subr.mxu0 0.0
    %3467 = vmatpush1.msra.mxu0 %v3343
    %3468 = vmatprep.subr.mxu0 0.0
    %3469 = vmatpush1.msra.mxu0 %v3344
    %3470 = vmatprep.subr.mxu0 0.0
    %3471 = vmatpush1.msra.mxu0 %v3345
    %3472 = vmatprep.subr.mxu0 0.0
    %3473 = vmatpush1.msra.mxu0 %v3346
    %3474 = vmatprep.subr.mxu0 0.0
    %3475 = vmatpush1.msra.mxu0 %v3347
    %3476 = vmatprep.subr.mxu0 0.0
    %3477 = vmatpush1.msra.mxu0 %v3348
    %3478 = vmatprep.subr.mxu0 0.0
    %3479 = vmatpush1.msra.mxu0 %v3349
    %3480 = vmatprep.subr.mxu0 0.0
    %3481 = vmatpush1.msra.mxu0 %v3350
    %3482 = vmatprep.subr.mxu0 0.0
    %3483 = vmatpush1.msra.mxu0 %v3351
    %3484 = vmatprep.subr.mxu0 0.0
    %3485 = vmatpush1.msra.mxu0 %v3352
    %3486 = vmatprep.subr.mxu0 0.0
    %3487 = vmatpush1.msra.mxu0 %v3353
    %3488 = vmatprep.subr.mxu0 0.0
    %3489 = vmatpush1.msra.mxu0 %v3354
    %3490 = vmatprep.subr.mxu0 0.0
    %3491 = vmatpush1.msra.mxu0 %v3355
    %3492 = vmatprep.subr.mxu0 0.0
    %3493 = vmatpush1.msra.mxu0 %v3356
    %3494 = vmatprep.subr.mxu0 0.0
    %3495 = vmatpush1.msra.mxu0 %v3357
    %3496 = vmatprep.subr.mxu0 0.0
    %3497 = vmatpush1.msra.mxu0 %v3358
    %3498 = vmatprep.subr.mxu0 0.0
    %3499 = vmatpush1.msra.mxu0 %v3359
    %3500 = vmatprep.subr.mxu0 0.0
    %3501 = vmatpush1.msra.mxu0 %v3360
    %3502 = vmatprep.mubr.f32.mxu0 %v3296
    %3503 = vmatmul.mubr.f32.gmra.mrb[0].mxu0 %v3295
    %v3504 = vpop.f32.mrb[0].mxu0
    %v3505 = vadd.f32 %v3435, %v3504
    %v3506 = vpop.f32.mrb[0].mxu0
    %3507 = vdwg.mxu0
    %3508 = vst [vmem:[#allocation12] sm:$0xff] %v3505
    // Predicated region
    $region58: #{tpu_custom_call.1} parent=1 // pred_check
      _
    $region59: #{tpu_custom_call.1} parent=1 // pred_check_branch
      %3510 = sbr.rel (0) target = $region61
    $region60: #{tpu_custom_call.1} parent=1 // pred_region
      %s3512 = ssub.s32 128, 128
      %3513 = vsyncadd [#allocation5], %s3512
      %s3515 = sshll.u32 [#allocation12], 4
      %s3516 = int_to_ptr.vmem [resolvable:$true] %s3515
      %3518 = dma.vmem_to_hbm [thread:$0]  %s3516, 128, %s9, [#allocation5]
    $region61: #{tpu_custom_call.1} parent=1 // pred_fallthru
      _
    // Predicated region
    $region62: #{tpu_custom_call.1} parent=1 // pred_check
      _
    $region63: #{tpu_custom_call.1} parent=1 // pred_check_branch
      %3520 = sbr.rel (0) target = $region65
    $region64: #{tpu_custom_call.1} parent=1 // pred_region
      %3521 = dma.done [#allocation5], 128
    $region65: #{tpu_custom_call.1} parent=1 // pred_fallthru
      _
    %3522 = vsyncpa [#allocation4], 1
    %3523 = vsyncpa [#allocation7], 1
    %3524 = vsyncpa [#allocation10], 1
    %3525 = vsyncpa [#allocation5], 1

</llo_original>
